<compile_context>
chip_gen: v7x
topology: tpu7x:2x2x1
jax: 0.10.0
libtpu: 0.0.40
codegen_flags: <defaults>
</compile_context>

<pallas_src>
import math
import functools

import jax
import jax.numpy as jnp
from jax import lax
from jax.experimental import pallas as pl
from jax.experimental.pallas import tpu as pltpu

LEAKY_SLOPE = 0.01                 # F.leaky_relu default negative_slope
ADT = jnp.bfloat16                 # activation / weight dtype between kernels
VMEM_LIMIT = 32 * 1024 * 1024      # well above worst-case block footprint, safe on v5e/v6e/v7x


# ----------------------------------------------------------------------------
# small helpers
# ----------------------------------------------------------------------------
def _round_up(x, m):
    return ((x + m - 1) // m) * m


def _leaky(x):
    return jnp.where(x > 0, x, LEAKY_SLOPE * x)


def _pick_tile_rows(H, W, target_rows=2048):
    """Row-tile height that divides H and keeps ~target_rows output rows per grid step."""
    th = max(1, min(H, target_rows // max(W, 1)))
    while H % th:
        th -= 1
    return th


# ----------------------------------------------------------------------------
# Pallas kernel 1: tiled GEMM with fused bias + optional leaky / skip-add
# ----------------------------------------------------------------------------
def _gemm_kernel(a_ref, w_ref, b_ref, o_ref, *, act):
    acc = jnp.dot(a_ref[...], w_ref[...], preferred_element_type=jnp.float32) + b_ref[...]
    if act == "leaky":
        acc = jnp.where(acc > 0, acc, LEAKY_SLOPE * acc)
    o_ref[...] = acc.astype(o_ref.dtype)


def _gemm_skip_kernel(a_ref, w_ref, b_ref, r_ref, o_ref):
    acc = jnp.dot(a_ref[...], w_ref[...], preferred_element_type=jnp.float32) + b_ref[...]
    acc = acc + r_ref[...].astype(jnp.float32)
    acc = jnp.where(acc > 0, acc, LEAKY_SLOPE * acc)
    o_ref[...] = acc.astype(o_ref.dtype)


def matmul_bias(a, w, b, act="none", skip=None, out_dtype=ADT, tm=512):
    """out = act(a @ w + b); when `skip` is given: out = leaky(a @ w + b + skip).

    a: (M, K), w: (K, N) [cast to bf16], b: (1, N) f32.  f32 accumulation in-kernel.
    M is padded up to a multiple of the row tile (no silent truncation).
    """
    M, K = a.shape
    N = w.shape[1]
    a = a.astype(ADT)
    w = w.astype(ADT)

    tm_eff = min(tm, _round_up(M, 8))
    if M > 16 and _round_up(M, tm_eff) // tm_eff < 2:
        # >= 2 grid steps so the "parallel" axis can be split across v7x's two TensorCores
        tm_eff = _round_up((M + 1) // 2, 8)
    Mp = _round_up(M, tm_eff)
    if Mp != M:
        a = jnp.pad(a, ((0, Mp - M), (0, 0)))
        if skip is not None:
            skip = jnp.pad(skip.astype(ADT), ((0, Mp - M), (0, 0)))

    in_specs = [
        pl.BlockSpec((tm_eff, K), lambda i: (i, 0)),
        pl.BlockSpec((K, N), lambda i: (0, 0)),
        pl.BlockSpec((1, N), lambda i: (0, 0)),
    ]
    operands = [a, w, b]
    if skip is None:
        kern = functools.partial(_gemm_kernel, act=act)
    else:
        kern = _gemm_skip_kernel
        in_specs.append(pl.BlockSpec((tm_eff, N), lambda i: (i, 0)))
        operands.append(skip.astype(ADT))

    out = pl.pallas_call(
        kern,
        out_shape=jax.ShapeDtypeStruct((Mp, N), out_dtype),
        grid=(Mp // tm_eff,),
        in_specs=in_specs,
        out_specs=pl.BlockSpec((tm_eff, N), lambda i: (i, 0)),
        compiler_params=pltpu.CompilerParams(
            dimension_semantics=("parallel",),
            vmem_limit_bytes=VMEM_LIMIT),
    )(*operands)
    return out[:M] if Mp != M else out


# ----------------------------------------------------------------------------
# Pallas kernel 2: KxK 'same' stride-1 conv, in-kernel patch extraction
# (input stays resident in VMEM; k*k shifted matmuls accumulated in f32)
# ----------------------------------------------------------------------------
def _conv_kernel(xp_ref, w_ref, b_ref, o_ref, *, k, th, W, Cin, Cout, act):
    i = pl.program_id(1)
    row0 = pl.multiple_of(i * th, th)
    acc = jnp.zeros((th * W, Cout), jnp.float32)
    for dy in range(k):
        for dx in range(k):
            sl = xp_ref[0, pl.ds(row0 + dy, th), pl.ds(dx, W), :]          # (th, W, Cin)
            wk = w_ref[(dy * k + dx) * Cin:(dy * k + dx + 1) * Cin, :]     # (Cin, Cout)
            acc = acc + jnp.dot(sl.reshape(th * W, Cin), wk,
                                preferred_element_type=jnp.float32)
    acc = acc + b_ref[...]
    if act == "leaky":
        acc = jnp.where(acc > 0, acc, LEAKY_SLOPE * acc)
    o_ref[...] = acc.reshape(1, th, W, Cout).astype(o_ref.dtype)


def _conv_direct(x, w, b, k, act):
    B, H, W, Cin = x.shape
    Cout = w.shape[1]
    p = k // 2
    xp = jnp.pad(x.astype(ADT), ((0, 0), (p, p), (p, p), (0, 0)))
    Hp, Wp = H + 2 * p, W + 2 * p
    th = _pick_tile_rows(H, W)
    kern = functools.partial(_conv_kernel, k=k, th=th, W=W, Cin=Cin, Cout=Cout, act=act)
    return pl.pallas_call(
        kern,
        out_shape=jax.ShapeDtypeStruct((B, H, W, Cout), ADT),
        grid=(B, H // th),
        in_specs=[
            pl.BlockSpec((1, Hp, Wp, Cin), lambda b_, i_: (b_, 0, 0, 0)),
            pl.BlockSpec((k * k * Cin, Cout), lambda b_, i_: (0, 0)),
            pl.BlockSpec((1, Cout), lambda b_, i_: (0, 0)),
        ],
        out_specs=pl.BlockSpec((1, th, W, Cout), lambda b_, i_: (b_, i_, 0, 0)),
        compiler_params=pltpu.CompilerParams(
            dimension_semantics=("parallel", "parallel"),
            vmem_limit_bytes=VMEM_LIMIT),
    )(xp, w, b)


def _im2col(x, k):
    """x: (B,H,W,C), 'same' padding, stride 1 -> (B*H*W, k*k*C).  Only used for tiny Cin."""
    B, H, W, C = x.shape
    p = k // 2
    xp = jnp.pad(x, ((0, 0), (p, p), (p, p), (0, 0)))
    cols = [xp[:, dy:dy + H, dx:dx + W, :] for dy in range(k) for dx in range(k)]
    return jnp.concatenate(cols, axis=-1).reshape(B * H * W, k * k * C)


def conv2d_same(x, wb, act="leaky"):
    """KxK conv, padding=K//2, stride 1; weight stored flattened (k*k*Cin, Cout)."""
    w, b = wb
    B, H, W, Cin = x.shape
    Cout = w.shape[1]
    k = int(round(math.sqrt(w.shape[0] // Cin)))
    if Cin >= 16 and W % 8 == 0:
        return _conv_direct(x, w, b, k, act)
    # tiny-Cin fallback (conv1A Cin=1, first sbd conv Cin=lsdim+2): im2col is negligible here
    a = _im2col(x.astype(ADT), k)
    out = matmul_bias(a, w, b, act=act)
    return out.reshape(B, H, W, Cout)


def pw_conv(x, wb, act="none", out_dtype=ADT):
    """1x1 conv as a single fused GEMM."""
    w, b = wb
    B, H, W, C = x.shape
    out = matmul_bias(x.reshape(B * H * W, C), w, b, act=act, out_dtype=out_dtype)
    return out.reshape(B, H, W, w.shape[1])


# ----------------------------------------------------------------------------
# Pallas kernel 3: fully fused residual block (1x1 -> 3x3 -> 1x1 -> +skip -> leaky), stride 1
# ----------------------------------------------------------------------------
def _residual_kernel(xp_ref, w1_ref, b1_ref, wc_ref, b2_ref, w2_ref, b3_ref,
                     o_ref, h1_ref, *, th, H, W, Cpw, Cc):
    i = pl.program_id(1)
    row0 = pl.multiple_of(i * th, th)
    Wp = W + 8
    slab = xp_ref[0, pl.ds(row0, th + 2), :, :]                   # (th+2, Wp, Cpw)

    # 1x1 conv + leaky over the tile plus a 1-row halo
    h1 = jnp.dot(slab.reshape((th + 2) * Wp, Cpw), w1_ref[...],
                 preferred_element_type=jnp.float32) + b1_ref[...]
    h1 = jnp.where(h1 > 0, h1, LEAKY_SLOPE * h1).reshape(th + 2, Wp, Cc)

    # zero the positions that correspond to the 3x3 conv's zero padding
    gr = row0 + lax.broadcasted_iota(jnp.int32, (th + 2, Wp), 0)
    gc = lax.broadcasted_iota(jnp.int32, (th + 2, Wp), 1)
    valid = jnp.logical_and(jnp.logical_and(gr >= 1, gr <= H),
                            jnp.logical_and(gc >= 1, gc <= W))
    h1 = jnp.where(valid[:, :, None], h1, 0.0)
    h1_ref[...] = h1.astype(h1_ref.dtype)

    # 3x3 conv + leaky: accumulate the 9 shifted matmuls in f32
    acc = jnp.zeros((th * W, Cc), jnp.float32)
    for dy in range(3):
        for dx in range(3):
            sl = h1_ref[pl.ds(dy, th), pl.ds(dx, W), :]            # (th, W, Cc)
            wk = wc_ref[(dy * 3 + dx) * Cc:(dy * 3 + dx + 1) * Cc, :]
            acc = acc + jnp.dot(sl.reshape(th * W, Cc), wk,
                                preferred_element_type=jnp.float32)
    h2 = acc + b2_ref[...]
    h2 = jnp.where(h2 > 0, h2, LEAKY_SLOPE * h2).astype(h1_ref.dtype)

    # 1x1 conv back to Cpw, add skip, leaky
    h3 = jnp.dot(h2, w2_ref[...], preferred_element_type=jnp.float32) + b3_ref[...]
    skip = xp_ref[0, pl.ds(row0 + 1, th), pl.ds(1, W), :]
    out = h3 + skip.reshape(th * W, Cpw).astype(jnp.float32)
    out = jnp.where(out > 0, out, LEAKY_SLOPE * out)
    o_ref[...] = out.reshape(1, th, W, Cpw).astype(o_ref.dtype)


def _residual_fused(x, p):
    w1, b1 = p["pw"]
    wc, b2 = p["conv"]
    w2, b3 = p["out"]
    B, H, W, Cpw = x.shape
    Cc = w1.shape[1]
    # rows padded by 1 each side; cols padded 1 left + 7 right so the padded width stays
    # a multiple of 8 (layout-trivial reshapes inside the kernel)
    xp = jnp.pad(x.astype(ADT), ((0, 0), (1, 1), (1, 7), (0, 0)))
    th = _pick_tile_rows(H, W)
    Wp = W + 8
    kern = functools.partial(_residual_kernel, th=th, H=H, W=W, Cpw=Cpw, Cc=Cc)
    return pl.pallas_call(
        kern,
        out_shape=jax.ShapeDtypeStruct((B, H, W, Cpw), ADT),
        grid=(B, H // th),
        in_specs=[
            pl.BlockSpec((1, H + 2, Wp, Cpw), lambda b_, i_: (b_, 0, 0, 0)),
            pl.BlockSpec((Cpw, Cc), lambda b_, i_: (0, 0)),
            pl.BlockSpec((1, Cc), lambda b_, i_: (0, 0)),
            pl.BlockSpec((9 * Cc, Cc), lambda b_, i_: (0, 0)),
            pl.BlockSpec((1, Cc), lambda b_, i_: (0, 0)),
            pl.BlockSpec((Cc, Cpw), lambda b_, i_: (0, 0)),
            pl.BlockSpec((1, Cpw), lambda b_, i_: (0, 0)),
        ],
        out_specs=pl.BlockSpec((1, th, W, Cpw), lambda b_, i_: (b_, i_, 0, 0)),
        scratch_shapes=[pltpu.VMEM((th + 2, Wp, Cc), ADT)],
        compiler_params=pltpu.CompilerParams(
            dimension_semantics=("parallel", "parallel"),
            vmem_limit_bytes=VMEM_LIMIT),
    )(xp, w1, b1, wc, b2, w2, b3)


# ----------------------------------------------------------------------------
# glue ops (cheap, low-res or tiny tensors -> left in XLA)
# ----------------------------------------------------------------------------
def max_pool2(x):
    # TODO(synk): 2x2 max-pool + leaky epilogue left as XLA glue (fusing it in-kernel needs a
    # relayout-heavy sublane-pair reduction); traffic involved is a few MB per forward.
    B, H, W, C = x.shape
    return x.reshape(B, H // 2, 2, W // 2, 2, C).max(axis=(2, 4))


def upsample_nearest(x, s):
    return jnp.repeat(jnp.repeat(x, s, axis=1), s, axis=2)


def _strided_patches(x, k, s):
    """Patches only at stride-s output positions ('same' padding)."""
    B, H, W, C = x.shape
    p = k // 2
    Ho, Wo = H // s, W // s
    xp = jnp.pad(x, ((0, 0), (p, p), (p, p), (0, 0)))
    cols = [xp[:, dy:dy + (Ho - 1) * s + 1:s, dx:dx + (Wo - 1) * s + 1:s, :]
            for dy in range(k) for dx in range(k)]
    a = jnp.concatenate(cols, axis=-1).reshape(B * Ho * Wo, k * k * C)
    return a, Ho, Wo


# ----------------------------------------------------------------------------
# Sub-modules
# ----------------------------------------------------------------------------
def residual_block(x, p, stride=1):
    # TODO(synk): `Residual` is not defined in the provided source; reconstructed as a
    # bottleneck block: 1x1 (pw->cc, leaky) -> 3x3 (cc->cc, stride, leaky) -> 1x1 (cc->pw),
    # additive skip (skip spatially subsampled when stride != 1), final leaky.
    B, H, W, Cpw = x.shape
    Cc = p["pw"][0].shape[1]
    if stride == 1 and W % 8 == 0 and Cc >= 8:
        return _residual_fused(x, p)

    # strided / fallback path: pw -> strided-position 3x3 GEMM -> pw (+skip, leaky fused)
    skip = x if stride == 1 else x[:, ::stride, ::stride, :]
    h = pw_conv(x, p["pw"], act="leaky")
    wconv, bconv = p["conv"]
    if stride == 1:
        h = conv2d_same(h, p["conv"], act="leaky")
        Ho, Wo = H, W
    else:
        a, Ho, Wo = _strided_patches(h, 3, stride)
        h = matmul_bias(a, wconv, bconv, act="leaky").reshape(B, Ho, Wo, Cc)
    w2, b2 = p["out"]
    out = matmul_bias(h.reshape(B * Ho * Wo, Cc), w2, b2,
                      skip=skip.reshape(B * Ho * Wo, Cpw))
    return out.reshape(B, Ho, Wo, Cpw)


def sbd_fwd(z, sbd_params, input_length):
    # TODO(synk): `spatial_broadcast_decoder` is not defined in the provided source;
    # reconstructed as the standard spatial-broadcast decoder: tile z over HxW, append two
    # coordinate channels, then 3x3 convs with channels [64,64,64,64,64] + leaky_relu.
    B, L = z.shape
    H = input_length
    zb = jnp.broadcast_to(z.astype(ADT)[:, None, None, :], (B, H, H, L))
    lin = jnp.linspace(-1.0, 1.0, H, dtype=jnp.float32)
    yy, xx = jnp.meshgrid(lin, lin, indexing="ij")
    coords = jnp.broadcast_to(jnp.stack([xx, yy], axis=-1)[None].astype(ADT), (B, H, H, 2))
    h = jnp.concatenate([zb, coords], axis=-1)
    for wb in sbd_params:
        h = conv2d_same(h, wb, act="leaky")
    return h


# ----------------------------------------------------------------------------
# VAE forward
# ----------------------------------------------------------------------------
def encoder(x, P, logvar_bound):
    y1 = x
    h = conv2d_same(x, P["conv1A"], act="leaky")
    h = conv2d_same(h, P["conv1B"], act="leaky")
    h = _leaky(max_pool2(conv2d_same(h, P["conv1C"], act="none")))          # (B,64,64,64)
    t = conv2d_same(h, P["fuse_1D_2A"], act="leaky")                        # conv2A + conv1D fused
    y2, h = t[..., 64:65], t[..., :64]
    h = conv2d_same(h, P["conv2B"], act="leaky")
    h = _leaky(max_pool2(conv2d_same(h, P["conv2C"], act="none")))          # (B,32,32,64)
    t = conv2d_same(h, P["fuse_2D_3A"], act="leaky")
    y3, h = t[..., 64:65], t[..., :64]
    h = conv2d_same(h, P["conv3B"], act="leaky")
    h = _leaky(max_pool2(conv2d_same(h, P["conv3C"], act="none")))          # (B,16,16,64)
    t = conv2d_same(h, P["fuse_3D_4A"], act="leaky")
    y4, h = t[..., 64:65], t[..., :64]
    h = conv2d_same(h, P["conv4B"], act="leaky")
    h = _leaky(max_pool2(conv2d_same(h, P["conv4C"], act="none")))          # (B,8,8,64)
    h = conv2d_same(h, P["conv4D"], act="leaky")                            # (B,8,8,1)

    y2 = upsample_nearest(y2, 2)
    y3 = upsample_nearest(y3, 4)
    y4 = upsample_nearest(y4, 8)
    h = upsample_nearest(h, 16)
    h = jnp.concatenate([y1.astype(ADT), y2, y3, y4, h], axis=-1)           # (B,128,128,5)

    h = pw_conv(h, P["pw_conv0"], act="leaky")
    for k in range(3):
        h = residual_block(h, P["res1"][k], stride=2 if k == 0 else 1)
    h = pw_conv(h, P["pw_conv1"], act="leaky")
    for k in range(2):
        h = residual_block(h, P["res2"][k], stride=2 if k == 0 else 1)
    h = pw_conv(h, P["pw_conv2"], act="leaky")
    h = residual_block(h, P["res3"][0], stride=2)
    h = pw_conv(h, P["pw_conv3"], act="leaky")
    h = residual_block(h, P["res4"][0], stride=2)

    h = jnp.mean(h.astype(jnp.float32), axis=(1, 2))                        # avg_pool(8,8) -> (B,1024)
    h = matmul_bias(h, *P["fcc"], act="leaky", out_dtype=jnp.float32)
    zc = matmul_bias(h, *P["head"], act="none", out_dtype=jnp.float32)      # mean+logvar fused
    lsdim = zc.shape[1] // 2
    z_mean = zc[:, :lsdim]
    zl = zc[:, lsdim:]
    alpha = -1.0 * logvar_bound                                             # F.elu(x, alpha=-logvar_bound)
    z_logvar = jnp.where(zl > 0, zl, alpha * jnp.expm1(zl))
    return z_mean, z_logvar


def decode(z, P, input_length):
    h = sbd_fwd(z, P["sbd"], input_length)
    for blk in P["res_d"]:
        h = residual_block(h, blk, stride=1)
    h = pw_conv(h, P["pw_convd"], act="leaky", out_dtype=jnp.float32)
    return jax.nn.sigmoid(h)


def vae_forward(params, x_nchw, eps_key, *, input_length, logvar_bound):
    x = jnp.transpose(x_nchw, (0, 2, 3, 1)).astype(jnp.float32)             # NCHW -> NHWC
    mu, logvar = encoder(x, params, logvar_bound)
    std = jnp.exp(0.5 * logvar)
    eps = jax.random.normal(eps_key, std.shape, std.dtype)
    z = eps * std + mu
    x_mean = decode(z, params, input_length)
    x_mean = jnp.transpose(x_mean, (0, 3, 1, 2))                            # NHWC -> NCHW
    return x_mean, mu, logvar, z


# ----------------------------------------------------------------------------
# Deterministic parameter initialization (synthetic; no checkpoint loading)
# ----------------------------------------------------------------------------
class KeyGen:
    def __init__(self, seed):
        self._key = jax.random.PRNGKey(seed)

    def __call__(self):
        self._key, k = jax.random.split(self._key)
        return k


def _init_conv(kg, k, cin, cout):
    bound = 1.0 / math.sqrt(cin * k * k)
    w = jax.random.uniform(kg(), (k, k, cin, cout), jnp.float32, -bound, bound)
    b = jax.random.uniform(kg(), (1, cout), jnp.float32, -bound, bound)
    return (w.reshape(k * k * cin, cout).astype(ADT), b)


def _init_pw(kg, cin, cout):
    bound = 1.0 / math.sqrt(cin)
    w = jax.random.uniform(kg(), (cin, cout), jnp.float32, -bound, bound).astype(ADT)
    b = jax.random.uniform(kg(), (1, cout), jnp.float32, -bound, bound)
    return (w, b)


def _init_linear(kg, fin, fout):
    bound = 1.0 / math.sqrt(fin)
    w = jax.random.uniform(kg(), (fin, fout), jnp.float32, -bound, bound).astype(ADT)
    b = jax.random.uniform(kg(), (1, fout), jnp.float32, -bound, bound)
    return (w, b)


def _init_residual(kg, pw_ch, conv_ch):
    return {
        "pw": _init_pw(kg, pw_ch, conv_ch),
        "conv": _init_conv(kg, 3, conv_ch, conv_ch),
        "out": _init_pw(kg, conv_ch, pw_ch),
    }


def _fuse(a_wb, d_wb):
    """Concatenate two same-input convs along Cout (A first, D last)."""
    return (jnp.concatenate([a_wb[0], d_wb[0]], axis=1),
            jnp.concatenate([a_wb[1], d_wb[1]], axis=1))


def init_params(seed, lsdim):
    kg = KeyGen(seed)
    P = {}
    P["conv1A"] = _init_conv(kg, 5, 1, 64)
    for name, cin, cout in [
        ("conv1B", 64, 64), ("conv1C", 64, 64), ("conv1D", 64, 1),
        ("conv2A", 64, 64), ("conv2B", 64, 64), ("conv2C", 64, 64), ("conv2D", 64, 1),
        ("conv3A", 64, 64), ("conv3B", 64, 64), ("conv3C", 64, 64), ("conv3D", 64, 1),
        ("conv4A", 64, 64), ("conv4B", 64, 64), ("conv4C", 64, 64), ("conv4D", 64, 1),
    ]:
        P[name] = _init_conv(kg, 5, cin, cout)
    # fuse the "D" heads with the next stage's "A" conv (same input, shared patch read)
    P["fuse_1D_2A"] = _fuse(P["conv2A"], P["conv1D"])
    P["fuse_2D_3A"] = _fuse(P["conv3A"], P["conv2D"])
    P["fuse_3D_4A"] = _fuse(P["conv4A"], P["conv3D"])
    for name in ["conv1D", "conv2A", "conv2D", "conv3A", "conv3D", "conv4A"]:
        del P[name]

    P["pw_conv0"] = _init_pw(kg, 5, 32)
    P["res1"] = [_init_residual(kg, 32, 16) for _ in range(3)]
    P["pw_conv1"] = _init_pw(kg, 32, 64)
    P["res2"] = [_init_residual(kg, 64, 32) for _ in range(2)]
    P["pw_conv2"] = _init_pw(kg, 64, 256)
    P["res3"] = [_init_residual(kg, 256, 128) for _ in range(1)]
    P["pw_conv3"] = _init_pw(kg, 256, 1024)
    P["res4"] = [_init_residual(kg, 1024, 256) for _ in range(1)]
    P["fcc"] = _init_linear(kg, 1024, 1000)
    wm, bm = _init_linear(kg, 1000, lsdim)
    wl, bl = _init_linear(kg, 1000, lsdim)
    P["head"] = (jnp.concatenate([wm, wl], axis=1), jnp.concatenate([bm, bl], axis=1))

    sbd_channels = [64, 64, 64, 64, 64]
    sbd, cin = [], lsdim + 2
    for cout in sbd_channels:
        sbd.append(_init_conv(kg, 3, cin, cout))
        cin = cout
    P["sbd"] = sbd
    P["res_d"] = [_init_residual(kg, 64, 32) for _ in range(10)]
    P["pw_convd"] = _init_pw(kg, 64, 1)
    return P


# ----------------------------------------------------------------------------
# lightweight correctness cross-checks (pure-XLA references, loose bf16 tolerances)
# ----------------------------------------------------------------------------
def _residual_ref_f32(x, p):
    w1, b1 = p["pw"]
    wc, b2 = p["conv"]
    w2, b3 = p["out"]
    Cc = w1.shape[1]
    f = lambda t: jnp.where(t > 0, t, LEAKY_SLOPE * t)
    h = f(jnp.einsum("bhwc,cd->bhwd", x, w1.astype(jnp.float32)) + b1)
    hc = lax.conv_general_dilated(
        h, wc.astype(jnp.float32).reshape(3, 3, Cc, Cc), (1, 1), "SAME",
        dimension_numbers=("NHWC", "HWIO", "NHWC")) + b2.reshape(1, 1, 1, Cc)
    hc = f(hc)
    out = jnp.einsum("bhwc,cd->bhwd", hc, w2.astype(jnp.float32)) + b3
    return f(out + x)


def _self_check():
    # fused direct conv vs XLA conv
    kg = KeyGen(7)
    wb = _init_conv(kg, 3, 32, 16)
    xt = jax.random.normal(jax.random.PRNGKey(1), (1, 16, 16, 32), jnp.float32)
    xt = xt.astype(ADT).astype(jnp.float32)
    ref = lax.conv_general_dilated(
        xt, wb[0].astype(jnp.float32).reshape(3, 3, 32, 16), (1, 1), "SAME",
        dimension_numbers=("NHWC", "HWIO", "NHWC")) + wb[1].reshape(1, 1, 1, 16)
    ref = jnp.where(ref > 0, ref, LEAKY_SLOPE * ref)
    got = conv2d_same(xt, wb, act="leaky").astype(jnp.float32)
    assert float(jnp.max(jnp.abs(got - ref))) < 0.1, "fused conv mismatch"

    # fused residual block vs unfused f32 reference
    rp = _init_residual(kg, 32, 16)
    xr = (0.5 * jax.random.normal(jax.random.PRNGKey(2), (1, 16, 16, 32), jnp.float32))
    xr = xr.astype(ADT).astype(jnp.float32)
    ref_r = _residual_ref_f32(xr, rp)
    got_r = residual_block(xr, rp, stride=1).astype(jnp.float32)
    assert float(jnp.max(jnp.abs(got_r - ref_r))) < 0.1, "fused residual mismatch"


# ----------------------------------------------------------------------------
# Main
# ----------------------------------------------------------------------------
if __name__ == "__main__":
    INPUT_LENGTH = 128   # smallest spatial size consistent with the module's architecture
    LSDIM = 8
    LOGVAR_BOUND = 6.0
    BATCH = 2

    _self_check()

    params = init_params(seed=42, lsdim=LSDIM)

    key = jax.random.PRNGKey(0)
    k_x, k_eps = jax.random.split(key)
    x = jax.random.uniform(k_x, (BATCH, 1, INPUT_LENGTH, INPUT_LENGTH), jnp.float32)

    fwd = jax.jit(functools.partial(
        vae_forward, input_length=INPUT_LENGTH, logvar_bound=LOGVAR_BOUND))

    x_mean, mu, logvar, z = fwd(params, x, k_eps)
    jax.block_until_ready((x_mean, mu, logvar, z))

    assert x_mean.shape == (BATCH, 1, INPUT_LENGTH, INPUT_LENGTH)
    assert mu.shape == (BATCH, LSDIM) and logvar.shape == (BATCH, LSDIM) and z.shape == (BATCH, LSDIM)
    assert bool(jnp.all(jnp.isfinite(x_mean))) and bool(jnp.all(jnp.isfinite(z)))
    assert bool(jnp.all(jnp.isfinite(mu))) and bool(jnp.all(jnp.isfinite(logvar)))
    print("KERNEL_OK")
</pallas_src>

<mosaic_0001>
module attributes {stable_mosaic.version = 11 : i64} {
  func.func @_conv_kernel(%arg0: i32, %arg1: i32, %arg2: memref<1x18x18x32xbf16, #tpu.memory_space<vmem>>, %arg3: memref<288x16xbf16, #tpu.memory_space<vmem>>, %arg4: memref<1x16xf32, #tpu.memory_space<vmem>>, %arg5: memref<1x16x16x16xbf16, #tpu.memory_space<vmem>>) attributes {dimension_semantics = [#tpu.dimension_semantics<parallel>, #tpu.dimension_semantics<parallel>], iteration_bounds = array<i64: 1, 1>, scalar_prefetch = 0 : i64, scratch_operands = 0 : i64, tpu.core_type = #tpu.core_type<tc>, window_params = [{transform_indices = @transform_0, window_bounds = array<i64: 1, 18, 18, 32>}, {pipeline_mode = #tpu.pipeline_mode<synchronous>, transform_indices = @transform_1, window_bounds = array<i64: 288, 16>}, {pipeline_mode = #tpu.pipeline_mode<synchronous>, transform_indices = @transform_2, window_bounds = array<i64: 1, 16>}, {transform_indices = @transform_3, window_bounds = array<i64: 1, 16, 16, 16>}]} {
    %c16_i32 = arith.constant 16 : i32
    %0 = arith.muli %arg1, %c16_i32 : i32
    %1 = tpu.assume_multiple %0, 16 : i32
    %cst = arith.constant 0.000000e+00 : f32
    %2 = vector.broadcast %cst : f32 to vector<256x16xf32>
    %c0_i32 = arith.constant 0 : i32
    %3 = arith.addi %1, %c0_i32 : i32
    %c0 = arith.constant 0 : index
    %4 = arith.index_cast %3 : i32 to index
    %c0_0 = arith.constant 0 : index
    %c0_1 = arith.constant 0 : index
    %5 = vector.load %arg2[%c0, %4, %c0_0, %c0_1] : memref<1x18x18x32xbf16, #tpu.memory_space<vmem>>, vector<1x16x16x32xbf16>
    %6 = vector.shape_cast %5 : vector<1x16x16x32xbf16> to vector<16x16x32xbf16>
    %c0_2 = arith.constant 0 : index
    %c0_3 = arith.constant 0 : index
    %7 = vector.load %arg3[%c0_2, %c0_3] : memref<288x16xbf16, #tpu.memory_space<vmem>>, vector<32x16xbf16>
    %8 = vector.shape_cast %6 : vector<16x16x32xbf16> to vector<256x32xbf16>
    %cst_4 = arith.constant dense<0.000000e+00> : vector<256x16xf32>
    %9 = tpu.matmul %8, %7, %cst_4 {dimension_numbers = #tpu.dot_dimension_numbers<[1], [0], [0], [1], [0, 0, 1, 1], [], []>} : vector<256x32xbf16>, vector<32x16xbf16>, vector<256x16xf32> -> vector<256x16xf32>
    %10 = arith.addf %2, %9 : vector<256x16xf32>
    %c0_i32_5 = arith.constant 0 : i32
    %11 = arith.addi %1, %c0_i32_5 : i32
    %c0_6 = arith.constant 0 : index
    %12 = arith.index_cast %11 : i32 to index
    %c1 = arith.constant 1 : index
    %c0_7 = arith.constant 0 : index
    %13 = vector.load %arg2[%c0_6, %12, %c1, %c0_7] : memref<1x18x18x32xbf16, #tpu.memory_space<vmem>>, vector<1x16x16x32xbf16>
    %14 = vector.shape_cast %13 : vector<1x16x16x32xbf16> to vector<16x16x32xbf16>
    %c32 = arith.constant 32 : index
    %c0_8 = arith.constant 0 : index
    %15 = vector.load %arg3[%c32, %c0_8] : memref<288x16xbf16, #tpu.memory_space<vmem>>, vector<32x16xbf16>
    %16 = vector.shape_cast %14 : vector<16x16x32xbf16> to vector<256x32xbf16>
    %cst_9 = arith.constant dense<0.000000e+00> : vector<256x16xf32>
    %17 = tpu.matmul %16, %15, %cst_9 {dimension_numbers = #tpu.dot_dimension_numbers<[1], [0], [0], [1], [0, 0, 1, 1], [], []>} : vector<256x32xbf16>, vector<32x16xbf16>, vector<256x16xf32> -> vector<256x16xf32>
    %18 = arith.addf %10, %17 : vector<256x16xf32>
    %c0_i32_10 = arith.constant 0 : i32
    %19 = arith.addi %1, %c0_i32_10 : i32
    %c0_11 = arith.constant 0 : index
    %20 = arith.index_cast %19 : i32 to index
    %c2 = arith.constant 2 : index
    %c0_12 = arith.constant 0 : index
    %21 = vector.load %arg2[%c0_11, %20, %c2, %c0_12] : memref<1x18x18x32xbf16, #tpu.memory_space<vmem>>, vector<1x16x16x32xbf16>
    %22 = vector.shape_cast %21 : vector<1x16x16x32xbf16> to vector<16x16x32xbf16>
    %c64 = arith.constant 64 : index
    %c0_13 = arith.constant 0 : index
    %23 = vector.load %arg3[%c64, %c0_13] : memref<288x16xbf16, #tpu.memory_space<vmem>>, vector<32x16xbf16>
    %24 = vector.shape_cast %22 : vector<16x16x32xbf16> to vector<256x32xbf16>
    %cst_14 = arith.constant dense<0.000000e+00> : vector<256x16xf32>
    %25 = tpu.matmul %24, %23, %cst_14 {dimension_numbers = #tpu.dot_dimension_numbers<[1], [0], [0], [1], [0, 0, 1, 1], [], []>} : vector<256x32xbf16>, vector<32x16xbf16>, vector<256x16xf32> -> vector<256x16xf32>
    %26 = arith.addf %18, %25 : vector<256x16xf32>
    %c1_i32 = arith.constant 1 : i32
    %27 = arith.addi %1, %c1_i32 : i32
    %c0_15 = arith.constant 0 : index
    %28 = arith.index_cast %27 : i32 to index
    %c0_16 = arith.constant 0 : index
    %c0_17 = arith.constant 0 : index
    %29 = vector.load %arg2[%c0_15, %28, %c0_16, %c0_17] : memref<1x18x18x32xbf16, #tpu.memory_space<vmem>>, vector<1x16x16x32xbf16>
    %30 = vector.shape_cast %29 : vector<1x16x16x32xbf16> to vector<16x16x32xbf16>
    %c96 = arith.constant 96 : index
    %c0_18 = arith.constant 0 : index
    %31 = vector.load %arg3[%c96, %c0_18] : memref<288x16xbf16, #tpu.memory_space<vmem>>, vector<32x16xbf16>
    %32 = vector.shape_cast %30 : vector<16x16x32xbf16> to vector<256x32xbf16>
    %cst_19 = arith.constant dense<0.000000e+00> : vector<256x16xf32>
    %33 = tpu.matmul %32, %31, %cst_19 {dimension_numbers = #tpu.dot_dimension_numbers<[1], [0], [0], [1], [0, 0, 1, 1], [], []>} : vector<256x32xbf16>, vector<32x16xbf16>, vector<256x16xf32> -> vector<256x16xf32>
    %34 = arith.addf %26, %33 : vector<256x16xf32>
    %c1_i32_20 = arith.constant 1 : i32
    %35 = arith.addi %1, %c1_i32_20 : i32
    %c0_21 = arith.constant 0 : index
    %36 = arith.index_cast %35 : i32 to index
    %c1_22 = arith.constant 1 : index
    %c0_23 = arith.constant 0 : index
    %37 = vector.load %arg2[%c0_21, %36, %c1_22, %c0_23] : memref<1x18x18x32xbf16, #tpu.memory_space<vmem>>, vector<1x16x16x32xbf16>
    %38 = vector.shape_cast %37 : vector<1x16x16x32xbf16> to vector<16x16x32xbf16>
    %c128 = arith.constant 128 : index
    %c0_24 = arith.constant 0 : index
    %39 = vector.load %arg3[%c128, %c0_24] : memref<288x16xbf16, #tpu.memory_space<vmem>>, vector<32x16xbf16>
    %40 = vector.shape_cast %38 : vector<16x16x32xbf16> to vector<256x32xbf16>
    %cst_25 = arith.constant dense<0.000000e+00> : vector<256x16xf32>
    %41 = tpu.matmul %40, %39, %cst_25 {dimension_numbers = #tpu.dot_dimension_numbers<[1], [0], [0], [1], [0, 0, 1, 1], [], []>} : vector<256x32xbf16>, vector<32x16xbf16>, vector<256x16xf32> -> vector<256x16xf32>
    %42 = arith.addf %34, %41 : vector<256x16xf32>
    %c1_i32_26 = arith.constant 1 : i32
    %43 = arith.addi %1, %c1_i32_26 : i32
    %c0_27 = arith.constant 0 : index
    %44 = arith.index_cast %43 : i32 to index
    %c2_28 = arith.constant 2 : index
    %c0_29 = arith.constant 0 : index
    %45 = vector.load %arg2[%c0_27, %44, %c2_28, %c0_29] : memref<1x18x18x32xbf16, #tpu.memory_space<vmem>>, vector<1x16x16x32xbf16>
    %46 = vector.shape_cast %45 : vector<1x16x16x32xbf16> to vector<16x16x32xbf16>
    %c160 = arith.constant 160 : index
    %c0_30 = arith.constant 0 : index
    %47 = vector.load %arg3[%c160, %c0_30] : memref<288x16xbf16, #tpu.memory_space<vmem>>, vector<32x16xbf16>
    %48 = vector.shape_cast %46 : vector<16x16x32xbf16> to vector<256x32xbf16>
    %cst_31 = arith.constant dense<0.000000e+00> : vector<256x16xf32>
    %49 = tpu.matmul %48, %47, %cst_31 {dimension_numbers = #tpu.dot_dimension_numbers<[1], [0], [0], [1], [0, 0, 1, 1], [], []>} : vector<256x32xbf16>, vector<32x16xbf16>, vector<256x16xf32> -> vector<256x16xf32>
    %50 = arith.addf %42, %49 : vector<256x16xf32>
    %c2_i32 = arith.constant 2 : i32
    %51 = arith.addi %1, %c2_i32 : i32
    %c0_32 = arith.constant 0 : index
    %52 = arith.index_cast %51 : i32 to index
    %c0_33 = arith.constant 0 : index
    %c0_34 = arith.constant 0 : index
    %53 = vector.load %arg2[%c0_32, %52, %c0_33, %c0_34] : memref<1x18x18x32xbf16, #tpu.memory_space<vmem>>, vector<1x16x16x32xbf16>
    %54 = vector.shape_cast %53 : vector<1x16x16x32xbf16> to vector<16x16x32xbf16>
    %c192 = arith.constant 192 : index
    %c0_35 = arith.constant 0 : index
    %55 = vector.load %arg3[%c192, %c0_35] : memref<288x16xbf16, #tpu.memory_space<vmem>>, vector<32x16xbf16>
    %56 = vector.shape_cast %54 : vector<16x16x32xbf16> to vector<256x32xbf16>
    %cst_36 = arith.constant dense<0.000000e+00> : vector<256x16xf32>
    %57 = tpu.matmul %56, %55, %cst_36 {dimension_numbers = #tpu.dot_dimension_numbers<[1], [0], [0], [1], [0, 0, 1, 1], [], []>} : vector<256x32xbf16>, vector<32x16xbf16>, vector<256x16xf32> -> vector<256x16xf32>
    %58 = arith.addf %50, %57 : vector<256x16xf32>
    %c2_i32_37 = arith.constant 2 : i32
    %59 = arith.addi %1, %c2_i32_37 : i32
    %c0_38 = arith.constant 0 : index
    %60 = arith.index_cast %59 : i32 to index
    %c1_39 = arith.constant 1 : index
    %c0_40 = arith.constant 0 : index
    %61 = vector.load %arg2[%c0_38, %60, %c1_39, %c0_40] : memref<1x18x18x32xbf16, #tpu.memory_space<vmem>>, vector<1x16x16x32xbf16>
    %62 = vector.shape_cast %61 : vector<1x16x16x32xbf16> to vector<16x16x32xbf16>
    %c224 = arith.constant 224 : index
    %c0_41 = arith.constant 0 : index
    %63 = vector.load %arg3[%c224, %c0_41] : memref<288x16xbf16, #tpu.memory_space<vmem>>, vector<32x16xbf16>
    %64 = vector.shape_cast %62 : vector<16x16x32xbf16> to vector<256x32xbf16>
    %cst_42 = arith.constant dense<0.000000e+00> : vector<256x16xf32>
    %65 = tpu.matmul %64, %63, %cst_42 {dimension_numbers = #tpu.dot_dimension_numbers<[1], [0], [0], [1], [0, 0, 1, 1], [], []>} : vector<256x32xbf16>, vector<32x16xbf16>, vector<256x16xf32> -> vector<256x16xf32>
    %66 = arith.addf %58, %65 : vector<256x16xf32>
    %c2_i32_43 = arith.constant 2 : i32
    %67 = arith.addi %1, %c2_i32_43 : i32
    %c0_44 = arith.constant 0 : index
    %68 = arith.index_cast %67 : i32 to index
    %c2_45 = arith.constant 2 : index
    %c0_46 = arith.constant 0 : index
    %69 = vector.load %arg2[%c0_44, %68, %c2_45, %c0_46] : memref<1x18x18x32xbf16, #tpu.memory_space<vmem>>, vector<1x16x16x32xbf16>
    %70 = vector.shape_cast %69 : vector<1x16x16x32xbf16> to vector<16x16x32xbf16>
    %c256 = arith.constant 256 : index
    %c0_47 = arith.constant 0 : index
    %71 = vector.load %arg3[%c256, %c0_47] : memref<288x16xbf16, #tpu.memory_space<vmem>>, vector<32x16xbf16>
    %72 = vector.shape_cast %70 : vector<16x16x32xbf16> to vector<256x32xbf16>
    %cst_48 = arith.constant dense<0.000000e+00> : vector<256x16xf32>
    %73 = tpu.matmul %72, %71, %cst_48 {dimension_numbers = #tpu.dot_dimension_numbers<[1], [0], [0], [1], [0, 0, 1, 1], [], []>} : vector<256x32xbf16>, vector<32x16xbf16>, vector<256x16xf32> -> vector<256x16xf32>
    %74 = arith.addf %66, %73 : vector<256x16xf32>
    %c0_49 = arith.constant 0 : index
    %c0_50 = arith.constant 0 : index
    %75 = vector.load %arg4[%c0_49, %c0_50] : memref<1x16xf32, #tpu.memory_space<vmem>>, vector<1x16xf32>
    %76 = vector.broadcast %75 : vector<1x16xf32> to vector<256x16xf32>
    %77 = arith.addf %74, %76 : vector<256x16xf32>
    %cst_51 = arith.constant 0.000000e+00 : f32
    %78 = vector.broadcast %cst_51 : f32 to vector<256x16xf32>
    %79 = arith.cmpf ogt, %77, %78 : vector<256x16xf32>
    %cst_52 = arith.constant 0.00999999977 : f32
    %80 = vector.broadcast %cst_52 : f32 to vector<256x16xf32>
    %81 = arith.mulf %80, %77 : vector<256x16xf32>
    %82 = arith.select %79, %77, %81 : vector<256x16xi1>, vector<256x16xf32>
    %83 = vector.shape_cast %82 : vector<256x16xf32> to vector<1x16x16x16xf32>
    %84 = arith.truncf %83 : vector<1x16x16x16xf32> to vector<1x16x16x16xbf16>
    %c0_53 = arith.constant 0 : index
    %c0_54 = arith.constant 0 : index
    %c0_55 = arith.constant 0 : index
    %c0_56 = arith.constant 0 : index
    %85 = vector.load %arg5[%c0_53, %c0_54, %c0_55, %c0_56] : memref<1x16x16x16xbf16, #tpu.memory_space<vmem>>, vector<1x16x16x16xbf16>
    tpu.vector_store %arg5[%c0_53, %c0_54, %c0_55, %c0_56], %84 {strides = array<i32>} : memref<1x16x16x16xbf16, #tpu.memory_space<vmem>>, vector<1x16x16x16xbf16>,
    return
  }
  func.func @transform_0(%arg0: i32, %arg1: i32) -> (i32, i32, i32, i32) {
    %c0_i32 = arith.constant 0 : i32
    %c0_i32_0 = arith.constant 0 : i32
    %c0_i32_1 = arith.constant 0 : i32
    %c0_i32_2 = arith.constant 0 : i32
    return %arg0, %c0_i32, %c0_i32_0, %c0_i32_1 : i32, i32, i32, i32
  }
  func.func @transform_1(%arg0: i32, %arg1: i32) -> (i32, i32) {
    %c0_i32 = arith.constant 0 : i32
    %c0_i32_0 = arith.constant 0 : i32
    %c0_i32_1 = arith.constant 0 : i32
    return %c0_i32, %c0_i32_0 : i32, i32
  }
  func.func @transform_2(%arg0: i32, %arg1: i32) -> (i32, i32) {
    %c0_i32 = arith.constant 0 : i32
    %c0_i32_0 = arith.constant 0 : i32
    %c0_i32_1 = arith.constant 0 : i32
    return %c0_i32, %c0_i32_0 : i32, i32
  }
  func.func @transform_3(%arg0: i32, %arg1: i32) -> (i32, i32, i32, i32) {
    %c0_i32 = arith.constant 0 : i32
    %c0_i32_0 = arith.constant 0 : i32
    %c0_i32_1 = arith.constant 0 : i32
    return %arg0, %arg1, %c0_i32, %c0_i32_0 : i32, i32, i32, i32
  }
}

</mosaic_0001>

<llo_original>
// kernel: tpu_custom_call.1
$region0: #{tpu_custom_call.1}
  #allocation0 [shape = 'u32[]', space=smem, size = 0x4, offset = 0x4, fixed_abs, tag = 'smem constant byte address 0x4 - core index']
  #allocation1 [shape = 'u32[144,128]{1,0:T(1,128)}', space=vmem, size = 0x12000, scoped, tag = 'internal scratch']
  %s0 = inlined_call_operand.hbm [shape: bf16[1,18,18,32], index: 0, kind: input, shape index: {}]
  %s1 = inlined_call_operand.vmem [shape: bf16[288,16], index: 1, kind: input, shape index: {}]
  %s2 = inlined_call_operand.vmem [shape: f32[1,16], index: 2, kind: input, shape index: {}]
  %s3 = inlined_call_operand.hbm [shape: bf16[1,16,16,16], index: 3, kind: output, shape index: {}]
  %s4 = sld [smem:[#allocation0]]
  $region26: #{tpu_custom_call.1} parent=0
    _
  %s6 = ssub.s32 1, %s4
  %s7 = scalar_select 0, %s6, %s4
  $region1: #{tpu_custom_call.1} parent=0
    #allocation2 [shape = 'u8[110592]{0}', space=vmem, size = 0x1b000, scoped, tag = 'input window, operand 0, single buffered']
    #allocation3 [shape = 's32[1]{0}', space=sflag, size = 0x4, scoped, tag = 'scoped memory for tpu_custom_call.1']
    #allocation4 [shape = 's32[1]{0}', space=sflag, size = 0x4, scoped, tag = 'scoped memory for tpu_custom_call.1']
    #allocation5 [shape = 'u8[65536]{0}', space=vmem, size = 0x10000, scoped, tag = 'output window, operand 0, single buffered']
    %8 = vsyncpa [#allocation3], 0
    %9 = vsyncpa [#allocation4], 0
    // Predicated region
    $region2: #{tpu_custom_call.1} parent=1 // pred_check
      _
    $region3: #{tpu_custom_call.1} parent=1 // pred_check_branch
      %11 = sbr.rel (0) target = $region5
    $region4: #{tpu_custom_call.1} parent=1 // pred_region
      %s13 = ssub.s32 3456, 3456
      %14 = vsyncadd [#allocation3], %s13
      %s15 = sshll.u32 [#allocation2], 4
      %s16 = int_to_ptr.vmem [resolvable:$true] %s15
      %21 = dma.hbm_to_vmem [thread:$0]  %s0, 3456, %s16, [#allocation3], 64, 64, 4
    $region5: #{tpu_custom_call.1} parent=1 // pred_fallthru
      _
    // Predicated region
    $region6: #{tpu_custom_call.1} parent=1 // pred_check
      _
    $region7: #{tpu_custom_call.1} parent=1 // pred_check_branch
      %23 = sbr.rel (0) target = $region9
    $region8: #{tpu_custom_call.1} parent=1 // pred_region
      _
    $region9: #{tpu_custom_call.1} parent=1 // pred_fallthru
      _
    // Predicated region
    $region10: #{tpu_custom_call.1} parent=1 // pred_check
      _
    $region11: #{tpu_custom_call.1} parent=1 // pred_check_branch
      %25 = sbr.rel (0) target = $region13
    $region12: #{tpu_custom_call.1} parent=1 // pred_region
      _
    $region13: #{tpu_custom_call.1} parent=1 // pred_fallthru
      _
    // Predicated region
    $region14: #{tpu_custom_call.1} parent=1 // pred_check
      _
    $region15: #{tpu_custom_call.1} parent=1 // pred_check_branch
      %27 = sbr.rel (0) target = $region17
    $region16: #{tpu_custom_call.1} parent=1 // pred_region
      %28 = dma.done [#allocation3], 3456
    $region17: #{tpu_custom_call.1} parent=1 // pred_fallthru
      _
    %s30 = smul.u32 0, 16
    %s31 = smul.u32 %s30, 3
    %s32 = smul.addr %s31, 4
    %s33 = scalar_lea.vmem [#allocation2], %s32
    %v34 = vld [vmem:[%s33] sm:$0xf]
    %v35 = vld [vmem:[%s33 + $0x4] sm:$0xf]
    %v36 = vld [vmem:[%s33 + $0xc] sm:$0xf]
    %v37 = vld [vmem:[%s33 + $0x10] sm:$0xf]
    %v38 = vld [vmem:[%s33 + $0x18] sm:$0xf]
    %v39 = vld [vmem:[%s33 + $0x1c] sm:$0xf]
    %v40 = vld [vmem:[%s33 + $0x24] sm:$0xf]
    %v41 = vld [vmem:[%s33 + $0x28] sm:$0xf]
    %v42 = vld [vmem:[%s33 + $0x30] sm:$0xf]
    %v43 = vld [vmem:[%s33 + $0x34] sm:$0xf]
    %v44 = vld [vmem:[%s33 + $0x3c] sm:$0xf]
    %v45 = vld [vmem:[%s33 + $0x40] sm:$0xf]
    %v46 = vld [vmem:[%s33 + $0x48] sm:$0xf]
    %v47 = vld [vmem:[%s33 + $0x4c] sm:$0xf]
    %v48 = vld [vmem:[%s33 + $0x54] sm:$0xf]
    %v49 = vld [vmem:[%s33 + $0x58] sm:$0xf]
    %v50 = vld [vmem:[%s33 + $0x60] sm:$0xf]
    %v51 = vld [vmem:[%s33 + $0x64] sm:$0xf]
    %v52 = vld [vmem:[%s33 + $0x6c] sm:$0xf]
    %v53 = vld [vmem:[%s33 + $0x70] sm:$0xf]
    %v54 = vld [vmem:[%s33 + $0x78] sm:$0xf]
    %v55 = vld [vmem:[%s33 + $0x7c] sm:$0xf]
    %v56 = vld [vmem:[%s33 + $0x84] sm:$0xf]
    %v57 = vld [vmem:[%s33 + $0x88] sm:$0xf]
    %v58 = vld [vmem:[%s33 + $0x90] sm:$0xf]
    %v59 = vld [vmem:[%s33 + $0x94] sm:$0xf]
    %v60 = vld [vmem:[%s33 + $0x9c] sm:$0xf]
    %v61 = vld [vmem:[%s33 + $0xa0] sm:$0xf]
    %v62 = vld [vmem:[%s33 + $0xa8] sm:$0xf]
    %v63 = vld [vmem:[%s33 + $0xac] sm:$0xf]
    %v64 = vld [vmem:[%s33 + $0xb4] sm:$0xf]
    %v65 = vld [vmem:[%s33 + $0xb8] sm:$0xf]
    %v66 = vld [vmem:[%s1] sm:$0xf]
    %v67 = vld [vmem:[%s1 + $0x4] sm:$0xf]
    %v68 = vld [vmem:[%s1 + $0x8] sm:$0xf]
    %v69 = vld [vmem:[%s1 + $0xc] sm:$0xf]
    %v70 = vld [vmem:[%s33 + $0x8] sm:$0x1]
    %v71 = vld [vmem:[%s33 + $0x14] sm:$0x1]
    %v72 = vld [vmem:[%s33 + $0x20] sm:$0x1]
    %v73 = vld [vmem:[%s33 + $0x2c] sm:$0x1]
    %v74 = vld [vmem:[%s33 + $0x38] sm:$0x1]
    %v75 = vld [vmem:[%s33 + $0x44] sm:$0x1]
    %v76 = vld [vmem:[%s33 + $0x50] sm:$0x1]
    %v77 = vld [vmem:[%s33 + $0x5c] sm:$0x1]
    %v78 = vld [vmem:[%s33 + $0x68] sm:$0x1]
    %v79 = vld [vmem:[%s33 + $0x74] sm:$0x1]
    %v80 = vld [vmem:[%s33 + $0x80] sm:$0x1]
    %v81 = vld [vmem:[%s33 + $0x8c] sm:$0x1]
    %v82 = vld [vmem:[%s33 + $0x98] sm:$0x1]
    %v83 = vld [vmem:[%s33 + $0xa4] sm:$0x1]
    %v84 = vld [vmem:[%s33 + $0xb0] sm:$0x1]
    %v85 = vld [vmem:[%s33 + $0xbc] sm:$0x1]
    %v86 = vld [vmem:[%s1 + $0x10] sm:$0xf]
    %v87 = vld [vmem:[%s1 + $0x14] sm:$0xf]
    %v88 = vld [vmem:[%s1 + $0x18] sm:$0xf]
    %v89 = vld [vmem:[%s1 + $0x1c] sm:$0xf]
    %vm90 = vsmask.f32 3328
    %vm91 = vsmask.f32 7440
    %vm92 = vmor %vm90, %vm91
    %v94 = vshrl.u32 %v34, 16
    %v96 = vrot.slane %v94, 4
    %v97 = vshll.u32 %v34, 16
    %v99 = vrot.slane %v97, 5
    %v100 = vor.u32 %v96, %v99
    %v101 = vrot.slane %v100, 4
    %v103 = vshll.u32 %v35, 16
    %v105 = vrot.slane %v103, 5
    %v106 = vsel %vm92, %v101, %v105
    %v107 = vshrl.u32 %v35, 16
    %v109 = vrot.slane %v107, 4
    %v110 = vor.u32 %v109, %v105
    %v111 = vrot.slane %v110, 4
    %v113 = vshll.u32 %v70, 16
    %v115 = vrot.slane %v113, 5
    %v116 = vsel %vm92, %v111, %v115
    %v118 = vshrl.u32 %v36, 16
    %v120 = vrot.slane %v118, 4
    %v121 = vshll.u32 %v36, 16
    %v123 = vrot.slane %v121, 5
    %v124 = vor.u32 %v120, %v123
    %v125 = vrot.slane %v124, 4
    %v127 = vshll.u32 %v37, 16
    %v129 = vrot.slane %v127, 5
    %v130 = vsel %vm92, %v125, %v129
    %v131 = vshrl.u32 %v37, 16
    %v133 = vrot.slane %v131, 4
    %v134 = vor.u32 %v133, %v129
    %v135 = vrot.slane %v134, 4
    %v137 = vshll.u32 %v71, 16
    %v139 = vrot.slane %v137, 5
    %v140 = vsel %vm92, %v135, %v139
    %v142 = vshrl.u32 %v38, 16
    %v144 = vrot.slane %v142, 4
    %v145 = vshll.u32 %v38, 16
    %v147 = vrot.slane %v145, 5
    %v148 = vor.u32 %v144, %v147
    %v149 = vrot.slane %v148, 4
    %v151 = vshll.u32 %v39, 16
    %v153 = vrot.slane %v151, 5
    %v154 = vsel %vm92, %v149, %v153
    %v155 = vshrl.u32 %v39, 16
    %v157 = vrot.slane %v155, 4
    %v158 = vor.u32 %v157, %v153
    %v159 = vrot.slane %v158, 4
    %v161 = vshll.u32 %v72, 16
    %v163 = vrot.slane %v161, 5
    %v164 = vsel %vm92, %v159, %v163
    %v166 = vshrl.u32 %v40, 16
    %v168 = vrot.slane %v166, 4
    %v169 = vshll.u32 %v40, 16
    %v171 = vrot.slane %v169, 5
    %v172 = vor.u32 %v168, %v171
    %v173 = vrot.slane %v172, 4
    %v175 = vshll.u32 %v41, 16
    %v177 = vrot.slane %v175, 5
    %v178 = vsel %vm92, %v173, %v177
    %v179 = vshrl.u32 %v41, 16
    %v181 = vrot.slane %v179, 4
    %v182 = vor.u32 %v181, %v177
    %v183 = vrot.slane %v182, 4
    %v185 = vshll.u32 %v73, 16
    %v187 = vrot.slane %v185, 5
    %v188 = vsel %vm92, %v183, %v187
    %v190 = vshrl.u32 %v42, 16
    %v192 = vrot.slane %v190, 4
    %v193 = vshll.u32 %v42, 16
    %v195 = vrot.slane %v193, 5
    %v196 = vor.u32 %v192, %v195
    %v197 = vrot.slane %v196, 4
    %v199 = vshll.u32 %v43, 16
    %v201 = vrot.slane %v199, 5
    %v202 = vsel %vm92, %v197, %v201
    %v203 = vshrl.u32 %v43, 16
    %v205 = vrot.slane %v203, 4
    %v206 = vor.u32 %v205, %v201
    %v207 = vrot.slane %v206, 4
    %v209 = vshll.u32 %v74, 16
    %v211 = vrot.slane %v209, 5
    %v212 = vsel %vm92, %v207, %v211
    %v214 = vshrl.u32 %v44, 16
    %v216 = vrot.slane %v214, 4
    %v217 = vshll.u32 %v44, 16
    %v219 = vrot.slane %v217, 5
    %v220 = vor.u32 %v216, %v219
    %v221 = vrot.slane %v220, 4
    %v223 = vshll.u32 %v45, 16
    %v225 = vrot.slane %v223, 5
    %v226 = vsel %vm92, %v221, %v225
    %v227 = vshrl.u32 %v45, 16
    %v229 = vrot.slane %v227, 4
    %v230 = vor.u32 %v229, %v225
    %v231 = vrot.slane %v230, 4
    %v233 = vshll.u32 %v75, 16
    %v235 = vrot.slane %v233, 5
    %v236 = vsel %vm92, %v231, %v235
    %v238 = vshrl.u32 %v46, 16
    %v240 = vrot.slane %v238, 4
    %v241 = vshll.u32 %v46, 16
    %v243 = vrot.slane %v241, 5
    %v244 = vor.u32 %v240, %v243
    %v245 = vrot.slane %v244, 4
    %v247 = vshll.u32 %v47, 16
    %v249 = vrot.slane %v247, 5
    %v250 = vsel %vm92, %v245, %v249
    %v251 = vshrl.u32 %v47, 16
    %v253 = vrot.slane %v251, 4
    %v254 = vor.u32 %v253, %v249
    %v255 = vrot.slane %v254, 4
    %v257 = vshll.u32 %v76, 16
    %v259 = vrot.slane %v257, 5
    %v260 = vsel %vm92, %v255, %v259
    %v262 = vshrl.u32 %v48, 16
    %v264 = vrot.slane %v262, 4
    %v265 = vshll.u32 %v48, 16
    %v267 = vrot.slane %v265, 5
    %v268 = vor.u32 %v264, %v267
    %v269 = vrot.slane %v268, 4
    %v271 = vshll.u32 %v49, 16
    %v273 = vrot.slane %v271, 5
    %v274 = vsel %vm92, %v269, %v273
    %v275 = vshrl.u32 %v49, 16
    %v277 = vrot.slane %v275, 4
    %v278 = vor.u32 %v277, %v273
    %v279 = vrot.slane %v278, 4
    %v281 = vshll.u32 %v77, 16
    %v283 = vrot.slane %v281, 5
    %v284 = vsel %vm92, %v279, %v283
    %v286 = vshrl.u32 %v50, 16
    %v288 = vrot.slane %v286, 4
    %v289 = vshll.u32 %v50, 16
    %v291 = vrot.slane %v289, 5
    %v292 = vor.u32 %v288, %v291
    %v293 = vrot.slane %v292, 4
    %v295 = vshll.u32 %v51, 16
    %v297 = vrot.slane %v295, 5
    %v298 = vsel %vm92, %v293, %v297
    %v299 = vshrl.u32 %v51, 16
    %v301 = vrot.slane %v299, 4
    %v302 = vor.u32 %v301, %v297
    %v303 = vrot.slane %v302, 4
    %v305 = vshll.u32 %v78, 16
    %v307 = vrot.slane %v305, 5
    %v308 = vsel %vm92, %v303, %v307
    %v310 = vshrl.u32 %v52, 16
    %v312 = vrot.slane %v310, 4
    %v313 = vshll.u32 %v52, 16
    %v315 = vrot.slane %v313, 5
    %v316 = vor.u32 %v312, %v315
    %v317 = vrot.slane %v316, 4
    %v319 = vshll.u32 %v53, 16
    %v321 = vrot.slane %v319, 5
    %v322 = vsel %vm92, %v317, %v321
    %v323 = vshrl.u32 %v53, 16
    %v325 = vrot.slane %v323, 4
    %v326 = vor.u32 %v325, %v321
    %v327 = vrot.slane %v326, 4
    %v329 = vshll.u32 %v79, 16
    %v331 = vrot.slane %v329, 5
    %v332 = vsel %vm92, %v327, %v331
    %v334 = vshrl.u32 %v54, 16
    %v336 = vrot.slane %v334, 4
    %v337 = vshll.u32 %v54, 16
    %v339 = vrot.slane %v337, 5
    %v340 = vor.u32 %v336, %v339
    %v341 = vrot.slane %v340, 4
    %v343 = vshll.u32 %v55, 16
    %v345 = vrot.slane %v343, 5
    %v346 = vsel %vm92, %v341, %v345
    %v347 = vshrl.u32 %v55, 16
    %v349 = vrot.slane %v347, 4
    %v350 = vor.u32 %v349, %v345
    %v351 = vrot.slane %v350, 4
    %v353 = vshll.u32 %v80, 16
    %v355 = vrot.slane %v353, 5
    %v356 = vsel %vm92, %v351, %v355
    %v358 = vshrl.u32 %v56, 16
    %v360 = vrot.slane %v358, 4
    %v361 = vshll.u32 %v56, 16
    %v363 = vrot.slane %v361, 5
    %v364 = vor.u32 %v360, %v363
    %v365 = vrot.slane %v364, 4
    %v367 = vshll.u32 %v57, 16
    %v369 = vrot.slane %v367, 5
    %v370 = vsel %vm92, %v365, %v369
    %v371 = vshrl.u32 %v57, 16
    %v373 = vrot.slane %v371, 4
    %v374 = vor.u32 %v373, %v369
    %v375 = vrot.slane %v374, 4
    %v377 = vshll.u32 %v81, 16
    %v379 = vrot.slane %v377, 5
    %v380 = vsel %vm92, %v375, %v379
    %v382 = vshrl.u32 %v58, 16
    %v384 = vrot.slane %v382, 4
    %v385 = vshll.u32 %v58, 16
    %v387 = vrot.slane %v385, 5
    %v388 = vor.u32 %v384, %v387
    %v389 = vrot.slane %v388, 4
    %v391 = vshll.u32 %v59, 16
    %v393 = vrot.slane %v391, 5
    %v394 = vsel %vm92, %v389, %v393
    %v395 = vshrl.u32 %v59, 16
    %v397 = vrot.slane %v395, 4
    %v398 = vor.u32 %v397, %v393
    %v399 = vrot.slane %v398, 4
    %v401 = vshll.u32 %v82, 16
    %v403 = vrot.slane %v401, 5
    %v404 = vsel %vm92, %v399, %v403
    %v406 = vshrl.u32 %v60, 16
    %v408 = vrot.slane %v406, 4
    %v409 = vshll.u32 %v60, 16
    %v411 = vrot.slane %v409, 5
    %v412 = vor.u32 %v408, %v411
    %v413 = vrot.slane %v412, 4
    %v415 = vshll.u32 %v61, 16
    %v417 = vrot.slane %v415, 5
    %v418 = vsel %vm92, %v413, %v417
    %v419 = vshrl.u32 %v61, 16
    %v421 = vrot.slane %v419, 4
    %v422 = vor.u32 %v421, %v417
    %v423 = vrot.slane %v422, 4
    %v425 = vshll.u32 %v83, 16
    %v427 = vrot.slane %v425, 5
    %v428 = vsel %vm92, %v423, %v427
    %v430 = vshrl.u32 %v62, 16
    %v432 = vrot.slane %v430, 4
    %v433 = vshll.u32 %v62, 16
    %v435 = vrot.slane %v433, 5
    %v436 = vor.u32 %v432, %v435
    %v437 = vrot.slane %v436, 4
    %v439 = vshll.u32 %v63, 16
    %v441 = vrot.slane %v439, 5
    %v442 = vsel %vm92, %v437, %v441
    %v443 = vshrl.u32 %v63, 16
    %v445 = vrot.slane %v443, 4
    %v446 = vor.u32 %v445, %v441
    %v447 = vrot.slane %v446, 4
    %v449 = vshll.u32 %v84, 16
    %v451 = vrot.slane %v449, 5
    %v452 = vsel %vm92, %v447, %v451
    %v454 = vshrl.u32 %v64, 16
    %v456 = vrot.slane %v454, 4
    %v457 = vshll.u32 %v64, 16
    %v459 = vrot.slane %v457, 5
    %v460 = vor.u32 %v456, %v459
    %v461 = vrot.slane %v460, 4
    %v463 = vshll.u32 %v65, 16
    %v465 = vrot.slane %v463, 5
    %v466 = vsel %vm92, %v461, %v465
    %v467 = vshrl.u32 %v65, 16
    %v469 = vrot.slane %v467, 4
    %v470 = vor.u32 %v469, %v465
    %v471 = vrot.slane %v470, 4
    %v473 = vshll.u32 %v85, 16
    %v475 = vrot.slane %v473, 5
    %v476 = vsel %vm92, %v471, %v475
    %v477 = vunpack.c.l.b16 %v106
    %v478 = vunpack.c.l.b16 %v116
    %v479 = vunpack.c.l.b16 %v130
    %v480 = vunpack.c.l.b16 %v140
    %v481 = vunpack.c.l.b16 %v154
    %v482 = vunpack.c.l.b16 %v164
    %v483 = vunpack.c.l.b16 %v178
    %v484 = vunpack.c.l.b16 %v188
    %v485 = vunpack.c.l.b16 %v202
    %v486 = vunpack.c.l.b16 %v212
    %v487 = vunpack.c.l.b16 %v226
    %v488 = vunpack.c.l.b16 %v236
    %v489 = vunpack.c.l.b16 %v250
    %v490 = vunpack.c.l.b16 %v260
    %v491 = vunpack.c.l.b16 %v274
    %v492 = vunpack.c.l.b16 %v284
    %v493 = vunpack.c.l.b16 %v298
    %v494 = vunpack.c.l.b16 %v308
    %v495 = vunpack.c.l.b16 %v322
    %v496 = vunpack.c.l.b16 %v332
    %v497 = vunpack.c.l.b16 %v346
    %v498 = vunpack.c.l.b16 %v356
    %v499 = vunpack.c.l.b16 %v370
    %v500 = vunpack.c.l.b16 %v380
    %v501 = vunpack.c.l.b16 %v394
    %v502 = vunpack.c.l.b16 %v404
    %v503 = vunpack.c.l.b16 %v418
    %v504 = vunpack.c.l.b16 %v428
    %v505 = vunpack.c.l.b16 %v442
    %v506 = vunpack.c.l.b16 %v452
    %v507 = vunpack.c.l.b16 %v466
    %v508 = vunpack.c.l.b16 %v476
    %v509 = vpack.c.b16 %v478, %v477
    %v510 = vpack.c.b16 %v480, %v479
    %v511 = vpack.c.b16 %v482, %v481
    %v512 = vpack.c.b16 %v484, %v483
    %v513 = vpack.c.b16 %v486, %v485
    %v514 = vpack.c.b16 %v488, %v487
    %v515 = vpack.c.b16 %v490, %v489
    %v516 = vpack.c.b16 %v492, %v491
    %v517 = vpack.c.b16 %v494, %v493
    %v518 = vpack.c.b16 %v496, %v495
    %v519 = vpack.c.b16 %v498, %v497
    %v520 = vpack.c.b16 %v500, %v499
    %v521 = vpack.c.b16 %v502, %v501
    %v522 = vpack.c.b16 %v504, %v503
    %v523 = vpack.c.b16 %v506, %v505
    %v524 = vpack.c.b16 %v508, %v507
    %v529 = vunpack.c.l.b16 %v86
    %v530 = vunpack.c.l.b16 %v87
    %v531 = vunpack.c.l.b16 %v88
    %v532 = vunpack.c.l.b16 %v89
    %v533 = vpack.c.b16 %v530, %v529
    %v534 = vpack.c.b16 %v532, %v531
    %vm537 = vcmask 261120
    %v539 = vsel %vm537, %v509, 0
    %v542 = vsel %vm537, %v510, 0
    %v545 = vsel %vm537, %v511, 0
    %v548 = vsel %vm537, %v512, 0
    %v551 = vsel %vm537, %v513, 0
    %v554 = vsel %vm537, %v514, 0
    %v557 = vsel %vm537, %v515, 0
    %v560 = vsel %vm537, %v516, 0
    %v563 = vsel %vm537, %v517, 0
    %v566 = vsel %vm537, %v518, 0
    %v569 = vsel %vm537, %v519, 0
    %v572 = vsel %vm537, %v520, 0
    %v575 = vsel %vm537, %v521, 0
    %v578 = vsel %vm537, %v522, 0
    %v581 = vsel %vm537, %v523, 0
    %v584 = vsel %vm537, %v524, 0
    %586 = vmatprep.subr.bf16.mxu0 0
    %587 = vmatpush1.bf16.msra.mxu0 %v533
    %588 = vmatprep.subr.bf16.mxu0 0
    %589 = vmatpush1.bf16.msra.mxu0 %v534
    %590 = vmatprep.subr.bf16.mxu0 0
    %591 = vmatpush1.bf16.msra.mxu0 0
    %592 = vmatprep.subr.bf16.mxu0 0
    %593 = vmatpush1.bf16.msra.mxu0 0
    %594 = vmatprep.subr.bf16.mxu0 0
    %595 = vmatpush1.bf16.msra.mxu0 0
    %596 = vmatprep.subr.bf16.mxu0 0
    %597 = vmatpush1.bf16.msra.mxu0 0
    %598 = vmatprep.subr.bf16.mxu0 0
    %599 = vmatpush1.bf16.msra.mxu0 0
    %600 = vmatprep.subr.bf16.mxu0 0
    %601 = vmatpush1.bf16.msra.mxu0 0
    %602 = vmatprep.subr.bf16.mxu0 0
    %603 = vmatpush1.bf16.msra.mxu0 0
    %604 = vmatprep.subr.bf16.mxu0 0
    %605 = vmatpush1.bf16.msra.mxu0 0
    %606 = vmatprep.subr.bf16.mxu0 0
    %607 = vmatpush1.bf16.msra.mxu0 0
    %608 = vmatprep.subr.bf16.mxu0 0
    %609 = vmatpush1.bf16.msra.mxu0 0
    %610 = vmatprep.subr.bf16.mxu0 0
    %611 = vmatpush1.bf16.msra.mxu0 0
    %612 = vmatprep.subr.bf16.mxu0 0
    %613 = vmatpush1.bf16.msra.mxu0 0
    %614 = vmatprep.subr.bf16.mxu0 0
    %615 = vmatpush1.bf16.msra.mxu0 0
    %616 = vmatprep.subr.bf16.mxu0 0
    %617 = vmatpush1.bf16.msra.mxu0 0
    %618 = vmatprep.mubr.bf16.mxu0 0
    %619 = vmatmul.mubr.bf16.gmra.mrb[0].mxu0 %v539
    %v620 = vpop.f32.mrb[0].mxu0
    %v621 = vadd.f32 0.0, %v620
    %v622 = vpop.f32.mrb[0].mxu0
    %v623 = vpop.f32.mrb[0].mxu0
    %v624 = vadd.f32 0.0, %v623
    %v625 = vpop.f32.mrb[0].mxu0
    %626 = vmatprep.mubr.bf16.mxu0 0
    %627 = vmatmul.mubr.bf16.gmra.mrb[0].mxu0 %v542
    %v628 = vpop.f32.mrb[0].mxu0
    %v629 = vadd.f32 0.0, %v628
    %v630 = vpop.f32.mrb[0].mxu0
    %v631 = vpop.f32.mrb[0].mxu0
    %v632 = vadd.f32 0.0, %v631
    %v633 = vpop.f32.mrb[0].mxu0
    %634 = vmatprep.mubr.bf16.mxu0 0
    %635 = vmatmul.mubr.bf16.gmra.mrb[0].mxu0 %v545
    %v636 = vpop.f32.mrb[0].mxu0
    %v637 = vadd.f32 0.0, %v636
    %v638 = vpop.f32.mrb[0].mxu0
    %v639 = vpop.f32.mrb[0].mxu0
    %v640 = vadd.f32 0.0, %v639
    %v641 = vpop.f32.mrb[0].mxu0
    %642 = vmatprep.mubr.bf16.mxu0 0
    %643 = vmatmul.mubr.bf16.gmra.mrb[0].mxu0 %v548
    %v644 = vpop.f32.mrb[0].mxu0
    %v645 = vadd.f32 0.0, %v644
    %v646 = vpop.f32.mrb[0].mxu0
    %v647 = vpop.f32.mrb[0].mxu0
    %v648 = vadd.f32 0.0, %v647
    %v649 = vpop.f32.mrb[0].mxu0
    %650 = vmatprep.mubr.bf16.mxu0 0
    %651 = vmatmul.mubr.bf16.gmra.mrb[0].mxu0 %v551
    %v652 = vpop.f32.mrb[0].mxu0
    %v653 = vadd.f32 0.0, %v652
    %v654 = vpop.f32.mrb[0].mxu0
    %v655 = vpop.f32.mrb[0].mxu0
    %v656 = vadd.f32 0.0, %v655
    %v657 = vpop.f32.mrb[0].mxu0
    %658 = vmatprep.mubr.bf16.mxu0 0
    %659 = vmatmul.mubr.bf16.gmra.mrb[0].mxu0 %v554
    %v660 = vpop.f32.mrb[0].mxu0
    %v661 = vadd.f32 0.0, %v660
    %v662 = vpop.f32.mrb[0].mxu0
    %v663 = vpop.f32.mrb[0].mxu0
    %v664 = vadd.f32 0.0, %v663
    %v665 = vpop.f32.mrb[0].mxu0
    %666 = vmatprep.mubr.bf16.mxu0 0
    %667 = vmatmul.mubr.bf16.gmra.mrb[0].mxu0 %v557
    %v668 = vpop.f32.mrb[0].mxu0
    %v669 = vadd.f32 0.0, %v668
    %v670 = vpop.f32.mrb[0].mxu0
    %v671 = vpop.f32.mrb[0].mxu0
    %v672 = vadd.f32 0.0, %v671
    %v673 = vpop.f32.mrb[0].mxu0
    %674 = vmatprep.mubr.bf16.mxu0 0
    %675 = vmatmul.mubr.bf16.gmra.mrb[0].mxu0 %v560
    %v676 = vpop.f32.mrb[0].mxu0
    %v677 = vadd.f32 0.0, %v676
    %v678 = vpop.f32.mrb[0].mxu0
    %v679 = vpop.f32.mrb[0].mxu0
    %v680 = vadd.f32 0.0, %v679
    %v681 = vpop.f32.mrb[0].mxu0
    %682 = vmatprep.mubr.bf16.mxu0 0
    %683 = vmatmul.mubr.bf16.gmra.mrb[0].mxu0 %v563
    %v684 = vpop.f32.mrb[0].mxu0
    %v685 = vadd.f32 0.0, %v684
    %v686 = vpop.f32.mrb[0].mxu0
    %v687 = vpop.f32.mrb[0].mxu0
    %v688 = vadd.f32 0.0, %v687
    %v689 = vpop.f32.mrb[0].mxu0
    %690 = vmatprep.mubr.bf16.mxu0 0
    %691 = vmatmul.mubr.bf16.gmra.mrb[0].mxu0 %v566
    %v692 = vpop.f32.mrb[0].mxu0
    %v693 = vadd.f32 0.0, %v692
    %v694 = vpop.f32.mrb[0].mxu0
    %v695 = vpop.f32.mrb[0].mxu0
    %v696 = vadd.f32 0.0, %v695
    %v697 = vpop.f32.mrb[0].mxu0
    %698 = vmatprep.mubr.bf16.mxu0 0
    %699 = vmatmul.mubr.bf16.gmra.mrb[0].mxu0 %v569
    %v700 = vpop.f32.mrb[0].mxu0
    %v701 = vadd.f32 0.0, %v700
    %v702 = vpop.f32.mrb[0].mxu0
    %v703 = vpop.f32.mrb[0].mxu0
    %v704 = vadd.f32 0.0, %v703
    %v705 = vpop.f32.mrb[0].mxu0
    %706 = vmatprep.mubr.bf16.mxu0 0
    %707 = vmatmul.mubr.bf16.gmra.mrb[0].mxu0 %v572
    %v708 = vpop.f32.mrb[0].mxu0
    %v709 = vadd.f32 0.0, %v708
    %v710 = vpop.f32.mrb[0].mxu0
    %v711 = vpop.f32.mrb[0].mxu0
    %v712 = vadd.f32 0.0, %v711
    %v713 = vpop.f32.mrb[0].mxu0
    %714 = vmatprep.mubr.bf16.mxu0 0
    %715 = vmatmul.mubr.bf16.gmra.mrb[0].mxu0 %v575
    %v716 = vpop.f32.mrb[0].mxu0
    %v717 = vadd.f32 0.0, %v716
    %v718 = vpop.f32.mrb[0].mxu0
    %v719 = vpop.f32.mrb[0].mxu0
    %v720 = vadd.f32 0.0, %v719
    %v721 = vpop.f32.mrb[0].mxu0
    %722 = vmatprep.mubr.bf16.mxu0 0
    %723 = vmatmul.mubr.bf16.gmra.mrb[0].mxu0 %v578
    %v724 = vpop.f32.mrb[0].mxu0
    %v725 = vadd.f32 0.0, %v724
    %v726 = vpop.f32.mrb[0].mxu0
    %v727 = vpop.f32.mrb[0].mxu0
    %v728 = vadd.f32 0.0, %v727
    %v729 = vpop.f32.mrb[0].mxu0
    %730 = vmatprep.mubr.bf16.mxu0 0
    %731 = vmatmul.mubr.bf16.gmra.mrb[0].mxu0 %v581
    %v732 = vpop.f32.mrb[0].mxu0
    %v733 = vadd.f32 0.0, %v732
    %v734 = vpop.f32.mrb[0].mxu0
    %v735 = vpop.f32.mrb[0].mxu0
    %v736 = vadd.f32 0.0, %v735
    %v737 = vpop.f32.mrb[0].mxu0
    %738 = vmatprep.mubr.bf16.mxu0 0
    %739 = vmatmul.mubr.bf16.gmra.mrb[0].mxu0 %v584
    %v740 = vpop.f32.mrb[0].mxu0
    %v741 = vadd.f32 0.0, %v740
    %v742 = vpop.f32.mrb[0].mxu0
    %v743 = vpop.f32.mrb[0].mxu0
    %v744 = vadd.f32 0.0, %v743
    %v745 = vpop.f32.mrb[0].mxu0
    %746 = vdwg.mxu0
    %v779 = vunpack.c.l.b16 %v34
    %v780 = vunpack.c.l.b16 %v35
    %v781 = vunpack.c.l.b16 %v36
    %v782 = vunpack.c.l.b16 %v37
    %v783 = vunpack.c.l.b16 %v38
    %v784 = vunpack.c.l.b16 %v39
    %v785 = vunpack.c.l.b16 %v40
    %v786 = vunpack.c.l.b16 %v41
    %v787 = vunpack.c.l.b16 %v42
    %v788 = vunpack.c.l.b16 %v43
    %v789 = vunpack.c.l.b16 %v44
    %v790 = vunpack.c.l.b16 %v45
    %v791 = vunpack.c.l.b16 %v46
    %v792 = vunpack.c.l.b16 %v47
    %v793 = vunpack.c.l.b16 %v48
    %v794 = vunpack.c.l.b16 %v49
    %v795 = vunpack.c.l.b16 %v50
    %v796 = vunpack.c.l.b16 %v51
    %v797 = vunpack.c.l.b16 %v52
    %v798 = vunpack.c.l.b16 %v53
    %v799 = vunpack.c.l.b16 %v54
    %v800 = vunpack.c.l.b16 %v55
    %v801 = vunpack.c.l.b16 %v56
    %v802 = vunpack.c.l.b16 %v57
    %v803 = vunpack.c.l.b16 %v58
    %v804 = vunpack.c.l.b16 %v59
    %v805 = vunpack.c.l.b16 %v60
    %v806 = vunpack.c.l.b16 %v61
    %v807 = vunpack.c.l.b16 %v62
    %v808 = vunpack.c.l.b16 %v63
    %v809 = vunpack.c.l.b16 %v64
    %v810 = vunpack.c.l.b16 %v65
    %v811 = vpack.c.b16 %v780, %v779
    %v812 = vpack.c.b16 %v782, %v781
    %v813 = vpack.c.b16 %v784, %v783
    %v814 = vpack.c.b16 %v786, %v785
    %v815 = vpack.c.b16 %v788, %v787
    %v816 = vpack.c.b16 %v790, %v789
    %v817 = vpack.c.b16 %v792, %v791
    %v818 = vpack.c.b16 %v794, %v793
    %v819 = vpack.c.b16 %v796, %v795
    %v820 = vpack.c.b16 %v798, %v797
    %v821 = vpack.c.b16 %v800, %v799
    %v822 = vpack.c.b16 %v802, %v801
    %v823 = vpack.c.b16 %v804, %v803
    %v824 = vpack.c.b16 %v806, %v805
    %v825 = vpack.c.b16 %v808, %v807
    %v826 = vpack.c.b16 %v810, %v809
    %v831 = vunpack.c.l.b16 %v66
    %v832 = vunpack.c.l.b16 %v67
    %v833 = vunpack.c.l.b16 %v68
    %v834 = vunpack.c.l.b16 %v69
    %v835 = vpack.c.b16 %v832, %v831
    %v836 = vpack.c.b16 %v834, %v833
    %v840 = vsel %vm537, %v811, 0
    %v843 = vsel %vm537, %v812, 0
    %v846 = vsel %vm537, %v813, 0
    %v849 = vsel %vm537, %v814, 0
    %v852 = vsel %vm537, %v815, 0
    %v855 = vsel %vm537, %v816, 0
    %v858 = vsel %vm537, %v817, 0
    %v861 = vsel %vm537, %v818, 0
    %v864 = vsel %vm537, %v819, 0
    %v867 = vsel %vm537, %v820, 0
    %v870 = vsel %vm537, %v821, 0
    %v873 = vsel %vm537, %v822, 0
    %v876 = vsel %vm537, %v823, 0
    %v879 = vsel %vm537, %v824, 0
    %v882 = vsel %vm537, %v825, 0
    %v885 = vsel %vm537, %v826, 0
    %887 = vmatprep.subr.bf16.mxu0 0
    %888 = vmatpush1.bf16.msra.mxu0 %v835
    %889 = vmatprep.subr.bf16.mxu0 0
    %890 = vmatpush1.bf16.msra.mxu0 %v836
    %891 = vmatprep.subr.bf16.mxu0 0
    %892 = vmatpush1.bf16.msra.mxu0 0
    %893 = vmatprep.subr.bf16.mxu0 0
    %894 = vmatpush1.bf16.msra.mxu0 0
    %895 = vmatprep.subr.bf16.mxu0 0
    %896 = vmatpush1.bf16.msra.mxu0 0
    %897 = vmatprep.subr.bf16.mxu0 0
    %898 = vmatpush1.bf16.msra.mxu0 0
    %899 = vmatprep.subr.bf16.mxu0 0
    %900 = vmatpush1.bf16.msra.mxu0 0
    %901 = vmatprep.subr.bf16.mxu0 0
    %902 = vmatpush1.bf16.msra.mxu0 0
    %903 = vmatprep.subr.bf16.mxu0 0
    %904 = vmatpush1.bf16.msra.mxu0 0
    %905 = vmatprep.subr.bf16.mxu0 0
    %906 = vmatpush1.bf16.msra.mxu0 0
    %907 = vmatprep.subr.bf16.mxu0 0
    %908 = vmatpush1.bf16.msra.mxu0 0
    %909 = vmatprep.subr.bf16.mxu0 0
    %910 = vmatpush1.bf16.msra.mxu0 0
    %911 = vmatprep.subr.bf16.mxu0 0
    %912 = vmatpush1.bf16.msra.mxu0 0
    %913 = vmatprep.subr.bf16.mxu0 0
    %914 = vmatpush1.bf16.msra.mxu0 0
    %915 = vmatprep.subr.bf16.mxu0 0
    %916 = vmatpush1.bf16.msra.mxu0 0
    %917 = vmatprep.subr.bf16.mxu0 0
    %918 = vmatpush1.bf16.msra.mxu0 0
    %919 = vmatprep.mubr.bf16.mxu0 0
    %920 = vmatmul.mubr.bf16.gmra.mrb[0].mxu0 %v840
    %v921 = vpop.f32.mrb[0].mxu0
    %v922 = vadd.f32 %v621, %v921
    %v923 = vpop.f32.mrb[0].mxu0
    %v924 = vpop.f32.mrb[0].mxu0
    %v925 = vadd.f32 %v624, %v924
    %v926 = vpop.f32.mrb[0].mxu0
    %927 = vmatprep.mubr.bf16.mxu0 0
    %928 = vmatmul.mubr.bf16.gmra.mrb[0].mxu0 %v843
    %v929 = vpop.f32.mrb[0].mxu0
    %v930 = vadd.f32 %v629, %v929
    %v931 = vpop.f32.mrb[0].mxu0
    %v932 = vpop.f32.mrb[0].mxu0
    %v933 = vadd.f32 %v632, %v932
    %v934 = vpop.f32.mrb[0].mxu0
    %935 = vmatprep.mubr.bf16.mxu0 0
    %936 = vmatmul.mubr.bf16.gmra.mrb[0].mxu0 %v846
    %v937 = vpop.f32.mrb[0].mxu0
    %v938 = vadd.f32 %v637, %v937
    %v939 = vpop.f32.mrb[0].mxu0
    %v940 = vpop.f32.mrb[0].mxu0
    %v941 = vadd.f32 %v640, %v940
    %v942 = vpop.f32.mrb[0].mxu0
    %943 = vmatprep.mubr.bf16.mxu0 0
    %944 = vmatmul.mubr.bf16.gmra.mrb[0].mxu0 %v849
    %v945 = vpop.f32.mrb[0].mxu0
    %v946 = vadd.f32 %v645, %v945
    %v947 = vpop.f32.mrb[0].mxu0
    %v948 = vpop.f32.mrb[0].mxu0
    %v949 = vadd.f32 %v648, %v948
    %v950 = vpop.f32.mrb[0].mxu0
    %951 = vmatprep.mubr.bf16.mxu0 0
    %952 = vmatmul.mubr.bf16.gmra.mrb[0].mxu0 %v852
    %v953 = vpop.f32.mrb[0].mxu0
    %v954 = vadd.f32 %v653, %v953
    %v955 = vpop.f32.mrb[0].mxu0
    %v956 = vpop.f32.mrb[0].mxu0
    %v957 = vadd.f32 %v656, %v956
    %v958 = vpop.f32.mrb[0].mxu0
    %959 = vmatprep.mubr.bf16.mxu0 0
    %960 = vmatmul.mubr.bf16.gmra.mrb[0].mxu0 %v855
    %v961 = vpop.f32.mrb[0].mxu0
    %v962 = vadd.f32 %v661, %v961
    %v963 = vpop.f32.mrb[0].mxu0
    %v964 = vpop.f32.mrb[0].mxu0
    %v965 = vadd.f32 %v664, %v964
    %v966 = vpop.f32.mrb[0].mxu0
    %967 = vmatprep.mubr.bf16.mxu0 0
    %968 = vmatmul.mubr.bf16.gmra.mrb[0].mxu0 %v858
    %v969 = vpop.f32.mrb[0].mxu0
    %v970 = vadd.f32 %v669, %v969
    %v971 = vpop.f32.mrb[0].mxu0
    %v972 = vpop.f32.mrb[0].mxu0
    %v973 = vadd.f32 %v672, %v972
    %v974 = vpop.f32.mrb[0].mxu0
    %975 = vmatprep.mubr.bf16.mxu0 0
    %976 = vmatmul.mubr.bf16.gmra.mrb[0].mxu0 %v861
    %v977 = vpop.f32.mrb[0].mxu0
    %v978 = vadd.f32 %v677, %v977
    %v979 = vpop.f32.mrb[0].mxu0
    %v980 = vpop.f32.mrb[0].mxu0
    %v981 = vadd.f32 %v680, %v980
    %v982 = vpop.f32.mrb[0].mxu0
    %983 = vmatprep.mubr.bf16.mxu0 0
    %984 = vmatmul.mubr.bf16.gmra.mrb[0].mxu0 %v864
    %v985 = vpop.f32.mrb[0].mxu0
    %v986 = vadd.f32 %v685, %v985
    %v987 = vpop.f32.mrb[0].mxu0
    %v988 = vpop.f32.mrb[0].mxu0
    %v989 = vadd.f32 %v688, %v988
    %v990 = vpop.f32.mrb[0].mxu0
    %991 = vmatprep.mubr.bf16.mxu0 0
    %992 = vmatmul.mubr.bf16.gmra.mrb[0].mxu0 %v867
    %v993 = vpop.f32.mrb[0].mxu0
    %v994 = vadd.f32 %v693, %v993
    %v995 = vpop.f32.mrb[0].mxu0
    %v996 = vpop.f32.mrb[0].mxu0
    %v997 = vadd.f32 %v696, %v996
    %v998 = vpop.f32.mrb[0].mxu0
    %999 = vmatprep.mubr.bf16.mxu0 0
    %1000 = vmatmul.mubr.bf16.gmra.mrb[0].mxu0 %v870
    %v1001 = vpop.f32.mrb[0].mxu0
    %v1002 = vadd.f32 %v701, %v1001
    %v1003 = vpop.f32.mrb[0].mxu0
    %v1004 = vpop.f32.mrb[0].mxu0
    %v1005 = vadd.f32 %v704, %v1004
    %v1006 = vpop.f32.mrb[0].mxu0
    %1007 = vmatprep.mubr.bf16.mxu0 0
    %1008 = vmatmul.mubr.bf16.gmra.mrb[0].mxu0 %v873
    %v1009 = vpop.f32.mrb[0].mxu0
    %v1010 = vadd.f32 %v709, %v1009
    %v1011 = vpop.f32.mrb[0].mxu0
    %v1012 = vpop.f32.mrb[0].mxu0
    %v1013 = vadd.f32 %v712, %v1012
    %v1014 = vpop.f32.mrb[0].mxu0
    %1015 = vmatprep.mubr.bf16.mxu0 0
    %1016 = vmatmul.mubr.bf16.gmra.mrb[0].mxu0 %v876
    %v1017 = vpop.f32.mrb[0].mxu0
    %v1018 = vadd.f32 %v717, %v1017
    %v1019 = vpop.f32.mrb[0].mxu0
    %v1020 = vpop.f32.mrb[0].mxu0
    %v1021 = vadd.f32 %v720, %v1020
    %v1022 = vpop.f32.mrb[0].mxu0
    %1023 = vmatprep.mubr.bf16.mxu0 0
    %1024 = vmatmul.mubr.bf16.gmra.mrb[0].mxu0 %v879
    %v1025 = vpop.f32.mrb[0].mxu0
    %v1026 = vadd.f32 %v725, %v1025
    %v1027 = vpop.f32.mrb[0].mxu0
    %v1028 = vpop.f32.mrb[0].mxu0
    %v1029 = vadd.f32 %v728, %v1028
    %v1030 = vpop.f32.mrb[0].mxu0
    %1031 = vmatprep.mubr.bf16.mxu0 0
    %1032 = vmatmul.mubr.bf16.gmra.mrb[0].mxu0 %v882
    %v1033 = vpop.f32.mrb[0].mxu0
    %v1034 = vadd.f32 %v733, %v1033
    %v1035 = vpop.f32.mrb[0].mxu0
    %v1036 = vpop.f32.mrb[0].mxu0
    %v1037 = vadd.f32 %v736, %v1036
    %v1038 = vpop.f32.mrb[0].mxu0
    %1039 = vmatprep.mubr.bf16.mxu0 0
    %1040 = vmatmul.mubr.bf16.gmra.mrb[0].mxu0 %v885
    %v1041 = vpop.f32.mrb[0].mxu0
    %v1042 = vadd.f32 %v741, %v1041
    %v1043 = vpop.f32.mrb[0].mxu0
    %v1044 = vpop.f32.mrb[0].mxu0
    %v1045 = vadd.f32 %v744, %v1044
    %v1046 = vpop.f32.mrb[0].mxu0
    %1047 = vdwg.mxu0
    %v1048 = vld [vmem:[%s33] sm:$0xe]
    %v1049 = vld [vmem:[%s33 + $0xc] sm:$0xe]
    %v1050 = vld [vmem:[%s33 + $0x18] sm:$0xe]
    %v1051 = vld [vmem:[%s33 + $0x24] sm:$0xe]
    %v1052 = vld [vmem:[%s33 + $0x30] sm:$0xe]
    %v1053 = vld [vmem:[%s33 + $0x3c] sm:$0xe]
    %v1054 = vld [vmem:[%s33 + $0x48] sm:$0xe]
    %v1055 = vld [vmem:[%s33 + $0x54] sm:$0xe]
    %v1056 = vld [vmem:[%s33 + $0x60] sm:$0xe]
    %v1057 = vld [vmem:[%s33 + $0x6c] sm:$0xe]
    %v1058 = vld [vmem:[%s33 + $0x78] sm:$0xe]
    %v1059 = vld [vmem:[%s33 + $0x84] sm:$0xe]
    %v1060 = vld [vmem:[%s33 + $0x90] sm:$0xe]
    %v1061 = vld [vmem:[%s33 + $0x9c] sm:$0xe]
    %v1062 = vld [vmem:[%s33 + $0xa8] sm:$0xe]
    %v1063 = vld [vmem:[%s33 + $0xb4] sm:$0xe]
    %v1064 = vld [vmem:[%s1 + $0x20] sm:$0xf]
    %v1065 = vld [vmem:[%s1 + $0x24] sm:$0xf]
    %v1066 = vld [vmem:[%s1 + $0x28] sm:$0xf]
    %v1067 = vld [vmem:[%s1 + $0x2c] sm:$0xf]
    %vm1100 = vcmask 1042432
    %vm1101 = vcmask 1046532
    %vm1102 = vmor %vm1100, %vm1101
    %v1103 = vrot.slane %v1048, 5
    %v1104 = vrot.slane %v1103, 4
    %v1105 = vrot.slane %v35, 5
    %v1106 = vsel %vm1102, %v1104, %v1105
    %v1107 = vrot.slane %v1105, 4
    %v1108 = vrot.slane %v70, 5
    %v1109 = vsel %vm1102, %v1107, %v1108
    %v1110 = vrot.slane %v1049, 5
    %v1111 = vrot.slane %v1110, 4
    %v1112 = vrot.slane %v37, 5
    %v1113 = vsel %vm1102, %v1111, %v1112
    %v1114 = vrot.slane %v1112, 4
    %v1115 = vrot.slane %v71, 5
    %v1116 = vsel %vm1102, %v1114, %v1115
    %v1117 = vrot.slane %v1050, 5
    %v1118 = vrot.slane %v1117, 4
    %v1119 = vrot.slane %v39, 5
    %v1120 = vsel %vm1102, %v1118, %v1119
    %v1121 = vrot.slane %v1119, 4
    %v1122 = vrot.slane %v72, 5
    %v1123 = vsel %vm1102, %v1121, %v1122
    %v1124 = vrot.slane %v1051, 5
    %v1125 = vrot.slane %v1124, 4
    %v1126 = vrot.slane %v41, 5
    %v1127 = vsel %vm1102, %v1125, %v1126
    %v1128 = vrot.slane %v1126, 4
    %v1129 = vrot.slane %v73, 5
    %v1130 = vsel %vm1102, %v1128, %v1129
    %v1131 = vrot.slane %v1052, 5
    %v1132 = vrot.slane %v1131, 4
    %v1133 = vrot.slane %v43, 5
    %v1134 = vsel %vm1102, %v1132, %v1133
    %v1135 = vrot.slane %v1133, 4
    %v1136 = vrot.slane %v74, 5
    %v1137 = vsel %vm1102, %v1135, %v1136
    %v1138 = vrot.slane %v1053, 5
    %v1139 = vrot.slane %v1138, 4
    %v1140 = vrot.slane %v45, 5
    %v1141 = vsel %vm1102, %v1139, %v1140
    %v1142 = vrot.slane %v1140, 4
    %v1143 = vrot.slane %v75, 5
    %v1144 = vsel %vm1102, %v1142, %v1143
    %v1145 = vrot.slane %v1054, 5
    %v1146 = vrot.slane %v1145, 4
    %v1147 = vrot.slane %v47, 5
    %v1148 = vsel %vm1102, %v1146, %v1147
    %v1149 = vrot.slane %v1147, 4
    %v1150 = vrot.slane %v76, 5
    %v1151 = vsel %vm1102, %v1149, %v1150
    %v1152 = vrot.slane %v1055, 5
    %v1153 = vrot.slane %v1152, 4
    %v1154 = vrot.slane %v49, 5
    %v1155 = vsel %vm1102, %v1153, %v1154
    %v1156 = vrot.slane %v1154, 4
    %v1157 = vrot.slane %v77, 5
    %v1158 = vsel %vm1102, %v1156, %v1157
    %v1159 = vrot.slane %v1056, 5
    %v1160 = vrot.slane %v1159, 4
    %v1161 = vrot.slane %v51, 5
    %v1162 = vsel %vm1102, %v1160, %v1161
    %v1163 = vrot.slane %v1161, 4
    %v1164 = vrot.slane %v78, 5
    %v1165 = vsel %vm1102, %v1163, %v1164
    %v1166 = vrot.slane %v1057, 5
    %v1167 = vrot.slane %v1166, 4
    %v1168 = vrot.slane %v53, 5
    %v1169 = vsel %vm1102, %v1167, %v1168
    %v1170 = vrot.slane %v1168, 4
    %v1171 = vrot.slane %v79, 5
    %v1172 = vsel %vm1102, %v1170, %v1171
    %v1173 = vrot.slane %v1058, 5
    %v1174 = vrot.slane %v1173, 4
    %v1175 = vrot.slane %v55, 5
    %v1176 = vsel %vm1102, %v1174, %v1175
    %v1177 = vrot.slane %v1175, 4
    %v1178 = vrot.slane %v80, 5
    %v1179 = vsel %vm1102, %v1177, %v1178
    %v1180 = vrot.slane %v1059, 5
    %v1181 = vrot.slane %v1180, 4
    %v1182 = vrot.slane %v57, 5
    %v1183 = vsel %vm1102, %v1181, %v1182
    %v1184 = vrot.slane %v1182, 4
    %v1185 = vrot.slane %v81, 5
    %v1186 = vsel %vm1102, %v1184, %v1185
    %v1187 = vrot.slane %v1060, 5
    %v1188 = vrot.slane %v1187, 4
    %v1189 = vrot.slane %v59, 5
    %v1190 = vsel %vm1102, %v1188, %v1189
    %v1191 = vrot.slane %v1189, 4
    %v1192 = vrot.slane %v82, 5
    %v1193 = vsel %vm1102, %v1191, %v1192
    %v1194 = vrot.slane %v1061, 5
    %v1195 = vrot.slane %v1194, 4
    %v1196 = vrot.slane %v61, 5
    %v1197 = vsel %vm1102, %v1195, %v1196
    %v1198 = vrot.slane %v1196, 4
    %v1199 = vrot.slane %v83, 5
    %v1200 = vsel %vm1102, %v1198, %v1199
    %v1201 = vrot.slane %v1062, 5
    %v1202 = vrot.slane %v1201, 4
    %v1203 = vrot.slane %v63, 5
    %v1204 = vsel %vm1102, %v1202, %v1203
    %v1205 = vrot.slane %v1203, 4
    %v1206 = vrot.slane %v84, 5
    %v1207 = vsel %vm1102, %v1205, %v1206
    %v1208 = vrot.slane %v1063, 5
    %v1209 = vrot.slane %v1208, 4
    %v1210 = vrot.slane %v65, 5
    %v1211 = vsel %vm1102, %v1209, %v1210
    %v1212 = vrot.slane %v1210, 4
    %v1213 = vrot.slane %v85, 5
    %v1214 = vsel %vm1102, %v1212, %v1213
    %v1215 = vunpack.c.l.b16 %v1106
    %v1216 = vunpack.c.l.b16 %v1109
    %v1217 = vunpack.c.l.b16 %v1113
    %v1218 = vunpack.c.l.b16 %v1116
    %v1219 = vunpack.c.l.b16 %v1120
    %v1220 = vunpack.c.l.b16 %v1123
    %v1221 = vunpack.c.l.b16 %v1127
    %v1222 = vunpack.c.l.b16 %v1130
    %v1223 = vunpack.c.l.b16 %v1134
    %v1224 = vunpack.c.l.b16 %v1137
    %v1225 = vunpack.c.l.b16 %v1141
    %v1226 = vunpack.c.l.b16 %v1144
    %v1227 = vunpack.c.l.b16 %v1148
    %v1228 = vunpack.c.l.b16 %v1151
    %v1229 = vunpack.c.l.b16 %v1155
    %v1230 = vunpack.c.l.b16 %v1158
    %v1231 = vunpack.c.l.b16 %v1162
    %v1232 = vunpack.c.l.b16 %v1165
    %v1233 = vunpack.c.l.b16 %v1169
    %v1234 = vunpack.c.l.b16 %v1172
    %v1235 = vunpack.c.l.b16 %v1176
    %v1236 = vunpack.c.l.b16 %v1179
    %v1237 = vunpack.c.l.b16 %v1183
    %v1238 = vunpack.c.l.b16 %v1186
    %v1239 = vunpack.c.l.b16 %v1190
    %v1240 = vunpack.c.l.b16 %v1193
    %v1241 = vunpack.c.l.b16 %v1197
    %v1242 = vunpack.c.l.b16 %v1200
    %v1243 = vunpack.c.l.b16 %v1204
    %v1244 = vunpack.c.l.b16 %v1207
    %v1245 = vunpack.c.l.b16 %v1211
    %v1246 = vunpack.c.l.b16 %v1214
    %v1247 = vpack.c.b16 %v1216, %v1215
    %v1248 = vpack.c.b16 %v1218, %v1217
    %v1249 = vpack.c.b16 %v1220, %v1219
    %v1250 = vpack.c.b16 %v1222, %v1221
    %v1251 = vpack.c.b16 %v1224, %v1223
    %v1252 = vpack.c.b16 %v1226, %v1225
    %v1253 = vpack.c.b16 %v1228, %v1227
    %v1254 = vpack.c.b16 %v1230, %v1229
    %v1255 = vpack.c.b16 %v1232, %v1231
    %v1256 = vpack.c.b16 %v1234, %v1233
    %v1257 = vpack.c.b16 %v1236, %v1235
    %v1258 = vpack.c.b16 %v1238, %v1237
    %v1259 = vpack.c.b16 %v1240, %v1239
    %v1260 = vpack.c.b16 %v1242, %v1241
    %v1261 = vpack.c.b16 %v1244, %v1243
    %v1262 = vpack.c.b16 %v1246, %v1245
    %v1267 = vunpack.c.l.b16 %v1064
    %v1268 = vunpack.c.l.b16 %v1065
    %v1269 = vunpack.c.l.b16 %v1066
    %v1270 = vunpack.c.l.b16 %v1067
    %v1271 = vpack.c.b16 %v1268, %v1267
    %v1272 = vpack.c.b16 %v1270, %v1269
    %v1276 = vsel %vm537, %v1247, 0
    %v1279 = vsel %vm537, %v1248, 0
    %v1282 = vsel %vm537, %v1249, 0
    %v1285 = vsel %vm537, %v1250, 0
    %v1288 = vsel %vm537, %v1251, 0
    %v1291 = vsel %vm537, %v1252, 0
    %v1294 = vsel %vm537, %v1253, 0
    %v1297 = vsel %vm537, %v1254, 0
    %v1300 = vsel %vm537, %v1255, 0
    %v1303 = vsel %vm537, %v1256, 0
    %v1306 = vsel %vm537, %v1257, 0
    %v1309 = vsel %vm537, %v1258, 0
    %v1312 = vsel %vm537, %v1259, 0
    %v1315 = vsel %vm537, %v1260, 0
    %v1318 = vsel %vm537, %v1261, 0
    %v1321 = vsel %vm537, %v1262, 0
    %1323 = vmatprep.subr.bf16.mxu0 0
    %1324 = vmatpush1.bf16.msra.mxu0 %v1271
    %1325 = vmatprep.subr.bf16.mxu0 0
    %1326 = vmatpush1.bf16.msra.mxu0 %v1272
    %1327 = vmatprep.subr.bf16.mxu0 0
    %1328 = vmatpush1.bf16.msra.mxu0 0
    %1329 = vmatprep.subr.bf16.mxu0 0
    %1330 = vmatpush1.bf16.msra.mxu0 0
    %1331 = vmatprep.subr.bf16.mxu0 0
    %1332 = vmatpush1.bf16.msra.mxu0 0
    %1333 = vmatprep.subr.bf16.mxu0 0
    %1334 = vmatpush1.bf16.msra.mxu0 0
    %1335 = vmatprep.subr.bf16.mxu0 0
    %1336 = vmatpush1.bf16.msra.mxu0 0
    %1337 = vmatprep.subr.bf16.mxu0 0
    %1338 = vmatpush1.bf16.msra.mxu0 0
    %1339 = vmatprep.subr.bf16.mxu0 0
    %1340 = vmatpush1.bf16.msra.mxu0 0
    %1341 = vmatprep.subr.bf16.mxu0 0
    %1342 = vmatpush1.bf16.msra.mxu0 0
    %1343 = vmatprep.subr.bf16.mxu0 0
    %1344 = vmatpush1.bf16.msra.mxu0 0
    %1345 = vmatprep.subr.bf16.mxu0 0
    %1346 = vmatpush1.bf16.msra.mxu0 0
    %1347 = vmatprep.subr.bf16.mxu0 0
    %1348 = vmatpush1.bf16.msra.mxu0 0
    %1349 = vmatprep.subr.bf16.mxu0 0
    %1350 = vmatpush1.bf16.msra.mxu0 0
    %1351 = vmatprep.subr.bf16.mxu0 0
    %1352 = vmatpush1.bf16.msra.mxu0 0
    %1353 = vmatprep.subr.bf16.mxu0 0
    %1354 = vmatpush1.bf16.msra.mxu0 0
    %1355 = vmatprep.mubr.bf16.mxu0 0
    %1356 = vmatmul.mubr.bf16.gmra.mrb[0].mxu0 %v1276
    %v1357 = vpop.f32.mrb[0].mxu0
    %v1358 = vadd.f32 0.0, %v1357
    %v1359 = vpop.f32.mrb[0].mxu0
    %v1360 = vpop.f32.mrb[0].mxu0
    %v1361 = vadd.f32 0.0, %v1360
    %v1362 = vpop.f32.mrb[0].mxu0
    %1363 = vmatprep.mubr.bf16.mxu0 0
    %1364 = vmatmul.mubr.bf16.gmra.mrb[0].mxu0 %v1279
    %v1365 = vpop.f32.mrb[0].mxu0
    %v1366 = vadd.f32 0.0, %v1365
    %v1367 = vpop.f32.mrb[0].mxu0
    %v1368 = vpop.f32.mrb[0].mxu0
    %v1369 = vadd.f32 0.0, %v1368
    %v1370 = vpop.f32.mrb[0].mxu0
    %1371 = vmatprep.mubr.bf16.mxu0 0
    %1372 = vmatmul.mubr.bf16.gmra.mrb[0].mxu0 %v1282
    %v1373 = vpop.f32.mrb[0].mxu0
    %v1374 = vadd.f32 0.0, %v1373
    %v1375 = vpop.f32.mrb[0].mxu0
    %v1376 = vpop.f32.mrb[0].mxu0
    %v1377 = vadd.f32 0.0, %v1376
    %v1378 = vpop.f32.mrb[0].mxu0
    %1379 = vmatprep.mubr.bf16.mxu0 0
    %1380 = vmatmul.mubr.bf16.gmra.mrb[0].mxu0 %v1285
    %v1381 = vpop.f32.mrb[0].mxu0
    %v1382 = vadd.f32 0.0, %v1381
    %v1383 = vpop.f32.mrb[0].mxu0
    %v1384 = vpop.f32.mrb[0].mxu0
    %v1385 = vadd.f32 0.0, %v1384
    %v1386 = vpop.f32.mrb[0].mxu0
    %1387 = vmatprep.mubr.bf16.mxu0 0
    %1388 = vmatmul.mubr.bf16.gmra.mrb[0].mxu0 %v1288
    %v1389 = vpop.f32.mrb[0].mxu0
    %v1390 = vadd.f32 0.0, %v1389
    %v1391 = vpop.f32.mrb[0].mxu0
    %v1392 = vpop.f32.mrb[0].mxu0
    %v1393 = vadd.f32 0.0, %v1392
    %v1394 = vpop.f32.mrb[0].mxu0
    %1395 = vmatprep.mubr.bf16.mxu0 0
    %1396 = vmatmul.mubr.bf16.gmra.mrb[0].mxu0 %v1291
    %v1397 = vpop.f32.mrb[0].mxu0
    %v1398 = vadd.f32 0.0, %v1397
    %v1399 = vpop.f32.mrb[0].mxu0
    %v1400 = vpop.f32.mrb[0].mxu0
    %v1401 = vadd.f32 0.0, %v1400
    %v1402 = vpop.f32.mrb[0].mxu0
    %1403 = vmatprep.mubr.bf16.mxu0 0
    %1404 = vmatmul.mubr.bf16.gmra.mrb[0].mxu0 %v1294
    %v1405 = vpop.f32.mrb[0].mxu0
    %v1406 = vadd.f32 0.0, %v1405
    %v1407 = vpop.f32.mrb[0].mxu0
    %v1408 = vpop.f32.mrb[0].mxu0
    %v1409 = vadd.f32 0.0, %v1408
    %v1410 = vpop.f32.mrb[0].mxu0
    %1411 = vmatprep.mubr.bf16.mxu0 0
    %1412 = vmatmul.mubr.bf16.gmra.mrb[0].mxu0 %v1297
    %v1413 = vpop.f32.mrb[0].mxu0
    %v1414 = vadd.f32 0.0, %v1413
    %v1415 = vpop.f32.mrb[0].mxu0
    %v1416 = vpop.f32.mrb[0].mxu0
    %v1417 = vadd.f32 0.0, %v1416
    %v1418 = vpop.f32.mrb[0].mxu0
    %1419 = vmatprep.mubr.bf16.mxu0 0
    %1420 = vmatmul.mubr.bf16.gmra.mrb[0].mxu0 %v1300
    %v1421 = vpop.f32.mrb[0].mxu0
    %v1422 = vadd.f32 0.0, %v1421
    %v1423 = vpop.f32.mrb[0].mxu0
    %v1424 = vpop.f32.mrb[0].mxu0
    %v1425 = vadd.f32 0.0, %v1424
    %v1426 = vpop.f32.mrb[0].mxu0
    %1427 = vmatprep.mubr.bf16.mxu0 0
    %1428 = vmatmul.mubr.bf16.gmra.mrb[0].mxu0 %v1303
    %v1429 = vpop.f32.mrb[0].mxu0
    %v1430 = vadd.f32 0.0, %v1429
    %v1431 = vpop.f32.mrb[0].mxu0
    %v1432 = vpop.f32.mrb[0].mxu0
    %v1433 = vadd.f32 0.0, %v1432
    %v1434 = vpop.f32.mrb[0].mxu0
    %1435 = vmatprep.mubr.bf16.mxu0 0
    %1436 = vmatmul.mubr.bf16.gmra.mrb[0].mxu0 %v1306
    %v1437 = vpop.f32.mrb[0].mxu0
    %v1438 = vadd.f32 0.0, %v1437
    %v1439 = vpop.f32.mrb[0].mxu0
    %v1440 = vpop.f32.mrb[0].mxu0
    %v1441 = vadd.f32 0.0, %v1440
    %v1442 = vpop.f32.mrb[0].mxu0
    %1443 = vmatprep.mubr.bf16.mxu0 0
    %1444 = vmatmul.mubr.bf16.gmra.mrb[0].mxu0 %v1309
    %v1445 = vpop.f32.mrb[0].mxu0
    %v1446 = vadd.f32 0.0, %v1445
    %v1447 = vpop.f32.mrb[0].mxu0
    %v1448 = vpop.f32.mrb[0].mxu0
    %v1449 = vadd.f32 0.0, %v1448
    %v1450 = vpop.f32.mrb[0].mxu0
    %1451 = vmatprep.mubr.bf16.mxu0 0
    %1452 = vmatmul.mubr.bf16.gmra.mrb[0].mxu0 %v1312
    %v1453 = vpop.f32.mrb[0].mxu0
    %v1454 = vadd.f32 0.0, %v1453
    %v1455 = vpop.f32.mrb[0].mxu0
    %v1456 = vpop.f32.mrb[0].mxu0
    %v1457 = vadd.f32 0.0, %v1456
    %v1458 = vpop.f32.mrb[0].mxu0
    %1459 = vmatprep.mubr.bf16.mxu0 0
    %1460 = vmatmul.mubr.bf16.gmra.mrb[0].mxu0 %v1315
    %v1461 = vpop.f32.mrb[0].mxu0
    %v1462 = vadd.f32 0.0, %v1461
    %v1463 = vpop.f32.mrb[0].mxu0
    %v1464 = vpop.f32.mrb[0].mxu0
    %v1465 = vadd.f32 0.0, %v1464
    %v1466 = vpop.f32.mrb[0].mxu0
    %1467 = vmatprep.mubr.bf16.mxu0 0
    %1468 = vmatmul.mubr.bf16.gmra.mrb[0].mxu0 %v1318
    %v1469 = vpop.f32.mrb[0].mxu0
    %v1470 = vadd.f32 0.0, %v1469
    %v1471 = vpop.f32.mrb[0].mxu0
    %v1472 = vpop.f32.mrb[0].mxu0
    %v1473 = vadd.f32 0.0, %v1472
    %v1474 = vpop.f32.mrb[0].mxu0
    %1475 = vmatprep.mubr.bf16.mxu0 0
    %1476 = vmatmul.mubr.bf16.gmra.mrb[0].mxu0 %v1321
    %v1477 = vpop.f32.mrb[0].mxu0
    %v1478 = vadd.f32 0.0, %v1477
    %v1479 = vpop.f32.mrb[0].mxu0
    %v1480 = vpop.f32.mrb[0].mxu0
    %v1481 = vadd.f32 0.0, %v1480
    %v1482 = vpop.f32.mrb[0].mxu0
    %1483 = vdwg.mxu0
    %v1484 = vadd.f32 %v922, %v1358
    %v1485 = vadd.f32 %v925, %v1361
    %v1486 = vadd.f32 %v930, %v1366
    %v1487 = vadd.f32 %v933, %v1369
    %v1488 = vadd.f32 %v938, %v1374
    %v1489 = vadd.f32 %v941, %v1377
    %v1490 = vadd.f32 %v946, %v1382
    %v1491 = vadd.f32 %v949, %v1385
    %v1492 = vadd.f32 %v954, %v1390
    %v1493 = vadd.f32 %v957, %v1393
    %v1494 = vadd.f32 %v962, %v1398
    %v1495 = vadd.f32 %v965, %v1401
    %v1496 = vadd.f32 %v970, %v1406
    %v1497 = vadd.f32 %v973, %v1409
    %v1498 = vadd.f32 %v978, %v1414
    %v1499 = vadd.f32 %v981, %v1417
    %v1500 = vadd.f32 %v986, %v1422
    %v1501 = vadd.f32 %v989, %v1425
    %v1502 = vadd.f32 %v994, %v1430
    %v1503 = vadd.f32 %v997, %v1433
    %v1504 = vadd.f32 %v1002, %v1438
    %v1505 = vadd.f32 %v1005, %v1441
    %v1506 = vadd.f32 %v1010, %v1446
    %v1507 = vadd.f32 %v1013, %v1449
    %v1508 = vadd.f32 %v1018, %v1454
    %v1509 = vadd.f32 %v1021, %v1457
    %v1510 = vadd.f32 %v1026, %v1462
    %v1511 = vadd.f32 %v1029, %v1465
    %v1512 = vadd.f32 %v1034, %v1470
    %v1513 = vadd.f32 %v1037, %v1473
    %v1514 = vadd.f32 %v1042, %v1478
    %v1515 = vadd.f32 %v1045, %v1481
    %s1516 = sadd.s32 %s30, 1
    %s1517 = smul.u32 %s1516, 3
    %s1518 = smul.addr %s1517, 4
    %s1519 = scalar_lea.vmem [#allocation2], %s1518
    %v1520 = vld [vmem:[%s1519] sm:$0xf]
    %v1521 = vld [vmem:[%s1519 + $0x4] sm:$0xf]
    %v1522 = vld [vmem:[%s1519 + $0xc] sm:$0xf]
    %v1523 = vld [vmem:[%s1519 + $0x10] sm:$0xf]
    %v1524 = vld [vmem:[%s1519 + $0x18] sm:$0xf]
    %v1525 = vld [vmem:[%s1519 + $0x1c] sm:$0xf]
    %v1526 = vld [vmem:[%s1519 + $0x24] sm:$0xf]
    %v1527 = vld [vmem:[%s1519 + $0x28] sm:$0xf]
    %v1528 = vld [vmem:[%s1519 + $0x30] sm:$0xf]
    %v1529 = vld [vmem:[%s1519 + $0x34] sm:$0xf]
    %v1530 = vld [vmem:[%s1519 + $0x3c] sm:$0xf]
    %v1531 = vld [vmem:[%s1519 + $0x40] sm:$0xf]
    %v1532 = vld [vmem:[%s1519 + $0x48] sm:$0xf]
    %v1533 = vld [vmem:[%s1519 + $0x4c] sm:$0xf]
    %v1534 = vld [vmem:[%s1519 + $0x54] sm:$0xf]
    %v1535 = vld [vmem:[%s1519 + $0x58] sm:$0xf]
    %v1536 = vld [vmem:[%s1519 + $0x60] sm:$0xf]
    %v1537 = vld [vmem:[%s1519 + $0x64] sm:$0xf]
    %v1538 = vld [vmem:[%s1519 + $0x6c] sm:$0xf]
    %v1539 = vld [vmem:[%s1519 + $0x70] sm:$0xf]
    %v1540 = vld [vmem:[%s1519 + $0x78] sm:$0xf]
    %v1541 = vld [vmem:[%s1519 + $0x7c] sm:$0xf]
    %v1542 = vld [vmem:[%s1519 + $0x84] sm:$0xf]
    %v1543 = vld [vmem:[%s1519 + $0x88] sm:$0xf]
    %v1544 = vld [vmem:[%s1519 + $0x90] sm:$0xf]
    %v1545 = vld [vmem:[%s1519 + $0x94] sm:$0xf]
    %v1546 = vld [vmem:[%s1519 + $0x9c] sm:$0xf]
    %v1547 = vld [vmem:[%s1519 + $0xa0] sm:$0xf]
    %v1548 = vld [vmem:[%s1519 + $0xa8] sm:$0xf]
    %v1549 = vld [vmem:[%s1519 + $0xac] sm:$0xf]
    %v1550 = vld [vmem:[%s1519 + $0xb4] sm:$0xf]
    %v1551 = vld [vmem:[%s1519 + $0xb8] sm:$0xf]
    %v1552 = vld [vmem:[%s1 + $0x30] sm:$0xf]
    %v1553 = vld [vmem:[%s1 + $0x34] sm:$0xf]
    %v1554 = vld [vmem:[%s1 + $0x38] sm:$0xf]
    %v1555 = vld [vmem:[%s1 + $0x3c] sm:$0xf]
    %v1588 = vunpack.c.l.b16 %v1520
    %v1589 = vunpack.c.l.b16 %v1521
    %v1590 = vunpack.c.l.b16 %v1522
    %v1591 = vunpack.c.l.b16 %v1523
    %v1592 = vunpack.c.l.b16 %v1524
    %v1593 = vunpack.c.l.b16 %v1525
    %v1594 = vunpack.c.l.b16 %v1526
    %v1595 = vunpack.c.l.b16 %v1527
    %v1596 = vunpack.c.l.b16 %v1528
    %v1597 = vunpack.c.l.b16 %v1529
    %v1598 = vunpack.c.l.b16 %v1530
    %v1599 = vunpack.c.l.b16 %v1531
    %v1600 = vunpack.c.l.b16 %v1532
    %v1601 = vunpack.c.l.b16 %v1533
    %v1602 = vunpack.c.l.b16 %v1534
    %v1603 = vunpack.c.l.b16 %v1535
    %v1604 = vunpack.c.l.b16 %v1536
    %v1605 = vunpack.c.l.b16 %v1537
    %v1606 = vunpack.c.l.b16 %v1538
    %v1607 = vunpack.c.l.b16 %v1539
    %v1608 = vunpack.c.l.b16 %v1540
    %v1609 = vunpack.c.l.b16 %v1541
    %v1610 = vunpack.c.l.b16 %v1542
    %v1611 = vunpack.c.l.b16 %v1543
    %v1612 = vunpack.c.l.b16 %v1544
    %v1613 = vunpack.c.l.b16 %v1545
    %v1614 = vunpack.c.l.b16 %v1546
    %v1615 = vunpack.c.l.b16 %v1547
    %v1616 = vunpack.c.l.b16 %v1548
    %v1617 = vunpack.c.l.b16 %v1549
    %v1618 = vunpack.c.l.b16 %v1550
    %v1619 = vunpack.c.l.b16 %v1551
    %v1620 = vpack.c.b16 %v1589, %v1588
    %v1621 = vpack.c.b16 %v1591, %v1590
    %v1622 = vpack.c.b16 %v1593, %v1592
    %v1623 = vpack.c.b16 %v1595, %v1594
    %v1624 = vpack.c.b16 %v1597, %v1596
    %v1625 = vpack.c.b16 %v1599, %v1598
    %v1626 = vpack.c.b16 %v1601, %v1600
    %v1627 = vpack.c.b16 %v1603, %v1602
    %v1628 = vpack.c.b16 %v1605, %v1604
    %v1629 = vpack.c.b16 %v1607, %v1606
    %v1630 = vpack.c.b16 %v1609, %v1608
    %v1631 = vpack.c.b16 %v1611, %v1610
    %v1632 = vpack.c.b16 %v1613, %v1612
    %v1633 = vpack.c.b16 %v1615, %v1614
    %v1634 = vpack.c.b16 %v1617, %v1616
    %v1635 = vpack.c.b16 %v1619, %v1618
    %v1640 = vunpack.c.l.b16 %v1552
    %v1641 = vunpack.c.l.b16 %v1553
    %v1642 = vunpack.c.l.b16 %v1554
    %v1643 = vunpack.c.l.b16 %v1555
    %v1644 = vpack.c.b16 %v1641, %v1640
    %v1645 = vpack.c.b16 %v1643, %v1642
    %v1649 = vsel %vm537, %v1620, 0
    %v1652 = vsel %vm537, %v1621, 0
    %v1655 = vsel %vm537, %v1622, 0
    %v1658 = vsel %vm537, %v1623, 0
    %v1661 = vsel %vm537, %v1624, 0
    %v1664 = vsel %vm537, %v1625, 0
    %v1667 = vsel %vm537, %v1626, 0
    %v1670 = vsel %vm537, %v1627, 0
    %v1673 = vsel %vm537, %v1628, 0
    %v1676 = vsel %vm537, %v1629, 0
    %v1679 = vsel %vm537, %v1630, 0
    %v1682 = vsel %vm537, %v1631, 0
    %v1685 = vsel %vm537, %v1632, 0
    %v1688 = vsel %vm537, %v1633, 0
    %v1691 = vsel %vm537, %v1634, 0
    %v1694 = vsel %vm537, %v1635, 0
    %1696 = vmatprep.subr.bf16.mxu0 0
    %1697 = vmatpush1.bf16.msra.mxu0 %v1644
    %1698 = vmatprep.subr.bf16.mxu0 0
    %1699 = vmatpush1.bf16.msra.mxu0 %v1645
    %1700 = vmatprep.subr.bf16.mxu0 0
    %1701 = vmatpush1.bf16.msra.mxu0 0
    %1702 = vmatprep.subr.bf16.mxu0 0
    %1703 = vmatpush1.bf16.msra.mxu0 0
    %1704 = vmatprep.subr.bf16.mxu0 0
    %1705 = vmatpush1.bf16.msra.mxu0 0
    %1706 = vmatprep.subr.bf16.mxu0 0
    %1707 = vmatpush1.bf16.msra.mxu0 0
    %1708 = vmatprep.subr.bf16.mxu0 0
    %1709 = vmatpush1.bf16.msra.mxu0 0
    %1710 = vmatprep.subr.bf16.mxu0 0
    %1711 = vmatpush1.bf16.msra.mxu0 0
    %1712 = vmatprep.subr.bf16.mxu0 0
    %1713 = vmatpush1.bf16.msra.mxu0 0
    %1714 = vmatprep.subr.bf16.mxu0 0
    %1715 = vmatpush1.bf16.msra.mxu0 0
    %1716 = vmatprep.subr.bf16.mxu0 0
    %1717 = vmatpush1.bf16.msra.mxu0 0
    %1718 = vmatprep.subr.bf16.mxu0 0
    %1719 = vmatpush1.bf16.msra.mxu0 0
    %1720 = vmatprep.subr.bf16.mxu0 0
    %1721 = vmatpush1.bf16.msra.mxu0 0
    %1722 = vmatprep.subr.bf16.mxu0 0
    %1723 = vmatpush1.bf16.msra.mxu0 0
    %1724 = vmatprep.subr.bf16.mxu0 0
    %1725 = vmatpush1.bf16.msra.mxu0 0
    %1726 = vmatprep.subr.bf16.mxu0 0
    %1727 = vmatpush1.bf16.msra.mxu0 0
    %1728 = vmatprep.mubr.bf16.mxu0 0
    %1729 = vmatmul.mubr.bf16.gmra.mrb[0].mxu0 %v1649
    %v1730 = vpop.f32.mrb[0].mxu0
    %v1731 = vadd.f32 0.0, %v1730
    %v1732 = vpop.f32.mrb[0].mxu0
    %v1733 = vpop.f32.mrb[0].mxu0
    %v1734 = vadd.f32 0.0, %v1733
    %v1735 = vpop.f32.mrb[0].mxu0
    %1736 = vmatprep.mubr.bf16.mxu0 0
    %1737 = vmatmul.mubr.bf16.gmra.mrb[0].mxu0 %v1652
    %v1738 = vpop.f32.mrb[0].mxu0
    %v1739 = vadd.f32 0.0, %v1738
    %v1740 = vpop.f32.mrb[0].mxu0
    %v1741 = vpop.f32.mrb[0].mxu0
    %v1742 = vadd.f32 0.0, %v1741
    %v1743 = vpop.f32.mrb[0].mxu0
    %1744 = vmatprep.mubr.bf16.mxu0 0
    %1745 = vmatmul.mubr.bf16.gmra.mrb[0].mxu0 %v1655
    %v1746 = vpop.f32.mrb[0].mxu0
    %v1747 = vadd.f32 0.0, %v1746
    %v1748 = vpop.f32.mrb[0].mxu0
    %v1749 = vpop.f32.mrb[0].mxu0
    %v1750 = vadd.f32 0.0, %v1749
    %v1751 = vpop.f32.mrb[0].mxu0
    %1752 = vmatprep.mubr.bf16.mxu0 0
    %1753 = vmatmul.mubr.bf16.gmra.mrb[0].mxu0 %v1658
    %v1754 = vpop.f32.mrb[0].mxu0
    %v1755 = vadd.f32 0.0, %v1754
    %v1756 = vpop.f32.mrb[0].mxu0
    %v1757 = vpop.f32.mrb[0].mxu0
    %v1758 = vadd.f32 0.0, %v1757
    %v1759 = vpop.f32.mrb[0].mxu0
    %1760 = vmatprep.mubr.bf16.mxu0 0
    %1761 = vmatmul.mubr.bf16.gmra.mrb[0].mxu0 %v1661
    %v1762 = vpop.f32.mrb[0].mxu0
    %v1763 = vadd.f32 0.0, %v1762
    %v1764 = vpop.f32.mrb[0].mxu0
    %v1765 = vpop.f32.mrb[0].mxu0
    %v1766 = vadd.f32 0.0, %v1765
    %v1767 = vpop.f32.mrb[0].mxu0
    %1768 = vmatprep.mubr.bf16.mxu0 0
    %1769 = vmatmul.mubr.bf16.gmra.mrb[0].mxu0 %v1664
    %v1770 = vpop.f32.mrb[0].mxu0
    %v1771 = vadd.f32 0.0, %v1770
    %v1772 = vpop.f32.mrb[0].mxu0
    %v1773 = vpop.f32.mrb[0].mxu0
    %v1774 = vadd.f32 0.0, %v1773
    %v1775 = vpop.f32.mrb[0].mxu0
    %1776 = vmatprep.mubr.bf16.mxu0 0
    %1777 = vmatmul.mubr.bf16.gmra.mrb[0].mxu0 %v1667
    %v1778 = vpop.f32.mrb[0].mxu0
    %v1779 = vadd.f32 0.0, %v1778
    %v1780 = vpop.f32.mrb[0].mxu0
    %v1781 = vpop.f32.mrb[0].mxu0
    %v1782 = vadd.f32 0.0, %v1781
    %v1783 = vpop.f32.mrb[0].mxu0
    %1784 = vmatprep.mubr.bf16.mxu0 0
    %1785 = vmatmul.mubr.bf16.gmra.mrb[0].mxu0 %v1670
    %v1786 = vpop.f32.mrb[0].mxu0
    %v1787 = vadd.f32 0.0, %v1786
    %v1788 = vpop.f32.mrb[0].mxu0
    %v1789 = vpop.f32.mrb[0].mxu0
    %v1790 = vadd.f32 0.0, %v1789
    %v1791 = vpop.f32.mrb[0].mxu0
    %1792 = vmatprep.mubr.bf16.mxu0 0
    %1793 = vmatmul.mubr.bf16.gmra.mrb[0].mxu0 %v1673
    %v1794 = vpop.f32.mrb[0].mxu0
    %v1795 = vadd.f32 0.0, %v1794
    %v1796 = vpop.f32.mrb[0].mxu0
    %v1797 = vpop.f32.mrb[0].mxu0
    %v1798 = vadd.f32 0.0, %v1797
    %v1799 = vpop.f32.mrb[0].mxu0
    %1800 = vmatprep.mubr.bf16.mxu0 0
    %1801 = vmatmul.mubr.bf16.gmra.mrb[0].mxu0 %v1676
    %v1802 = vpop.f32.mrb[0].mxu0
    %v1803 = vadd.f32 0.0, %v1802
    %v1804 = vpop.f32.mrb[0].mxu0
    %v1805 = vpop.f32.mrb[0].mxu0
    %v1806 = vadd.f32 0.0, %v1805
    %v1807 = vpop.f32.mrb[0].mxu0
    %1808 = vmatprep.mubr.bf16.mxu0 0
    %1809 = vmatmul.mubr.bf16.gmra.mrb[0].mxu0 %v1679
    %v1810 = vpop.f32.mrb[0].mxu0
    %v1811 = vadd.f32 0.0, %v1810
    %v1812 = vpop.f32.mrb[0].mxu0
    %v1813 = vpop.f32.mrb[0].mxu0
    %v1814 = vadd.f32 0.0, %v1813
    %v1815 = vpop.f32.mrb[0].mxu0
    %1816 = vmatprep.mubr.bf16.mxu0 0
    %1817 = vmatmul.mubr.bf16.gmra.mrb[0].mxu0 %v1682
    %v1818 = vpop.f32.mrb[0].mxu0
    %v1819 = vadd.f32 0.0, %v1818
    %v1820 = vpop.f32.mrb[0].mxu0
    %v1821 = vpop.f32.mrb[0].mxu0
    %v1822 = vadd.f32 0.0, %v1821
    %v1823 = vpop.f32.mrb[0].mxu0
    %1824 = vmatprep.mubr.bf16.mxu0 0
    %1825 = vmatmul.mubr.bf16.gmra.mrb[0].mxu0 %v1685
    %v1826 = vpop.f32.mrb[0].mxu0
    %v1827 = vadd.f32 0.0, %v1826
    %v1828 = vpop.f32.mrb[0].mxu0
    %v1829 = vpop.f32.mrb[0].mxu0
    %v1830 = vadd.f32 0.0, %v1829
    %v1831 = vpop.f32.mrb[0].mxu0
    %1832 = vmatprep.mubr.bf16.mxu0 0
    %1833 = vmatmul.mubr.bf16.gmra.mrb[0].mxu0 %v1688
    %v1834 = vpop.f32.mrb[0].mxu0
    %v1835 = vadd.f32 0.0, %v1834
    %v1836 = vpop.f32.mrb[0].mxu0
    %v1837 = vpop.f32.mrb[0].mxu0
    %v1838 = vadd.f32 0.0, %v1837
    %v1839 = vpop.f32.mrb[0].mxu0
    %1840 = vmatprep.mubr.bf16.mxu0 0
    %1841 = vmatmul.mubr.bf16.gmra.mrb[0].mxu0 %v1691
    %v1842 = vpop.f32.mrb[0].mxu0
    %v1843 = vadd.f32 0.0, %v1842
    %v1844 = vpop.f32.mrb[0].mxu0
    %v1845 = vpop.f32.mrb[0].mxu0
    %v1846 = vadd.f32 0.0, %v1845
    %v1847 = vpop.f32.mrb[0].mxu0
    %1848 = vmatprep.mubr.bf16.mxu0 0
    %1849 = vmatmul.mubr.bf16.gmra.mrb[0].mxu0 %v1694
    %v1850 = vpop.f32.mrb[0].mxu0
    %v1851 = vadd.f32 0.0, %v1850
    %v1852 = vpop.f32.mrb[0].mxu0
    %v1853 = vpop.f32.mrb[0].mxu0
    %v1854 = vadd.f32 0.0, %v1853
    %v1855 = vpop.f32.mrb[0].mxu0
    %1856 = vdwg.mxu0
    %v1857 = vadd.f32 %v1484, %v1731
    %v1858 = vadd.f32 %v1485, %v1734
    %v1859 = vadd.f32 %v1486, %v1739
    %v1860 = vadd.f32 %v1487, %v1742
    %v1861 = vadd.f32 %v1488, %v1747
    %v1862 = vadd.f32 %v1489, %v1750
    %v1863 = vadd.f32 %v1490, %v1755
    %v1864 = vadd.f32 %v1491, %v1758
    %v1865 = vadd.f32 %v1492, %v1763
    %v1866 = vadd.f32 %v1493, %v1766
    %v1867 = vadd.f32 %v1494, %v1771
    %v1868 = vadd.f32 %v1495, %v1774
    %v1869 = vadd.f32 %v1496, %v1779
    %v1870 = vadd.f32 %v1497, %v1782
    %v1871 = vadd.f32 %v1498, %v1787
    %v1872 = vadd.f32 %v1499, %v1790
    %v1873 = vadd.f32 %v1500, %v1795
    %v1874 = vadd.f32 %v1501, %v1798
    %v1875 = vadd.f32 %v1502, %v1803
    %v1876 = vadd.f32 %v1503, %v1806
    %v1877 = vadd.f32 %v1504, %v1811
    %v1878 = vadd.f32 %v1505, %v1814
    %v1879 = vadd.f32 %v1506, %v1819
    %v1880 = vadd.f32 %v1507, %v1822
    %v1881 = vadd.f32 %v1508, %v1827
    %v1882 = vadd.f32 %v1509, %v1830
    %v1883 = vadd.f32 %v1510, %v1835
    %v1884 = vadd.f32 %v1511, %v1838
    %v1885 = vadd.f32 %v1512, %v1843
    %v1886 = vadd.f32 %v1513, %v1846
    %v1887 = vadd.f32 %v1514, %v1851
    %v1888 = vadd.f32 %v1515, %v1854
    %v1889 = vld [vmem:[%s1519] sm:$0xf]
    %v1890 = vld [vmem:[%s1519 + $0x4] sm:$0xf]
    %v1891 = vld [vmem:[%s1519 + $0x8] sm:$0x1]
    %v1892 = vld [vmem:[%s1519 + $0xc] sm:$0xf]
    %v1893 = vld [vmem:[%s1519 + $0x10] sm:$0xf]
    %v1894 = vld [vmem:[%s1519 + $0x14] sm:$0x1]
    %v1895 = vld [vmem:[%s1519 + $0x18] sm:$0xf]
    %v1896 = vld [vmem:[%s1519 + $0x1c] sm:$0xf]
    %v1897 = vld [vmem:[%s1519 + $0x20] sm:$0x1]
    %v1898 = vld [vmem:[%s1519 + $0x24] sm:$0xf]
    %v1899 = vld [vmem:[%s1519 + $0x28] sm:$0xf]
    %v1900 = vld [vmem:[%s1519 + $0x2c] sm:$0x1]
    %v1901 = vld [vmem:[%s1519 + $0x30] sm:$0xf]
    %v1902 = vld [vmem:[%s1519 + $0x34] sm:$0xf]
    %v1903 = vld [vmem:[%s1519 + $0x38] sm:$0x1]
    %v1904 = vld [vmem:[%s1519 + $0x3c] sm:$0xf]
    %v1905 = vld [vmem:[%s1519 + $0x40] sm:$0xf]
    %v1906 = vld [vmem:[%s1519 + $0x44] sm:$0x1]
    %v1907 = vld [vmem:[%s1519 + $0x48] sm:$0xf]
    %v1908 = vld [vmem:[%s1519 + $0x4c] sm:$0xf]
    %v1909 = vld [vmem:[%s1519 + $0x50] sm:$0x1]
    %v1910 = vld [vmem:[%s1519 + $0x54] sm:$0xf]
    %v1911 = vld [vmem:[%s1519 + $0x58] sm:$0xf]
    %v1912 = vld [vmem:[%s1519 + $0x5c] sm:$0x1]
    %v1913 = vld [vmem:[%s1519 + $0x60] sm:$0xf]
    %v1914 = vld [vmem:[%s1519 + $0x64] sm:$0xf]
    %v1915 = vld [vmem:[%s1519 + $0x68] sm:$0x1]
    %v1916 = vld [vmem:[%s1519 + $0x6c] sm:$0xf]
    %v1917 = vld [vmem:[%s1519 + $0x70] sm:$0xf]
    %v1918 = vld [vmem:[%s1519 + $0x74] sm:$0x1]
    %v1919 = vld [vmem:[%s1519 + $0x78] sm:$0xf]
    %v1920 = vld [vmem:[%s1519 + $0x7c] sm:$0xf]
    %v1921 = vld [vmem:[%s1519 + $0x80] sm:$0x1]
    %v1922 = vld [vmem:[%s1519 + $0x84] sm:$0xf]
    %v1923 = vld [vmem:[%s1519 + $0x88] sm:$0xf]
    %v1924 = vld [vmem:[%s1519 + $0x8c] sm:$0x1]
    %v1925 = vld [vmem:[%s1519 + $0x90] sm:$0xf]
    %v1926 = vld [vmem:[%s1519 + $0x94] sm:$0xf]
    %v1927 = vld [vmem:[%s1519 + $0x98] sm:$0x1]
    %v1928 = vld [vmem:[%s1519 + $0x9c] sm:$0xf]
    %v1929 = vld [vmem:[%s1519 + $0xa0] sm:$0xf]
    %v1930 = vld [vmem:[%s1519 + $0xa4] sm:$0x1]
    %v1931 = vld [vmem:[%s1519 + $0xa8] sm:$0xf]
    %v1932 = vld [vmem:[%s1519 + $0xac] sm:$0xf]
    %v1933 = vld [vmem:[%s1519 + $0xb0] sm:$0x1]
    %v1934 = vld [vmem:[%s1519 + $0xb4] sm:$0xf]
    %v1935 = vld [vmem:[%s1519 + $0xb8] sm:$0xf]
    %v1936 = vld [vmem:[%s1519 + $0xbc] sm:$0x1]
    %v1937 = vld [vmem:[%s1 + $0x40] sm:$0xf]
    %v1938 = vld [vmem:[%s1 + $0x44] sm:$0xf]
    %v1939 = vld [vmem:[%s1 + $0x48] sm:$0xf]
    %v1940 = vld [vmem:[%s1 + $0x4c] sm:$0xf]
    %v1942 = vshrl.u32 %v1889, 16
    %v1944 = vrot.slane %v1942, 4
    %v1945 = vshll.u32 %v1889, 16
    %v1947 = vrot.slane %v1945, 5
    %v1948 = vor.u32 %v1944, %v1947
    %v1949 = vrot.slane %v1948, 4
    %v1951 = vshll.u32 %v1890, 16
    %v1953 = vrot.slane %v1951, 5
    %v1954 = vsel %vm92, %v1949, %v1953
    %v1955 = vshrl.u32 %v1890, 16
    %v1957 = vrot.slane %v1955, 4
    %v1958 = vor.u32 %v1957, %v1953
    %v1959 = vrot.slane %v1958, 4
    %v1961 = vshll.u32 %v1891, 16
    %v1963 = vrot.slane %v1961, 5
    %v1964 = vsel %vm92, %v1959, %v1963
    %v1966 = vshrl.u32 %v1892, 16
    %v1968 = vrot.slane %v1966, 4
    %v1969 = vshll.u32 %v1892, 16
    %v1971 = vrot.slane %v1969, 5
    %v1972 = vor.u32 %v1968, %v1971
    %v1973 = vrot.slane %v1972, 4
    %v1975 = vshll.u32 %v1893, 16
    %v1977 = vrot.slane %v1975, 5
    %v1978 = vsel %vm92, %v1973, %v1977
    %v1979 = vshrl.u32 %v1893, 16
    %v1981 = vrot.slane %v1979, 4
    %v1982 = vor.u32 %v1981, %v1977
    %v1983 = vrot.slane %v1982, 4
    %v1985 = vshll.u32 %v1894, 16
    %v1987 = vrot.slane %v1985, 5
    %v1988 = vsel %vm92, %v1983, %v1987
    %v1990 = vshrl.u32 %v1895, 16
    %v1992 = vrot.slane %v1990, 4
    %v1993 = vshll.u32 %v1895, 16
    %v1995 = vrot.slane %v1993, 5
    %v1996 = vor.u32 %v1992, %v1995
    %v1997 = vrot.slane %v1996, 4
    %v1999 = vshll.u32 %v1896, 16
    %v2001 = vrot.slane %v1999, 5
    %v2002 = vsel %vm92, %v1997, %v2001
    %v2003 = vshrl.u32 %v1896, 16
    %v2005 = vrot.slane %v2003, 4
    %v2006 = vor.u32 %v2005, %v2001
    %v2007 = vrot.slane %v2006, 4
    %v2009 = vshll.u32 %v1897, 16
    %v2011 = vrot.slane %v2009, 5
    %v2012 = vsel %vm92, %v2007, %v2011
    %v2014 = vshrl.u32 %v1898, 16
    %v2016 = vrot.slane %v2014, 4
    %v2017 = vshll.u32 %v1898, 16
    %v2019 = vrot.slane %v2017, 5
    %v2020 = vor.u32 %v2016, %v2019
    %v2021 = vrot.slane %v2020, 4
    %v2023 = vshll.u32 %v1899, 16
    %v2025 = vrot.slane %v2023, 5
    %v2026 = vsel %vm92, %v2021, %v2025
    %v2027 = vshrl.u32 %v1899, 16
    %v2029 = vrot.slane %v2027, 4
    %v2030 = vor.u32 %v2029, %v2025
    %v2031 = vrot.slane %v2030, 4
    %v2033 = vshll.u32 %v1900, 16
    %v2035 = vrot.slane %v2033, 5
    %v2036 = vsel %vm92, %v2031, %v2035
    %v2038 = vshrl.u32 %v1901, 16
    %v2040 = vrot.slane %v2038, 4
    %v2041 = vshll.u32 %v1901, 16
    %v2043 = vrot.slane %v2041, 5
    %v2044 = vor.u32 %v2040, %v2043
    %v2045 = vrot.slane %v2044, 4
    %v2047 = vshll.u32 %v1902, 16
    %v2049 = vrot.slane %v2047, 5
    %v2050 = vsel %vm92, %v2045, %v2049
    %v2051 = vshrl.u32 %v1902, 16
    %v2053 = vrot.slane %v2051, 4
    %v2054 = vor.u32 %v2053, %v2049
    %v2055 = vrot.slane %v2054, 4
    %v2057 = vshll.u32 %v1903, 16
    %v2059 = vrot.slane %v2057, 5
    %v2060 = vsel %vm92, %v2055, %v2059
    %v2062 = vshrl.u32 %v1904, 16
    %v2064 = vrot.slane %v2062, 4
    %v2065 = vshll.u32 %v1904, 16
    %v2067 = vrot.slane %v2065, 5
    %v2068 = vor.u32 %v2064, %v2067
    %v2069 = vrot.slane %v2068, 4
    %v2071 = vshll.u32 %v1905, 16
    %v2073 = vrot.slane %v2071, 5
    %v2074 = vsel %vm92, %v2069, %v2073
    %v2075 = vshrl.u32 %v1905, 16
    %v2077 = vrot.slane %v2075, 4
    %v2078 = vor.u32 %v2077, %v2073
    %v2079 = vrot.slane %v2078, 4
    %v2081 = vshll.u32 %v1906, 16
    %v2083 = vrot.slane %v2081, 5
    %v2084 = vsel %vm92, %v2079, %v2083
    %v2086 = vshrl.u32 %v1907, 16
    %v2088 = vrot.slane %v2086, 4
    %v2089 = vshll.u32 %v1907, 16
    %v2091 = vrot.slane %v2089, 5
    %v2092 = vor.u32 %v2088, %v2091
    %v2093 = vrot.slane %v2092, 4
    %v2095 = vshll.u32 %v1908, 16
    %v2097 = vrot.slane %v2095, 5
    %v2098 = vsel %vm92, %v2093, %v2097
    %v2099 = vshrl.u32 %v1908, 16
    %v2101 = vrot.slane %v2099, 4
    %v2102 = vor.u32 %v2101, %v2097
    %v2103 = vrot.slane %v2102, 4
    %v2105 = vshll.u32 %v1909, 16
    %v2107 = vrot.slane %v2105, 5
    %v2108 = vsel %vm92, %v2103, %v2107
    %v2110 = vshrl.u32 %v1910, 16
    %v2112 = vrot.slane %v2110, 4
    %v2113 = vshll.u32 %v1910, 16
    %v2115 = vrot.slane %v2113, 5
    %v2116 = vor.u32 %v2112, %v2115
    %v2117 = vrot.slane %v2116, 4
    %v2119 = vshll.u32 %v1911, 16
    %v2121 = vrot.slane %v2119, 5
    %v2122 = vsel %vm92, %v2117, %v2121
    %v2123 = vshrl.u32 %v1911, 16
    %v2125 = vrot.slane %v2123, 4
    %v2126 = vor.u32 %v2125, %v2121
    %v2127 = vrot.slane %v2126, 4
    %v2129 = vshll.u32 %v1912, 16
    %v2131 = vrot.slane %v2129, 5
    %v2132 = vsel %vm92, %v2127, %v2131
    %v2134 = vshrl.u32 %v1913, 16
    %v2136 = vrot.slane %v2134, 4
    %v2137 = vshll.u32 %v1913, 16
    %v2139 = vrot.slane %v2137, 5
    %v2140 = vor.u32 %v2136, %v2139
    %v2141 = vrot.slane %v2140, 4
    %v2143 = vshll.u32 %v1914, 16
    %v2145 = vrot.slane %v2143, 5
    %v2146 = vsel %vm92, %v2141, %v2145
    %v2147 = vshrl.u32 %v1914, 16
    %v2149 = vrot.slane %v2147, 4
    %v2150 = vor.u32 %v2149, %v2145
    %v2151 = vrot.slane %v2150, 4
    %v2153 = vshll.u32 %v1915, 16
    %v2155 = vrot.slane %v2153, 5
    %v2156 = vsel %vm92, %v2151, %v2155
    %v2158 = vshrl.u32 %v1916, 16
    %v2160 = vrot.slane %v2158, 4
    %v2161 = vshll.u32 %v1916, 16
    %v2163 = vrot.slane %v2161, 5
    %v2164 = vor.u32 %v2160, %v2163
    %v2165 = vrot.slane %v2164, 4
    %v2167 = vshll.u32 %v1917, 16
    %v2169 = vrot.slane %v2167, 5
    %v2170 = vsel %vm92, %v2165, %v2169
    %v2171 = vshrl.u32 %v1917, 16
    %v2173 = vrot.slane %v2171, 4
    %v2174 = vor.u32 %v2173, %v2169
    %v2175 = vrot.slane %v2174, 4
    %v2177 = vshll.u32 %v1918, 16
    %v2179 = vrot.slane %v2177, 5
    %v2180 = vsel %vm92, %v2175, %v2179
    %v2182 = vshrl.u32 %v1919, 16
    %v2184 = vrot.slane %v2182, 4
    %v2185 = vshll.u32 %v1919, 16
    %v2187 = vrot.slane %v2185, 5
    %v2188 = vor.u32 %v2184, %v2187
    %v2189 = vrot.slane %v2188, 4
    %v2191 = vshll.u32 %v1920, 16
    %v2193 = vrot.slane %v2191, 5
    %v2194 = vsel %vm92, %v2189, %v2193
    %v2195 = vshrl.u32 %v1920, 16
    %v2197 = vrot.slane %v2195, 4
    %v2198 = vor.u32 %v2197, %v2193
    %v2199 = vrot.slane %v2198, 4
    %v2201 = vshll.u32 %v1921, 16
    %v2203 = vrot.slane %v2201, 5
    %v2204 = vsel %vm92, %v2199, %v2203
    %v2206 = vshrl.u32 %v1922, 16
    %v2208 = vrot.slane %v2206, 4
    %v2209 = vshll.u32 %v1922, 16
    %v2211 = vrot.slane %v2209, 5
    %v2212 = vor.u32 %v2208, %v2211
    %v2213 = vrot.slane %v2212, 4
    %v2215 = vshll.u32 %v1923, 16
    %v2217 = vrot.slane %v2215, 5
    %v2218 = vsel %vm92, %v2213, %v2217
    %v2219 = vshrl.u32 %v1923, 16
    %v2221 = vrot.slane %v2219, 4
    %v2222 = vor.u32 %v2221, %v2217
    %v2223 = vrot.slane %v2222, 4
    %v2225 = vshll.u32 %v1924, 16
    %v2227 = vrot.slane %v2225, 5
    %v2228 = vsel %vm92, %v2223, %v2227
    %v2230 = vshrl.u32 %v1925, 16
    %v2232 = vrot.slane %v2230, 4
    %v2233 = vshll.u32 %v1925, 16
    %v2235 = vrot.slane %v2233, 5
    %v2236 = vor.u32 %v2232, %v2235
    %v2237 = vrot.slane %v2236, 4
    %v2239 = vshll.u32 %v1926, 16
    %v2241 = vrot.slane %v2239, 5
    %v2242 = vsel %vm92, %v2237, %v2241
    %v2243 = vshrl.u32 %v1926, 16
    %v2245 = vrot.slane %v2243, 4
    %v2246 = vor.u32 %v2245, %v2241
    %v2247 = vrot.slane %v2246, 4
    %v2249 = vshll.u32 %v1927, 16
    %v2251 = vrot.slane %v2249, 5
    %v2252 = vsel %vm92, %v2247, %v2251
    %v2254 = vshrl.u32 %v1928, 16
    %v2256 = vrot.slane %v2254, 4
    %v2257 = vshll.u32 %v1928, 16
    %v2259 = vrot.slane %v2257, 5
    %v2260 = vor.u32 %v2256, %v2259
    %v2261 = vrot.slane %v2260, 4
    %v2263 = vshll.u32 %v1929, 16
    %v2265 = vrot.slane %v2263, 5
    %v2266 = vsel %vm92, %v2261, %v2265
    %v2267 = vshrl.u32 %v1929, 16
    %v2269 = vrot.slane %v2267, 4
    %v2270 = vor.u32 %v2269, %v2265
    %v2271 = vrot.slane %v2270, 4
    %v2273 = vshll.u32 %v1930, 16
    %v2275 = vrot.slane %v2273, 5
    %v2276 = vsel %vm92, %v2271, %v2275
    %v2278 = vshrl.u32 %v1931, 16
    %v2280 = vrot.slane %v2278, 4
    %v2281 = vshll.u32 %v1931, 16
    %v2283 = vrot.slane %v2281, 5
    %v2284 = vor.u32 %v2280, %v2283
    %v2285 = vrot.slane %v2284, 4
    %v2287 = vshll.u32 %v1932, 16
    %v2289 = vrot.slane %v2287, 5
    %v2290 = vsel %vm92, %v2285, %v2289
    %v2291 = vshrl.u32 %v1932, 16
    %v2293 = vrot.slane %v2291, 4
    %v2294 = vor.u32 %v2293, %v2289
    %v2295 = vrot.slane %v2294, 4
    %v2297 = vshll.u32 %v1933, 16
    %v2299 = vrot.slane %v2297, 5
    %v2300 = vsel %vm92, %v2295, %v2299
    %v2302 = vshrl.u32 %v1934, 16
    %v2304 = vrot.slane %v2302, 4
    %v2305 = vshll.u32 %v1934, 16
    %v2307 = vrot.slane %v2305, 5
    %v2308 = vor.u32 %v2304, %v2307
    %v2309 = vrot.slane %v2308, 4
    %v2311 = vshll.u32 %v1935, 16
    %v2313 = vrot.slane %v2311, 5
    %v2314 = vsel %vm92, %v2309, %v2313
    %v2315 = vshrl.u32 %v1935, 16
    %v2317 = vrot.slane %v2315, 4
    %v2318 = vor.u32 %v2317, %v2313
    %v2319 = vrot.slane %v2318, 4
    %v2321 = vshll.u32 %v1936, 16
    %v2323 = vrot.slane %v2321, 5
    %v2324 = vsel %vm92, %v2319, %v2323
    %v2325 = vunpack.c.l.b16 %v1954
    %v2326 = vunpack.c.l.b16 %v1964
    %v2327 = vunpack.c.l.b16 %v1978
    %v2328 = vunpack.c.l.b16 %v1988
    %v2329 = vunpack.c.l.b16 %v2002
    %v2330 = vunpack.c.l.b16 %v2012
    %v2331 = vunpack.c.l.b16 %v2026
    %v2332 = vunpack.c.l.b16 %v2036
    %v2333 = vunpack.c.l.b16 %v2050
    %v2334 = vunpack.c.l.b16 %v2060
    %v2335 = vunpack.c.l.b16 %v2074
    %v2336 = vunpack.c.l.b16 %v2084
    %v2337 = vunpack.c.l.b16 %v2098
    %v2338 = vunpack.c.l.b16 %v2108
    %v2339 = vunpack.c.l.b16 %v2122
    %v2340 = vunpack.c.l.b16 %v2132
    %v2341 = vunpack.c.l.b16 %v2146
    %v2342 = vunpack.c.l.b16 %v2156
    %v2343 = vunpack.c.l.b16 %v2170
    %v2344 = vunpack.c.l.b16 %v2180
    %v2345 = vunpack.c.l.b16 %v2194
    %v2346 = vunpack.c.l.b16 %v2204
    %v2347 = vunpack.c.l.b16 %v2218
    %v2348 = vunpack.c.l.b16 %v2228
    %v2349 = vunpack.c.l.b16 %v2242
    %v2350 = vunpack.c.l.b16 %v2252
    %v2351 = vunpack.c.l.b16 %v2266
    %v2352 = vunpack.c.l.b16 %v2276
    %v2353 = vunpack.c.l.b16 %v2290
    %v2354 = vunpack.c.l.b16 %v2300
    %v2355 = vunpack.c.l.b16 %v2314
    %v2356 = vunpack.c.l.b16 %v2324
    %v2357 = vpack.c.b16 %v2326, %v2325
    %v2358 = vpack.c.b16 %v2328, %v2327
    %v2359 = vpack.c.b16 %v2330, %v2329
    %v2360 = vpack.c.b16 %v2332, %v2331
    %v2361 = vpack.c.b16 %v2334, %v2333
    %v2362 = vpack.c.b16 %v2336, %v2335
    %v2363 = vpack.c.b16 %v2338, %v2337
    %v2364 = vpack.c.b16 %v2340, %v2339
    %v2365 = vpack.c.b16 %v2342, %v2341
    %v2366 = vpack.c.b16 %v2344, %v2343
    %v2367 = vpack.c.b16 %v2346, %v2345
    %v2368 = vpack.c.b16 %v2348, %v2347
    %v2369 = vpack.c.b16 %v2350, %v2349
    %v2370 = vpack.c.b16 %v2352, %v2351
    %v2371 = vpack.c.b16 %v2354, %v2353
    %v2372 = vpack.c.b16 %v2356, %v2355
    %v2377 = vunpack.c.l.b16 %v1937
    %v2378 = vunpack.c.l.b16 %v1938
    %v2379 = vunpack.c.l.b16 %v1939
    %v2380 = vunpack.c.l.b16 %v1940
    %v2381 = vpack.c.b16 %v2378, %v2377
    %v2382 = vpack.c.b16 %v2380, %v2379
    %v2386 = vsel %vm537, %v2357, 0
    %v2389 = vsel %vm537, %v2358, 0
    %v2392 = vsel %vm537, %v2359, 0
    %v2395 = vsel %vm537, %v2360, 0
    %v2398 = vsel %vm537, %v2361, 0
    %v2401 = vsel %vm537, %v2362, 0
    %v2404 = vsel %vm537, %v2363, 0
    %v2407 = vsel %vm537, %v2364, 0
    %v2410 = vsel %vm537, %v2365, 0
    %v2413 = vsel %vm537, %v2366, 0
    %v2416 = vsel %vm537, %v2367, 0
    %v2419 = vsel %vm537, %v2368, 0
    %v2422 = vsel %vm537, %v2369, 0
    %v2425 = vsel %vm537, %v2370, 0
    %v2428 = vsel %vm537, %v2371, 0
    %v2431 = vsel %vm537, %v2372, 0
    %2433 = vmatprep.subr.bf16.mxu0 0
    %2434 = vmatpush1.bf16.msra.mxu0 %v2381
    %2435 = vmatprep.subr.bf16.mxu0 0
    %2436 = vmatpush1.bf16.msra.mxu0 %v2382
    %2437 = vmatprep.subr.bf16.mxu0 0
    %2438 = vmatpush1.bf16.msra.mxu0 0
    %2439 = vmatprep.subr.bf16.mxu0 0
    %2440 = vmatpush1.bf16.msra.mxu0 0
    %2441 = vmatprep.subr.bf16.mxu0 0
    %2442 = vmatpush1.bf16.msra.mxu0 0
    %2443 = vmatprep.subr.bf16.mxu0 0
    %2444 = vmatpush1.bf16.msra.mxu0 0
    %2445 = vmatprep.subr.bf16.mxu0 0
    %2446 = vmatpush1.bf16.msra.mxu0 0
    %2447 = vmatprep.subr.bf16.mxu0 0
    %2448 = vmatpush1.bf16.msra.mxu0 0
    %2449 = vmatprep.subr.bf16.mxu0 0
    %2450 = vmatpush1.bf16.msra.mxu0 0
    %2451 = vmatprep.subr.bf16.mxu0 0
    %2452 = vmatpush1.bf16.msra.mxu0 0
    %2453 = vmatprep.subr.bf16.mxu0 0
    %2454 = vmatpush1.bf16.msra.mxu0 0
    %2455 = vmatprep.subr.bf16.mxu0 0
    %2456 = vmatpush1.bf16.msra.mxu0 0
    %2457 = vmatprep.subr.bf16.mxu0 0
    %2458 = vmatpush1.bf16.msra.mxu0 0
    %2459 = vmatprep.subr.bf16.mxu0 0
    %2460 = vmatpush1.bf16.msra.mxu0 0
    %2461 = vmatprep.subr.bf16.mxu0 0
    %2462 = vmatpush1.bf16.msra.mxu0 0
    %2463 = vmatprep.subr.bf16.mxu0 0
    %2464 = vmatpush1.bf16.msra.mxu0 0
    %2465 = vmatprep.mubr.bf16.mxu0 0
    %2466 = vmatmul.mubr.bf16.gmra.mrb[0].mxu0 %v2386
    %v2467 = vpop.f32.mrb[0].mxu0
    %v2468 = vadd.f32 0.0, %v2467
    %v2469 = vpop.f32.mrb[0].mxu0
    %v2470 = vpop.f32.mrb[0].mxu0
    %v2471 = vadd.f32 0.0, %v2470
    %v2472 = vpop.f32.mrb[0].mxu0
    %2473 = vmatprep.mubr.bf16.mxu0 0
    %2474 = vmatmul.mubr.bf16.gmra.mrb[0].mxu0 %v2389
    %v2475 = vpop.f32.mrb[0].mxu0
    %v2476 = vadd.f32 0.0, %v2475
    %v2477 = vpop.f32.mrb[0].mxu0
    %v2478 = vpop.f32.mrb[0].mxu0
    %v2479 = vadd.f32 0.0, %v2478
    %v2480 = vpop.f32.mrb[0].mxu0
    %2481 = vmatprep.mubr.bf16.mxu0 0
    %2482 = vmatmul.mubr.bf16.gmra.mrb[0].mxu0 %v2392
    %v2483 = vpop.f32.mrb[0].mxu0
    %v2484 = vadd.f32 0.0, %v2483
    %v2485 = vpop.f32.mrb[0].mxu0
    %v2486 = vpop.f32.mrb[0].mxu0
    %v2487 = vadd.f32 0.0, %v2486
    %v2488 = vpop.f32.mrb[0].mxu0
    %2489 = vmatprep.mubr.bf16.mxu0 0
    %2490 = vmatmul.mubr.bf16.gmra.mrb[0].mxu0 %v2395
    %v2491 = vpop.f32.mrb[0].mxu0
    %v2492 = vadd.f32 0.0, %v2491
    %v2493 = vpop.f32.mrb[0].mxu0
    %v2494 = vpop.f32.mrb[0].mxu0
    %v2495 = vadd.f32 0.0, %v2494
    %v2496 = vpop.f32.mrb[0].mxu0
    %2497 = vmatprep.mubr.bf16.mxu0 0
    %2498 = vmatmul.mubr.bf16.gmra.mrb[0].mxu0 %v2398
    %v2499 = vpop.f32.mrb[0].mxu0
    %v2500 = vadd.f32 0.0, %v2499
    %v2501 = vpop.f32.mrb[0].mxu0
    %v2502 = vpop.f32.mrb[0].mxu0
    %v2503 = vadd.f32 0.0, %v2502
    %v2504 = vpop.f32.mrb[0].mxu0
    %2505 = vmatprep.mubr.bf16.mxu0 0
    %2506 = vmatmul.mubr.bf16.gmra.mrb[0].mxu0 %v2401
    %v2507 = vpop.f32.mrb[0].mxu0
    %v2508 = vadd.f32 0.0, %v2507
    %v2509 = vpop.f32.mrb[0].mxu0
    %v2510 = vpop.f32.mrb[0].mxu0
    %v2511 = vadd.f32 0.0, %v2510
    %v2512 = vpop.f32.mrb[0].mxu0
    %2513 = vmatprep.mubr.bf16.mxu0 0
    %2514 = vmatmul.mubr.bf16.gmra.mrb[0].mxu0 %v2404
    %v2515 = vpop.f32.mrb[0].mxu0
    %v2516 = vadd.f32 0.0, %v2515
    %v2517 = vpop.f32.mrb[0].mxu0
    %v2518 = vpop.f32.mrb[0].mxu0
    %v2519 = vadd.f32 0.0, %v2518
    %v2520 = vpop.f32.mrb[0].mxu0
    %2521 = vmatprep.mubr.bf16.mxu0 0
    %2522 = vmatmul.mubr.bf16.gmra.mrb[0].mxu0 %v2407
    %v2523 = vpop.f32.mrb[0].mxu0
    %v2524 = vadd.f32 0.0, %v2523
    %v2525 = vpop.f32.mrb[0].mxu0
    %v2526 = vpop.f32.mrb[0].mxu0
    %v2527 = vadd.f32 0.0, %v2526
    %v2528 = vpop.f32.mrb[0].mxu0
    %2529 = vmatprep.mubr.bf16.mxu0 0
    %2530 = vmatmul.mubr.bf16.gmra.mrb[0].mxu0 %v2410
    %v2531 = vpop.f32.mrb[0].mxu0
    %v2532 = vadd.f32 0.0, %v2531
    %v2533 = vpop.f32.mrb[0].mxu0
    %v2534 = vpop.f32.mrb[0].mxu0
    %v2535 = vadd.f32 0.0, %v2534
    %v2536 = vpop.f32.mrb[0].mxu0
    %2537 = vmatprep.mubr.bf16.mxu0 0
    %2538 = vmatmul.mubr.bf16.gmra.mrb[0].mxu0 %v2413
    %v2539 = vpop.f32.mrb[0].mxu0
    %v2540 = vadd.f32 0.0, %v2539
    %v2541 = vpop.f32.mrb[0].mxu0
    %v2542 = vpop.f32.mrb[0].mxu0
    %v2543 = vadd.f32 0.0, %v2542
    %v2544 = vpop.f32.mrb[0].mxu0
    %2545 = vmatprep.mubr.bf16.mxu0 0
    %2546 = vmatmul.mubr.bf16.gmra.mrb[0].mxu0 %v2416
    %v2547 = vpop.f32.mrb[0].mxu0
    %v2548 = vadd.f32 0.0, %v2547
    %v2549 = vpop.f32.mrb[0].mxu0
    %v2550 = vpop.f32.mrb[0].mxu0
    %v2551 = vadd.f32 0.0, %v2550
    %v2552 = vpop.f32.mrb[0].mxu0
    %2553 = vmatprep.mubr.bf16.mxu0 0
    %2554 = vmatmul.mubr.bf16.gmra.mrb[0].mxu0 %v2419
    %v2555 = vpop.f32.mrb[0].mxu0
    %v2556 = vadd.f32 0.0, %v2555
    %v2557 = vpop.f32.mrb[0].mxu0
    %v2558 = vpop.f32.mrb[0].mxu0
    %v2559 = vadd.f32 0.0, %v2558
    %v2560 = vpop.f32.mrb[0].mxu0
    %2561 = vmatprep.mubr.bf16.mxu0 0
    %2562 = vmatmul.mubr.bf16.gmra.mrb[0].mxu0 %v2422
    %v2563 = vpop.f32.mrb[0].mxu0
    %v2564 = vadd.f32 0.0, %v2563
    %v2565 = vpop.f32.mrb[0].mxu0
    %v2566 = vpop.f32.mrb[0].mxu0
    %v2567 = vadd.f32 0.0, %v2566
    %v2568 = vpop.f32.mrb[0].mxu0
    %2569 = vmatprep.mubr.bf16.mxu0 0
    %2570 = vmatmul.mubr.bf16.gmra.mrb[0].mxu0 %v2425
    %v2571 = vpop.f32.mrb[0].mxu0
    %v2572 = vadd.f32 0.0, %v2571
    %v2573 = vpop.f32.mrb[0].mxu0
    %v2574 = vpop.f32.mrb[0].mxu0
    %v2575 = vadd.f32 0.0, %v2574
    %v2576 = vpop.f32.mrb[0].mxu0
    %2577 = vmatprep.mubr.bf16.mxu0 0
    %2578 = vmatmul.mubr.bf16.gmra.mrb[0].mxu0 %v2428
    %v2579 = vpop.f32.mrb[0].mxu0
    %v2580 = vadd.f32 0.0, %v2579
    %v2581 = vpop.f32.mrb[0].mxu0
    %v2582 = vpop.f32.mrb[0].mxu0
    %v2583 = vadd.f32 0.0, %v2582
    %v2584 = vpop.f32.mrb[0].mxu0
    %2585 = vmatprep.mubr.bf16.mxu0 0
    %2586 = vmatmul.mubr.bf16.gmra.mrb[0].mxu0 %v2431
    %v2587 = vpop.f32.mrb[0].mxu0
    %v2588 = vadd.f32 0.0, %v2587
    %v2589 = vpop.f32.mrb[0].mxu0
    %v2590 = vpop.f32.mrb[0].mxu0
    %v2591 = vadd.f32 0.0, %v2590
    %v2592 = vpop.f32.mrb[0].mxu0
    %2593 = vdwg.mxu0
    %v2594 = vadd.f32 %v1857, %v2468
    %v2595 = vadd.f32 %v1858, %v2471
    %v2596 = vadd.f32 %v1859, %v2476
    %v2597 = vadd.f32 %v1860, %v2479
    %v2598 = vadd.f32 %v1861, %v2484
    %v2599 = vadd.f32 %v1862, %v2487
    %v2600 = vadd.f32 %v1863, %v2492
    %v2601 = vadd.f32 %v1864, %v2495
    %v2602 = vadd.f32 %v1865, %v2500
    %v2603 = vadd.f32 %v1866, %v2503
    %v2604 = vadd.f32 %v1867, %v2508
    %v2605 = vadd.f32 %v1868, %v2511
    %v2606 = vadd.f32 %v1869, %v2516
    %v2607 = vadd.f32 %v1870, %v2519
    %v2608 = vadd.f32 %v1871, %v2524
    %v2609 = vadd.f32 %v1872, %v2527
    %v2610 = vadd.f32 %v1873, %v2532
    %v2611 = vadd.f32 %v1874, %v2535
    %v2612 = vadd.f32 %v1875, %v2540
    %v2613 = vadd.f32 %v1876, %v2543
    %v2614 = vadd.f32 %v1877, %v2548
    %v2615 = vadd.f32 %v1878, %v2551
    %v2616 = vadd.f32 %v1879, %v2556
    %v2617 = vadd.f32 %v1880, %v2559
    %v2618 = vadd.f32 %v1881, %v2564
    %v2619 = vadd.f32 %v1882, %v2567
    %v2620 = vadd.f32 %v1883, %v2572
    %v2621 = vadd.f32 %v1884, %v2575
    %v2622 = vadd.f32 %v1885, %v2580
    %v2623 = vadd.f32 %v1886, %v2583
    %v2624 = vadd.f32 %v1887, %v2588
    %v2625 = vadd.f32 %v1888, %v2591
    %v2626 = vld [vmem:[%s1519] sm:$0xe]
    %v2627 = vld [vmem:[%s1519 + $0xc] sm:$0xe]
    %v2628 = vld [vmem:[%s1519 + $0x18] sm:$0xe]
    %v2629 = vld [vmem:[%s1519 + $0x24] sm:$0xe]
    %v2630 = vld [vmem:[%s1519 + $0x30] sm:$0xe]
    %v2631 = vld [vmem:[%s1519 + $0x3c] sm:$0xe]
    %v2632 = vld [vmem:[%s1519 + $0x48] sm:$0xe]
    %v2633 = vld [vmem:[%s1519 + $0x54] sm:$0xe]
    %v2634 = vld [vmem:[%s1519 + $0x60] sm:$0xe]
    %v2635 = vld [vmem:[%s1519 + $0x6c] sm:$0xe]
    %v2636 = vld [vmem:[%s1519 + $0x78] sm:$0xe]
    %v2637 = vld [vmem:[%s1519 + $0x84] sm:$0xe]
    %v2638 = vld [vmem:[%s1519 + $0x90] sm:$0xe]
    %v2639 = vld [vmem:[%s1519 + $0x9c] sm:$0xe]
    %v2640 = vld [vmem:[%s1519 + $0xa8] sm:$0xe]
    %v2641 = vld [vmem:[%s1519 + $0xb4] sm:$0xe]
    %v2642 = vld [vmem:[%s1 + $0x50] sm:$0xf]
    %v2643 = vld [vmem:[%s1 + $0x54] sm:$0xf]
    %v2644 = vld [vmem:[%s1 + $0x58] sm:$0xf]
    %v2645 = vld [vmem:[%s1 + $0x5c] sm:$0xf]
    %v2694 = vrot.slane %v2626, 5
    %v2695 = vrot.slane %v2694, 4
    %v2696 = vrot.slane %v1890, 5
    %v2697 = vsel %vm1102, %v2695, %v2696
    %v2698 = vrot.slane %v2696, 4
    %v2699 = vrot.slane %v1891, 5
    %v2700 = vsel %vm1102, %v2698, %v2699
    %v2701 = vrot.slane %v2627, 5
    %v2702 = vrot.slane %v2701, 4
    %v2703 = vrot.slane %v1893, 5
    %v2704 = vsel %vm1102, %v2702, %v2703
    %v2705 = vrot.slane %v2703, 4
    %v2706 = vrot.slane %v1894, 5
    %v2707 = vsel %vm1102, %v2705, %v2706
    %v2708 = vrot.slane %v2628, 5
    %v2709 = vrot.slane %v2708, 4
    %v2710 = vrot.slane %v1896, 5
    %v2711 = vsel %vm1102, %v2709, %v2710
    %v2712 = vrot.slane %v2710, 4
    %v2713 = vrot.slane %v1897, 5
    %v2714 = vsel %vm1102, %v2712, %v2713
    %v2715 = vrot.slane %v2629, 5
    %v2716 = vrot.slane %v2715, 4
    %v2717 = vrot.slane %v1899, 5
    %v2718 = vsel %vm1102, %v2716, %v2717
    %v2719 = vrot.slane %v2717, 4
    %v2720 = vrot.slane %v1900, 5
    %v2721 = vsel %vm1102, %v2719, %v2720
    %v2722 = vrot.slane %v2630, 5
    %v2723 = vrot.slane %v2722, 4
    %v2724 = vrot.slane %v1902, 5
    %v2725 = vsel %vm1102, %v2723, %v2724
    %v2726 = vrot.slane %v2724, 4
    %v2727 = vrot.slane %v1903, 5
    %v2728 = vsel %vm1102, %v2726, %v2727
    %v2729 = vrot.slane %v2631, 5
    %v2730 = vrot.slane %v2729, 4
    %v2731 = vrot.slane %v1905, 5
    %v2732 = vsel %vm1102, %v2730, %v2731
    %v2733 = vrot.slane %v2731, 4
    %v2734 = vrot.slane %v1906, 5
    %v2735 = vsel %vm1102, %v2733, %v2734
    %v2736 = vrot.slane %v2632, 5
    %v2737 = vrot.slane %v2736, 4
    %v2738 = vrot.slane %v1908, 5
    %v2739 = vsel %vm1102, %v2737, %v2738
    %v2740 = vrot.slane %v2738, 4
    %v2741 = vrot.slane %v1909, 5
    %v2742 = vsel %vm1102, %v2740, %v2741
    %v2743 = vrot.slane %v2633, 5
    %v2744 = vrot.slane %v2743, 4
    %v2745 = vrot.slane %v1911, 5
    %v2746 = vsel %vm1102, %v2744, %v2745
    %v2747 = vrot.slane %v2745, 4
    %v2748 = vrot.slane %v1912, 5
    %v2749 = vsel %vm1102, %v2747, %v2748
    %v2750 = vrot.slane %v2634, 5
    %v2751 = vrot.slane %v2750, 4
    %v2752 = vrot.slane %v1914, 5
    %v2753 = vsel %vm1102, %v2751, %v2752
    %v2754 = vrot.slane %v2752, 4
    %v2755 = vrot.slane %v1915, 5
    %v2756 = vsel %vm1102, %v2754, %v2755
    %v2757 = vrot.slane %v2635, 5
    %v2758 = vrot.slane %v2757, 4
    %v2759 = vrot.slane %v1917, 5
    %v2760 = vsel %vm1102, %v2758, %v2759
    %v2761 = vrot.slane %v2759, 4
    %v2762 = vrot.slane %v1918, 5
    %v2763 = vsel %vm1102, %v2761, %v2762
    %v2764 = vrot.slane %v2636, 5
    %v2765 = vrot.slane %v2764, 4
    %v2766 = vrot.slane %v1920, 5
    %v2767 = vsel %vm1102, %v2765, %v2766
    %v2768 = vrot.slane %v2766, 4
    %v2769 = vrot.slane %v1921, 5
    %v2770 = vsel %vm1102, %v2768, %v2769
    %v2771 = vrot.slane %v2637, 5
    %v2772 = vrot.slane %v2771, 4
    %v2773 = vrot.slane %v1923, 5
    %v2774 = vsel %vm1102, %v2772, %v2773
    %v2775 = vrot.slane %v2773, 4
    %v2776 = vrot.slane %v1924, 5
    %v2777 = vsel %vm1102, %v2775, %v2776
    %v2778 = vrot.slane %v2638, 5
    %v2779 = vrot.slane %v2778, 4
    %v2780 = vrot.slane %v1926, 5
    %v2781 = vsel %vm1102, %v2779, %v2780
    %v2782 = vrot.slane %v2780, 4
    %v2783 = vrot.slane %v1927, 5
    %v2784 = vsel %vm1102, %v2782, %v2783
    %v2785 = vrot.slane %v2639, 5
    %v2786 = vrot.slane %v2785, 4
    %v2787 = vrot.slane %v1929, 5
    %v2788 = vsel %vm1102, %v2786, %v2787
    %v2789 = vrot.slane %v2787, 4
    %v2790 = vrot.slane %v1930, 5
    %v2791 = vsel %vm1102, %v2789, %v2790
    %v2792 = vrot.slane %v2640, 5
    %v2793 = vrot.slane %v2792, 4
    %v2794 = vrot.slane %v1932, 5
    %v2795 = vsel %vm1102, %v2793, %v2794
    %v2796 = vrot.slane %v2794, 4
    %v2797 = vrot.slane %v1933, 5
    %v2798 = vsel %vm1102, %v2796, %v2797
    %v2799 = vrot.slane %v2641, 5
    %v2800 = vrot.slane %v2799, 4
    %v2801 = vrot.slane %v1935, 5
    %v2802 = vsel %vm1102, %v2800, %v2801
    %v2803 = vrot.slane %v2801, 4
    %v2804 = vrot.slane %v1936, 5
    %v2805 = vsel %vm1102, %v2803, %v2804
    %v2806 = vunpack.c.l.b16 %v2697
    %v2807 = vunpack.c.l.b16 %v2700
    %v2808 = vunpack.c.l.b16 %v2704
    %v2809 = vunpack.c.l.b16 %v2707
    %v2810 = vunpack.c.l.b16 %v2711
    %v2811 = vunpack.c.l.b16 %v2714
    %v2812 = vunpack.c.l.b16 %v2718
    %v2813 = vunpack.c.l.b16 %v2721
    %v2814 = vunpack.c.l.b16 %v2725
    %v2815 = vunpack.c.l.b16 %v2728
    %v2816 = vunpack.c.l.b16 %v2732
    %v2817 = vunpack.c.l.b16 %v2735
    %v2818 = vunpack.c.l.b16 %v2739
    %v2819 = vunpack.c.l.b16 %v2742
    %v2820 = vunpack.c.l.b16 %v2746
    %v2821 = vunpack.c.l.b16 %v2749
    %v2822 = vunpack.c.l.b16 %v2753
    %v2823 = vunpack.c.l.b16 %v2756
    %v2824 = vunpack.c.l.b16 %v2760
    %v2825 = vunpack.c.l.b16 %v2763
    %v2826 = vunpack.c.l.b16 %v2767
    %v2827 = vunpack.c.l.b16 %v2770
    %v2828 = vunpack.c.l.b16 %v2774
    %v2829 = vunpack.c.l.b16 %v2777
    %v2830 = vunpack.c.l.b16 %v2781
    %v2831 = vunpack.c.l.b16 %v2784
    %v2832 = vunpack.c.l.b16 %v2788
    %v2833 = vunpack.c.l.b16 %v2791
    %v2834 = vunpack.c.l.b16 %v2795
    %v2835 = vunpack.c.l.b16 %v2798
    %v2836 = vunpack.c.l.b16 %v2802
    %v2837 = vunpack.c.l.b16 %v2805
    %v2838 = vpack.c.b16 %v2807, %v2806
    %v2839 = vpack.c.b16 %v2809, %v2808
    %v2840 = vpack.c.b16 %v2811, %v2810
    %v2841 = vpack.c.b16 %v2813, %v2812
    %v2842 = vpack.c.b16 %v2815, %v2814
    %v2843 = vpack.c.b16 %v2817, %v2816
    %v2844 = vpack.c.b16 %v2819, %v2818
    %v2845 = vpack.c.b16 %v2821, %v2820
    %v2846 = vpack.c.b16 %v2823, %v2822
    %v2847 = vpack.c.b16 %v2825, %v2824
    %v2848 = vpack.c.b16 %v2827, %v2826
    %v2849 = vpack.c.b16 %v2829, %v2828
    %v2850 = vpack.c.b16 %v2831, %v2830
    %v2851 = vpack.c.b16 %v2833, %v2832
    %v2852 = vpack.c.b16 %v2835, %v2834
    %v2853 = vpack.c.b16 %v2837, %v2836
    %v2858 = vunpack.c.l.b16 %v2642
    %v2859 = vunpack.c.l.b16 %v2643
    %v2860 = vunpack.c.l.b16 %v2644
    %v2861 = vunpack.c.l.b16 %v2645
    %v2862 = vpack.c.b16 %v2859, %v2858
    %v2863 = vpack.c.b16 %v2861, %v2860
    %v2867 = vsel %vm537, %v2838, 0
    %v2870 = vsel %vm537, %v2839, 0
    %v2873 = vsel %vm537, %v2840, 0
    %v2876 = vsel %vm537, %v2841, 0
    %v2879 = vsel %vm537, %v2842, 0
    %v2882 = vsel %vm537, %v2843, 0
    %v2885 = vsel %vm537, %v2844, 0
    %v2888 = vsel %vm537, %v2845, 0
    %v2891 = vsel %vm537, %v2846, 0
    %v2894 = vsel %vm537, %v2847, 0
    %v2897 = vsel %vm537, %v2848, 0
    %v2900 = vsel %vm537, %v2849, 0
    %v2903 = vsel %vm537, %v2850, 0
    %v2906 = vsel %vm537, %v2851, 0
    %v2909 = vsel %vm537, %v2852, 0
    %v2912 = vsel %vm537, %v2853, 0
    %2914 = vmatprep.subr.bf16.mxu0 0
    %2915 = vmatpush1.bf16.msra.mxu0 %v2862
    %2916 = vmatprep.subr.bf16.mxu0 0
    %2917 = vmatpush1.bf16.msra.mxu0 %v2863
    %2918 = vmatprep.subr.bf16.mxu0 0
    %2919 = vmatpush1.bf16.msra.mxu0 0
    %2920 = vmatprep.subr.bf16.mxu0 0
    %2921 = vmatpush1.bf16.msra.mxu0 0
    %2922 = vmatprep.subr.bf16.mxu0 0
    %2923 = vmatpush1.bf16.msra.mxu0 0
    %2924 = vmatprep.subr.bf16.mxu0 0
    %2925 = vmatpush1.bf16.msra.mxu0 0
    %2926 = vmatprep.subr.bf16.mxu0 0
    %2927 = vmatpush1.bf16.msra.mxu0 0
    %2928 = vmatprep.subr.bf16.mxu0 0
    %2929 = vmatpush1.bf16.msra.mxu0 0
    %2930 = vmatprep.subr.bf16.mxu0 0
    %2931 = vmatpush1.bf16.msra.mxu0 0
    %2932 = vmatprep.subr.bf16.mxu0 0
    %2933 = vmatpush1.bf16.msra.mxu0 0
    %2934 = vmatprep.subr.bf16.mxu0 0
    %2935 = vmatpush1.bf16.msra.mxu0 0
    %2936 = vmatprep.subr.bf16.mxu0 0
    %2937 = vmatpush1.bf16.msra.mxu0 0
    %2938 = vmatprep.subr.bf16.mxu0 0
    %2939 = vmatpush1.bf16.msra.mxu0 0
    %2940 = vmatprep.subr.bf16.mxu0 0
    %2941 = vmatpush1.bf16.msra.mxu0 0
    %2942 = vmatprep.subr.bf16.mxu0 0
    %2943 = vmatpush1.bf16.msra.mxu0 0
    %2944 = vmatprep.subr.bf16.mxu0 0
    %2945 = vmatpush1.bf16.msra.mxu0 0
    %2946 = vmatprep.mubr.bf16.mxu0 0
    %2947 = vmatmul.mubr.bf16.gmra.mrb[0].mxu0 %v2867
    %v2948 = vpop.f32.mrb[0].mxu0
    %v2949 = vadd.f32 0.0, %v2948
    %v2950 = vpop.f32.mrb[0].mxu0
    %v2951 = vpop.f32.mrb[0].mxu0
    %v2952 = vadd.f32 0.0, %v2951
    %v2953 = vpop.f32.mrb[0].mxu0
    %2954 = vmatprep.mubr.bf16.mxu0 0
    %2955 = vmatmul.mubr.bf16.gmra.mrb[0].mxu0 %v2870
    %v2956 = vpop.f32.mrb[0].mxu0
    %v2957 = vadd.f32 0.0, %v2956
    %v2958 = vpop.f32.mrb[0].mxu0
    %v2959 = vpop.f32.mrb[0].mxu0
    %v2960 = vadd.f32 0.0, %v2959
    %v2961 = vpop.f32.mrb[0].mxu0
    %2962 = vmatprep.mubr.bf16.mxu0 0
    %2963 = vmatmul.mubr.bf16.gmra.mrb[0].mxu0 %v2873
    %v2964 = vpop.f32.mrb[0].mxu0
    %v2965 = vadd.f32 0.0, %v2964
    %v2966 = vpop.f32.mrb[0].mxu0
    %v2967 = vpop.f32.mrb[0].mxu0
    %v2968 = vadd.f32 0.0, %v2967
    %v2969 = vpop.f32.mrb[0].mxu0
    %2970 = vmatprep.mubr.bf16.mxu0 0
    %2971 = vmatmul.mubr.bf16.gmra.mrb[0].mxu0 %v2876
    %v2972 = vpop.f32.mrb[0].mxu0
    %v2973 = vadd.f32 0.0, %v2972
    %v2974 = vpop.f32.mrb[0].mxu0
    %v2975 = vpop.f32.mrb[0].mxu0
    %v2976 = vadd.f32 0.0, %v2975
    %v2977 = vpop.f32.mrb[0].mxu0
    %2978 = vmatprep.mubr.bf16.mxu0 0
    %2979 = vmatmul.mubr.bf16.gmra.mrb[0].mxu0 %v2879
    %v2980 = vpop.f32.mrb[0].mxu0
    %v2981 = vadd.f32 0.0, %v2980
    %v2982 = vpop.f32.mrb[0].mxu0
    %v2983 = vpop.f32.mrb[0].mxu0
    %v2984 = vadd.f32 0.0, %v2983
    %v2985 = vpop.f32.mrb[0].mxu0
    %2986 = vmatprep.mubr.bf16.mxu0 0
    %2987 = vmatmul.mubr.bf16.gmra.mrb[0].mxu0 %v2882
    %v2988 = vpop.f32.mrb[0].mxu0
    %v2989 = vadd.f32 0.0, %v2988
    %v2990 = vpop.f32.mrb[0].mxu0
    %v2991 = vpop.f32.mrb[0].mxu0
    %v2992 = vadd.f32 0.0, %v2991
    %v2993 = vpop.f32.mrb[0].mxu0
    %2994 = vmatprep.mubr.bf16.mxu0 0
    %2995 = vmatmul.mubr.bf16.gmra.mrb[0].mxu0 %v2885
    %v2996 = vpop.f32.mrb[0].mxu0
    %v2997 = vadd.f32 0.0, %v2996
    %v2998 = vpop.f32.mrb[0].mxu0
    %v2999 = vpop.f32.mrb[0].mxu0
    %v3000 = vadd.f32 0.0, %v2999
    %v3001 = vpop.f32.mrb[0].mxu0
    %3002 = vmatprep.mubr.bf16.mxu0 0
    %3003 = vmatmul.mubr.bf16.gmra.mrb[0].mxu0 %v2888
    %v3004 = vpop.f32.mrb[0].mxu0
    %v3005 = vadd.f32 0.0, %v3004
    %v3006 = vpop.f32.mrb[0].mxu0
    %v3007 = vpop.f32.mrb[0].mxu0
    %v3008 = vadd.f32 0.0, %v3007
    %v3009 = vpop.f32.mrb[0].mxu0
    %3010 = vmatprep.mubr.bf16.mxu0 0
    %3011 = vmatmul.mubr.bf16.gmra.mrb[0].mxu0 %v2891
    %v3012 = vpop.f32.mrb[0].mxu0
    %v3013 = vadd.f32 0.0, %v3012
    %v3014 = vpop.f32.mrb[0].mxu0
    %v3015 = vpop.f32.mrb[0].mxu0
    %v3016 = vadd.f32 0.0, %v3015
    %v3017 = vpop.f32.mrb[0].mxu0
    %3018 = vmatprep.mubr.bf16.mxu0 0
    %3019 = vmatmul.mubr.bf16.gmra.mrb[0].mxu0 %v2894
    %v3020 = vpop.f32.mrb[0].mxu0
    %v3021 = vadd.f32 0.0, %v3020
    %v3022 = vpop.f32.mrb[0].mxu0
    %v3023 = vpop.f32.mrb[0].mxu0
    %v3024 = vadd.f32 0.0, %v3023
    %v3025 = vpop.f32.mrb[0].mxu0
    %3026 = vmatprep.mubr.bf16.mxu0 0
    %3027 = vmatmul.mubr.bf16.gmra.mrb[0].mxu0 %v2897
    %v3028 = vpop.f32.mrb[0].mxu0
    %v3029 = vadd.f32 0.0, %v3028
    %v3030 = vpop.f32.mrb[0].mxu0
    %v3031 = vpop.f32.mrb[0].mxu0
    %v3032 = vadd.f32 0.0, %v3031
    %v3033 = vpop.f32.mrb[0].mxu0
    %3034 = vmatprep.mubr.bf16.mxu0 0
    %3035 = vmatmul.mubr.bf16.gmra.mrb[0].mxu0 %v2900
    %v3036 = vpop.f32.mrb[0].mxu0
    %v3037 = vadd.f32 0.0, %v3036
    %v3038 = vpop.f32.mrb[0].mxu0
    %v3039 = vpop.f32.mrb[0].mxu0
    %v3040 = vadd.f32 0.0, %v3039
    %v3041 = vpop.f32.mrb[0].mxu0
    %3042 = vmatprep.mubr.bf16.mxu0 0
    %3043 = vmatmul.mubr.bf16.gmra.mrb[0].mxu0 %v2903
    %v3044 = vpop.f32.mrb[0].mxu0
    %v3045 = vadd.f32 0.0, %v3044
    %v3046 = vpop.f32.mrb[0].mxu0
    %v3047 = vpop.f32.mrb[0].mxu0
    %v3048 = vadd.f32 0.0, %v3047
    %v3049 = vpop.f32.mrb[0].mxu0
    %3050 = vmatprep.mubr.bf16.mxu0 0
    %3051 = vmatmul.mubr.bf16.gmra.mrb[0].mxu0 %v2906
    %v3052 = vpop.f32.mrb[0].mxu0
    %v3053 = vadd.f32 0.0, %v3052
    %v3054 = vpop.f32.mrb[0].mxu0
    %v3055 = vpop.f32.mrb[0].mxu0
    %v3056 = vadd.f32 0.0, %v3055
    %v3057 = vpop.f32.mrb[0].mxu0
    %3058 = vmatprep.mubr.bf16.mxu0 0
    %3059 = vmatmul.mubr.bf16.gmra.mrb[0].mxu0 %v2909
    %v3060 = vpop.f32.mrb[0].mxu0
    %v3061 = vadd.f32 0.0, %v3060
    %v3062 = vpop.f32.mrb[0].mxu0
    %v3063 = vpop.f32.mrb[0].mxu0
    %v3064 = vadd.f32 0.0, %v3063
    %v3065 = vpop.f32.mrb[0].mxu0
    %3066 = vmatprep.mubr.bf16.mxu0 0
    %3067 = vmatmul.mubr.bf16.gmra.mrb[0].mxu0 %v2912
    %v3068 = vpop.f32.mrb[0].mxu0
    %v3069 = vadd.f32 0.0, %v3068
    %v3070 = vpop.f32.mrb[0].mxu0
    %v3071 = vpop.f32.mrb[0].mxu0
    %v3072 = vadd.f32 0.0, %v3071
    %v3073 = vpop.f32.mrb[0].mxu0
    %3074 = vdwg.mxu0
    %v3075 = vadd.f32 %v2594, %v2949
    %v3076 = vadd.f32 %v2595, %v2952
    %v3077 = vadd.f32 %v2596, %v2957
    %v3078 = vadd.f32 %v2597, %v2960
    %v3079 = vadd.f32 %v2598, %v2965
    %v3080 = vadd.f32 %v2599, %v2968
    %v3081 = vadd.f32 %v2600, %v2973
    %v3082 = vadd.f32 %v2601, %v2976
    %v3083 = vadd.f32 %v2602, %v2981
    %v3084 = vadd.f32 %v2603, %v2984
    %v3085 = vadd.f32 %v2604, %v2989
    %v3086 = vadd.f32 %v2605, %v2992
    %v3087 = vadd.f32 %v2606, %v2997
    %v3088 = vadd.f32 %v2607, %v3000
    %v3089 = vadd.f32 %v2608, %v3005
    %v3090 = vadd.f32 %v2609, %v3008
    %v3091 = vadd.f32 %v2610, %v3013
    %v3092 = vadd.f32 %v2611, %v3016
    %v3093 = vadd.f32 %v2612, %v3021
    %v3094 = vadd.f32 %v2613, %v3024
    %v3095 = vadd.f32 %v2614, %v3029
    %v3096 = vadd.f32 %v2615, %v3032
    %v3097 = vadd.f32 %v2616, %v3037
    %v3098 = vadd.f32 %v2617, %v3040
    %v3099 = vadd.f32 %v2618, %v3045
    %v3100 = vadd.f32 %v2619, %v3048
    %v3101 = vadd.f32 %v2620, %v3053
    %v3102 = vadd.f32 %v2621, %v3056
    %v3103 = vadd.f32 %v2622, %v3061
    %v3104 = vadd.f32 %v2623, %v3064
    %v3105 = vadd.f32 %v2624, %v3069
    %v3106 = vadd.f32 %v2625, %v3072
    %s3107 = sadd.s32 %s30, 2
    %s3108 = smul.u32 %s3107, 3
    %s3109 = smul.addr %s3108, 4
    %s3110 = scalar_lea.vmem [#allocation2], %s3109
    %v3111 = vld [vmem:[%s3110] sm:$0xf]
    %v3112 = vld [vmem:[%s3110 + $0x4] sm:$0xf]
    %v3113 = vld [vmem:[%s3110 + $0xc] sm:$0xf]
    %v3114 = vld [vmem:[%s3110 + $0x10] sm:$0xf]
    %v3115 = vld [vmem:[%s3110 + $0x18] sm:$0xf]
    %v3116 = vld [vmem:[%s3110 + $0x1c] sm:$0xf]
    %v3117 = vld [vmem:[%s3110 + $0x24] sm:$0xf]
    %v3118 = vld [vmem:[%s3110 + $0x28] sm:$0xf]
    %v3119 = vld [vmem:[%s3110 + $0x30] sm:$0xf]
    %v3120 = vld [vmem:[%s3110 + $0x34] sm:$0xf]
    %v3121 = vld [vmem:[%s3110 + $0x3c] sm:$0xf]
    %v3122 = vld [vmem:[%s3110 + $0x40] sm:$0xf]
    %v3123 = vld [vmem:[%s3110 + $0x48] sm:$0xf]
    %v3124 = vld [vmem:[%s3110 + $0x4c] sm:$0xf]
    %v3125 = vld [vmem:[%s3110 + $0x54] sm:$0xf]
    %v3126 = vld [vmem:[%s3110 + $0x58] sm:$0xf]
    %v3127 = vld [vmem:[%s3110 + $0x60] sm:$0xf]
    %v3128 = vld [vmem:[%s3110 + $0x64] sm:$0xf]
    %v3129 = vld [vmem:[%s3110 + $0x6c] sm:$0xf]
    %v3130 = vld [vmem:[%s3110 + $0x70] sm:$0xf]
    %v3131 = vld [vmem:[%s3110 + $0x78] sm:$0xf]
    %v3132 = vld [vmem:[%s3110 + $0x7c] sm:$0xf]
    %v3133 = vld [vmem:[%s3110 + $0x84] sm:$0xf]
    %v3134 = vld [vmem:[%s3110 + $0x88] sm:$0xf]
    %v3135 = vld [vmem:[%s3110 + $0x90] sm:$0xf]
    %v3136 = vld [vmem:[%s3110 + $0x94] sm:$0xf]
    %v3137 = vld [vmem:[%s3110 + $0x9c] sm:$0xf]
    %v3138 = vld [vmem:[%s3110 + $0xa0] sm:$0xf]
    %v3139 = vld [vmem:[%s3110 + $0xa8] sm:$0xf]
    %v3140 = vld [vmem:[%s3110 + $0xac] sm:$0xf]
    %v3141 = vld [vmem:[%s3110 + $0xb4] sm:$0xf]
    %v3142 = vld [vmem:[%s3110 + $0xb8] sm:$0xf]
    %v3143 = vld [vmem:[%s1 + $0x60] sm:$0xf]
    %v3144 = vld [vmem:[%s1 + $0x64] sm:$0xf]
    %v3145 = vld [vmem:[%s1 + $0x68] sm:$0xf]
    %v3146 = vld [vmem:[%s1 + $0x6c] sm:$0xf]
    %v3179 = vunpack.c.l.b16 %v3111
    %v3180 = vunpack.c.l.b16 %v3112
    %v3181 = vunpack.c.l.b16 %v3113
    %v3182 = vunpack.c.l.b16 %v3114
    %v3183 = vunpack.c.l.b16 %v3115
    %v3184 = vunpack.c.l.b16 %v3116
    %v3185 = vunpack.c.l.b16 %v3117
    %v3186 = vunpack.c.l.b16 %v3118
    %v3187 = vunpack.c.l.b16 %v3119
    %v3188 = vunpack.c.l.b16 %v3120
    %v3189 = vunpack.c.l.b16 %v3121
    %v3190 = vunpack.c.l.b16 %v3122
    %v3191 = vunpack.c.l.b16 %v3123
    %v3192 = vunpack.c.l.b16 %v3124
    %v3193 = vunpack.c.l.b16 %v3125
    %v3194 = vunpack.c.l.b16 %v3126
    %v3195 = vunpack.c.l.b16 %v3127
    %v3196 = vunpack.c.l.b16 %v3128
    %v3197 = vunpack.c.l.b16 %v3129
    %v3198 = vunpack.c.l.b16 %v3130
    %v3199 = vunpack.c.l.b16 %v3131
    %v3200 = vunpack.c.l.b16 %v3132
    %v3201 = vunpack.c.l.b16 %v3133
    %v3202 = vunpack.c.l.b16 %v3134
    %v3203 = vunpack.c.l.b16 %v3135
    %v3204 = vunpack.c.l.b16 %v3136
    %v3205 = vunpack.c.l.b16 %v3137
    %v3206 = vunpack.c.l.b16 %v3138
    %v3207 = vunpack.c.l.b16 %v3139
    %v3208 = vunpack.c.l.b16 %v3140
    %v3209 = vunpack.c.l.b16 %v3141
    %v3210 = vunpack.c.l.b16 %v3142
    %v3211 = vpack.c.b16 %v3180, %v3179
    %v3212 = vpack.c.b16 %v3182, %v3181
    %v3213 = vpack.c.b16 %v3184, %v3183
    %v3214 = vpack.c.b16 %v3186, %v3185
    %v3215 = vpack.c.b16 %v3188, %v3187
    %v3216 = vpack.c.b16 %v3190, %v3189
    %v3217 = vpack.c.b16 %v3192, %v3191
    %v3218 = vpack.c.b16 %v3194, %v3193
    %v3219 = vpack.c.b16 %v3196, %v3195
    %v3220 = vpack.c.b16 %v3198, %v3197
    %v3221 = vpack.c.b16 %v3200, %v3199
    %v3222 = vpack.c.b16 %v3202, %v3201
    %v3223 = vpack.c.b16 %v3204, %v3203
    %v3224 = vpack.c.b16 %v3206, %v3205
    %v3225 = vpack.c.b16 %v3208, %v3207
    %v3226 = vpack.c.b16 %v3210, %v3209
    %v3231 = vunpack.c.l.b16 %v3143
    %v3232 = vunpack.c.l.b16 %v3144
    %v3233 = vunpack.c.l.b16 %v3145
    %v3234 = vunpack.c.l.b16 %v3146
    %v3235 = vpack.c.b16 %v3232, %v3231
    %v3236 = vpack.c.b16 %v3234, %v3233
    %v3240 = vsel %vm537, %v3211, 0
    %v3243 = vsel %vm537, %v3212, 0
    %v3246 = vsel %vm537, %v3213, 0
    %v3249 = vsel %vm537, %v3214, 0
    %v3252 = vsel %vm537, %v3215, 0
    %v3255 = vsel %vm537, %v3216, 0
    %v3258 = vsel %vm537, %v3217, 0
    %v3261 = vsel %vm537, %v3218, 0
    %v3264 = vsel %vm537, %v3219, 0
    %v3267 = vsel %vm537, %v3220, 0
    %v3270 = vsel %vm537, %v3221, 0
    %v3273 = vsel %vm537, %v3222, 0
    %v3276 = vsel %vm537, %v3223, 0
    %v3279 = vsel %vm537, %v3224, 0
    %v3282 = vsel %vm537, %v3225, 0
    %v3285 = vsel %vm537, %v3226, 0
    %3287 = vmatprep.subr.bf16.mxu0 0
    %3288 = vmatpush1.bf16.msra.mxu0 %v3235
    %3289 = vmatprep.subr.bf16.mxu0 0
    %3290 = vmatpush1.bf16.msra.mxu0 %v3236
    %3291 = vmatprep.subr.bf16.mxu0 0
    %3292 = vmatpush1.bf16.msra.mxu0 0
    %3293 = vmatprep.subr.bf16.mxu0 0
    %3294 = vmatpush1.bf16.msra.mxu0 0
    %3295 = vmatprep.subr.bf16.mxu0 0
    %3296 = vmatpush1.bf16.msra.mxu0 0
    %3297 = vmatprep.subr.bf16.mxu0 0
    %3298 = vmatpush1.bf16.msra.mxu0 0
    %3299 = vmatprep.subr.bf16.mxu0 0
    %3300 = vmatpush1.bf16.msra.mxu0 0
    %3301 = vmatprep.subr.bf16.mxu0 0
    %3302 = vmatpush1.bf16.msra.mxu0 0
    %3303 = vmatprep.subr.bf16.mxu0 0
    %3304 = vmatpush1.bf16.msra.mxu0 0
    %3305 = vmatprep.subr.bf16.mxu0 0
    %3306 = vmatpush1.bf16.msra.mxu0 0
    %3307 = vmatprep.subr.bf16.mxu0 0
    %3308 = vmatpush1.bf16.msra.mxu0 0
    %3309 = vmatprep.subr.bf16.mxu0 0
    %3310 = vmatpush1.bf16.msra.mxu0 0
    %3311 = vmatprep.subr.bf16.mxu0 0
    %3312 = vmatpush1.bf16.msra.mxu0 0
    %3313 = vmatprep.subr.bf16.mxu0 0
    %3314 = vmatpush1.bf16.msra.mxu0 0
    %3315 = vmatprep.subr.bf16.mxu0 0
    %3316 = vmatpush1.bf16.msra.mxu0 0
    %3317 = vmatprep.subr.bf16.mxu0 0
    %3318 = vmatpush1.bf16.msra.mxu0 0
    %3319 = vmatprep.mubr.bf16.mxu0 0
    %3320 = vmatmul.mubr.bf16.gmra.mrb[0].mxu0 %v3240
    %v3321 = vpop.f32.mrb[0].mxu0
    %v3322 = vadd.f32 0.0, %v3321
    %v3323 = vpop.f32.mrb[0].mxu0
    %v3324 = vpop.f32.mrb[0].mxu0
    %v3325 = vadd.f32 0.0, %v3324
    %v3326 = vpop.f32.mrb[0].mxu0
    %3327 = vmatprep.mubr.bf16.mxu0 0
    %3328 = vmatmul.mubr.bf16.gmra.mrb[0].mxu0 %v3243
    %v3329 = vpop.f32.mrb[0].mxu0
    %v3330 = vadd.f32 0.0, %v3329
    %v3331 = vpop.f32.mrb[0].mxu0
    %v3332 = vpop.f32.mrb[0].mxu0
    %v3333 = vadd.f32 0.0, %v3332
    %v3334 = vpop.f32.mrb[0].mxu0
    %3335 = vmatprep.mubr.bf16.mxu0 0
    %3336 = vmatmul.mubr.bf16.gmra.mrb[0].mxu0 %v3246
    %v3337 = vpop.f32.mrb[0].mxu0
    %v3338 = vadd.f32 0.0, %v3337
    %v3339 = vpop.f32.mrb[0].mxu0
    %v3340 = vpop.f32.mrb[0].mxu0
    %v3341 = vadd.f32 0.0, %v3340
    %v3342 = vpop.f32.mrb[0].mxu0
    %3343 = vmatprep.mubr.bf16.mxu0 0
    %3344 = vmatmul.mubr.bf16.gmra.mrb[0].mxu0 %v3249
    %v3345 = vpop.f32.mrb[0].mxu0
    %v3346 = vadd.f32 0.0, %v3345
    %v3347 = vpop.f32.mrb[0].mxu0
    %v3348 = vpop.f32.mrb[0].mxu0
    %v3349 = vadd.f32 0.0, %v3348
    %v3350 = vpop.f32.mrb[0].mxu0
    %3351 = vmatprep.mubr.bf16.mxu0 0
    %3352 = vmatmul.mubr.bf16.gmra.mrb[0].mxu0 %v3252
    %v3353 = vpop.f32.mrb[0].mxu0
    %v3354 = vadd.f32 0.0, %v3353
    %v3355 = vpop.f32.mrb[0].mxu0
    %v3356 = vpop.f32.mrb[0].mxu0
    %v3357 = vadd.f32 0.0, %v3356
    %v3358 = vpop.f32.mrb[0].mxu0
    %3359 = vmatprep.mubr.bf16.mxu0 0
    %3360 = vmatmul.mubr.bf16.gmra.mrb[0].mxu0 %v3255
    %v3361 = vpop.f32.mrb[0].mxu0
    %v3362 = vadd.f32 0.0, %v3361
    %v3363 = vpop.f32.mrb[0].mxu0
    %v3364 = vpop.f32.mrb[0].mxu0
    %v3365 = vadd.f32 0.0, %v3364
    %v3366 = vpop.f32.mrb[0].mxu0
    %3367 = vmatprep.mubr.bf16.mxu0 0
    %3368 = vmatmul.mubr.bf16.gmra.mrb[0].mxu0 %v3258
    %v3369 = vpop.f32.mrb[0].mxu0
    %v3370 = vadd.f32 0.0, %v3369
    %v3371 = vpop.f32.mrb[0].mxu0
    %v3372 = vpop.f32.mrb[0].mxu0
    %v3373 = vadd.f32 0.0, %v3372
    %v3374 = vpop.f32.mrb[0].mxu0
    %3375 = vmatprep.mubr.bf16.mxu0 0
    %3376 = vmatmul.mubr.bf16.gmra.mrb[0].mxu0 %v3261
    %v3377 = vpop.f32.mrb[0].mxu0
    %v3378 = vadd.f32 0.0, %v3377
    %v3379 = vpop.f32.mrb[0].mxu0
    %v3380 = vpop.f32.mrb[0].mxu0
    %v3381 = vadd.f32 0.0, %v3380
    %v3382 = vpop.f32.mrb[0].mxu0
    %3383 = vmatprep.mubr.bf16.mxu0 0
    %3384 = vmatmul.mubr.bf16.gmra.mrb[0].mxu0 %v3264
    %v3385 = vpop.f32.mrb[0].mxu0
    %v3386 = vadd.f32 0.0, %v3385
    %v3387 = vpop.f32.mrb[0].mxu0
    %v3388 = vpop.f32.mrb[0].mxu0
    %v3389 = vadd.f32 0.0, %v3388
    %v3390 = vpop.f32.mrb[0].mxu0
    %3391 = vmatprep.mubr.bf16.mxu0 0
    %3392 = vmatmul.mubr.bf16.gmra.mrb[0].mxu0 %v3267
    %v3393 = vpop.f32.mrb[0].mxu0
    %v3394 = vadd.f32 0.0, %v3393
    %v3395 = vpop.f32.mrb[0].mxu0
    %v3396 = vpop.f32.mrb[0].mxu0
    %v3397 = vadd.f32 0.0, %v3396
    %v3398 = vpop.f32.mrb[0].mxu0
    %3399 = vmatprep.mubr.bf16.mxu0 0
    %3400 = vmatmul.mubr.bf16.gmra.mrb[0].mxu0 %v3270
    %v3401 = vpop.f32.mrb[0].mxu0
    %v3402 = vadd.f32 0.0, %v3401
    %v3403 = vpop.f32.mrb[0].mxu0
    %v3404 = vpop.f32.mrb[0].mxu0
    %v3405 = vadd.f32 0.0, %v3404
    %v3406 = vpop.f32.mrb[0].mxu0
    %3407 = vmatprep.mubr.bf16.mxu0 0
    %3408 = vmatmul.mubr.bf16.gmra.mrb[0].mxu0 %v3273
    %v3409 = vpop.f32.mrb[0].mxu0
    %v3410 = vadd.f32 0.0, %v3409
    %v3411 = vpop.f32.mrb[0].mxu0
    %v3412 = vpop.f32.mrb[0].mxu0
    %v3413 = vadd.f32 0.0, %v3412
    %v3414 = vpop.f32.mrb[0].mxu0
    %3415 = vmatprep.mubr.bf16.mxu0 0
    %3416 = vmatmul.mubr.bf16.gmra.mrb[0].mxu0 %v3276
    %v3417 = vpop.f32.mrb[0].mxu0
    %v3418 = vadd.f32 0.0, %v3417
    %v3419 = vpop.f32.mrb[0].mxu0
    %v3420 = vpop.f32.mrb[0].mxu0
    %v3421 = vadd.f32 0.0, %v3420
    %v3422 = vpop.f32.mrb[0].mxu0
    %3423 = vmatprep.mubr.bf16.mxu0 0
    %3424 = vmatmul.mubr.bf16.gmra.mrb[0].mxu0 %v3279
    %v3425 = vpop.f32.mrb[0].mxu0
    %v3426 = vadd.f32 0.0, %v3425
    %v3427 = vpop.f32.mrb[0].mxu0
    %v3428 = vpop.f32.mrb[0].mxu0
    %v3429 = vadd.f32 0.0, %v3428
    %v3430 = vpop.f32.mrb[0].mxu0
    %3431 = vmatprep.mubr.bf16.mxu0 0
    %3432 = vmatmul.mubr.bf16.gmra.mrb[0].mxu0 %v3282
    %v3433 = vpop.f32.mrb[0].mxu0
    %v3434 = vadd.f32 0.0, %v3433
    %v3435 = vpop.f32.mrb[0].mxu0
    %v3436 = vpop.f32.mrb[0].mxu0
    %v3437 = vadd.f32 0.0, %v3436
    %v3438 = vpop.f32.mrb[0].mxu0
    %3439 = vmatprep.mubr.bf16.mxu0 0
    %3440 = vmatmul.mubr.bf16.gmra.mrb[0].mxu0 %v3285
    %v3441 = vpop.f32.mrb[0].mxu0
    %v3442 = vadd.f32 0.0, %v3441
    %v3443 = vpop.f32.mrb[0].mxu0
    %v3444 = vpop.f32.mrb[0].mxu0
    %v3445 = vadd.f32 0.0, %v3444
    %v3446 = vpop.f32.mrb[0].mxu0
    %3447 = vdwg.mxu0
    %v3448 = vadd.f32 %v3075, %v3322
    %v3449 = vadd.f32 %v3076, %v3325
    %v3450 = vadd.f32 %v3077, %v3330
    %v3451 = vadd.f32 %v3078, %v3333
    %v3452 = vadd.f32 %v3079, %v3338
    %v3453 = vadd.f32 %v3080, %v3341
    %v3454 = vadd.f32 %v3081, %v3346
    %v3455 = vadd.f32 %v3082, %v3349
    %v3456 = vadd.f32 %v3083, %v3354
    %v3457 = vadd.f32 %v3084, %v3357
    %v3458 = vadd.f32 %v3085, %v3362
    %v3459 = vadd.f32 %v3086, %v3365
    %v3460 = vadd.f32 %v3087, %v3370
    %v3461 = vadd.f32 %v3088, %v3373
    %v3462 = vadd.f32 %v3089, %v3378
    %v3463 = vadd.f32 %v3090, %v3381
    %v3464 = vadd.f32 %v3091, %v3386
    %v3465 = vadd.f32 %v3092, %v3389
    %v3466 = vadd.f32 %v3093, %v3394
    %v3467 = vadd.f32 %v3094, %v3397
    %v3468 = vadd.f32 %v3095, %v3402
    %v3469 = vadd.f32 %v3096, %v3405
    %v3470 = vadd.f32 %v3097, %v3410
    %v3471 = vadd.f32 %v3098, %v3413
    %v3472 = vadd.f32 %v3099, %v3418
    %v3473 = vadd.f32 %v3100, %v3421
    %v3474 = vadd.f32 %v3101, %v3426
    %v3475 = vadd.f32 %v3102, %v3429
    %v3476 = vadd.f32 %v3103, %v3434
    %v3477 = vadd.f32 %v3104, %v3437
    %v3478 = vadd.f32 %v3105, %v3442
    %v3479 = vadd.f32 %v3106, %v3445
    %v3480 = vld [vmem:[%s3110] sm:$0xf]
    %v3481 = vld [vmem:[%s3110 + $0x4] sm:$0xf]
    %v3482 = vld [vmem:[%s3110 + $0x8] sm:$0x1]
    %v3483 = vld [vmem:[%s3110 + $0xc] sm:$0xf]
    %v3484 = vld [vmem:[%s3110 + $0x10] sm:$0xf]
    %v3485 = vld [vmem:[%s3110 + $0x14] sm:$0x1]
    %v3486 = vld [vmem:[%s3110 + $0x18] sm:$0xf]
    %v3487 = vld [vmem:[%s3110 + $0x1c] sm:$0xf]
    %v3488 = vld [vmem:[%s3110 + $0x20] sm:$0x1]
    %v3489 = vld [vmem:[%s3110 + $0x24] sm:$0xf]
    %v3490 = vld [vmem:[%s3110 + $0x28] sm:$0xf]
    %v3491 = vld [vmem:[%s3110 + $0x2c] sm:$0x1]
    %v3492 = vld [vmem:[%s3110 + $0x30] sm:$0xf]
    %v3493 = vld [vmem:[%s3110 + $0x34] sm:$0xf]
    %v3494 = vld [vmem:[%s3110 + $0x38] sm:$0x1]
    %v3495 = vld [vmem:[%s3110 + $0x3c] sm:$0xf]
    %v3496 = vld [vmem:[%s3110 + $0x40] sm:$0xf]
    %v3497 = vld [vmem:[%s3110 + $0x44] sm:$0x1]
    %v3498 = vld [vmem:[%s3110 + $0x48] sm:$0xf]
    %v3499 = vld [vmem:[%s3110 + $0x4c] sm:$0xf]
    %v3500 = vld [vmem:[%s3110 + $0x50] sm:$0x1]
    %v3501 = vld [vmem:[%s3110 + $0x54] sm:$0xf]
    %v3502 = vld [vmem:[%s3110 + $0x58] sm:$0xf]
    %v3503 = vld [vmem:[%s3110 + $0x5c] sm:$0x1]
    %v3504 = vld [vmem:[%s3110 + $0x60] sm:$0xf]
    %v3505 = vld [vmem:[%s3110 + $0x64] sm:$0xf]
    %v3506 = vld [vmem:[%s3110 + $0x68] sm:$0x1]
    %v3507 = vld [vmem:[%s3110 + $0x6c] sm:$0xf]
    %v3508 = vld [vmem:[%s3110 + $0x70] sm:$0xf]
    %v3509 = vld [vmem:[%s3110 + $0x74] sm:$0x1]
    %v3510 = vld [vmem:[%s3110 + $0x78] sm:$0xf]
    %v3511 = vld [vmem:[%s3110 + $0x7c] sm:$0xf]
    %v3512 = vld [vmem:[%s3110 + $0x80] sm:$0x1]
    %v3513 = vld [vmem:[%s3110 + $0x84] sm:$0xf]
    %v3514 = vld [vmem:[%s3110 + $0x88] sm:$0xf]
    %v3515 = vld [vmem:[%s3110 + $0x8c] sm:$0x1]
    %v3516 = vld [vmem:[%s3110 + $0x90] sm:$0xf]
    %v3517 = vld [vmem:[%s3110 + $0x94] sm:$0xf]
    %v3518 = vld [vmem:[%s3110 + $0x98] sm:$0x1]
    %v3519 = vld [vmem:[%s3110 + $0x9c] sm:$0xf]
    %v3520 = vld [vmem:[%s3110 + $0xa0] sm:$0xf]
    %v3521 = vld [vmem:[%s3110 + $0xa4] sm:$0x1]
    %v3522 = vld [vmem:[%s3110 + $0xa8] sm:$0xf]
    %v3523 = vld [vmem:[%s3110 + $0xac] sm:$0xf]
    %v3524 = vld [vmem:[%s3110 + $0xb0] sm:$0x1]
    %v3525 = vld [vmem:[%s3110 + $0xb4] sm:$0xf]
    %v3526 = vld [vmem:[%s3110 + $0xb8] sm:$0xf]
    %v3527 = vld [vmem:[%s3110 + $0xbc] sm:$0x1]
    %v3528 = vld [vmem:[%s1 + $0x70] sm:$0xf]
    %v3529 = vld [vmem:[%s1 + $0x74] sm:$0xf]
    %v3530 = vld [vmem:[%s1 + $0x78] sm:$0xf]
    %v3531 = vld [vmem:[%s1 + $0x7c] sm:$0xf]
    %v3533 = vshrl.u32 %v3480, 16
    %v3535 = vrot.slane %v3533, 4
    %v3536 = vshll.u32 %v3480, 16
    %v3538 = vrot.slane %v3536, 5
    %v3539 = vor.u32 %v3535, %v3538
    %v3540 = vrot.slane %v3539, 4
    %v3542 = vshll.u32 %v3481, 16
    %v3544 = vrot.slane %v3542, 5
    %v3545 = vsel %vm92, %v3540, %v3544
    %v3546 = vshrl.u32 %v3481, 16
    %v3548 = vrot.slane %v3546, 4
    %v3549 = vor.u32 %v3548, %v3544
    %v3550 = vrot.slane %v3549, 4
    %v3552 = vshll.u32 %v3482, 16
    %v3554 = vrot.slane %v3552, 5
    %v3555 = vsel %vm92, %v3550, %v3554
    %v3557 = vshrl.u32 %v3483, 16
    %v3559 = vrot.slane %v3557, 4
    %v3560 = vshll.u32 %v3483, 16
    %v3562 = vrot.slane %v3560, 5
    %v3563 = vor.u32 %v3559, %v3562
    %v3564 = vrot.slane %v3563, 4
    %v3566 = vshll.u32 %v3484, 16
    %v3568 = vrot.slane %v3566, 5
    %v3569 = vsel %vm92, %v3564, %v3568
    %v3570 = vshrl.u32 %v3484, 16
    %v3572 = vrot.slane %v3570, 4
    %v3573 = vor.u32 %v3572, %v3568
    %v3574 = vrot.slane %v3573, 4
    %v3576 = vshll.u32 %v3485, 16
    %v3578 = vrot.slane %v3576, 5
    %v3579 = vsel %vm92, %v3574, %v3578
    %v3581 = vshrl.u32 %v3486, 16
    %v3583 = vrot.slane %v3581, 4
    %v3584 = vshll.u32 %v3486, 16
    %v3586 = vrot.slane %v3584, 5
    %v3587 = vor.u32 %v3583, %v3586
    %v3588 = vrot.slane %v3587, 4
    %v3590 = vshll.u32 %v3487, 16
    %v3592 = vrot.slane %v3590, 5
    %v3593 = vsel %vm92, %v3588, %v3592
    %v3594 = vshrl.u32 %v3487, 16
    %v3596 = vrot.slane %v3594, 4
    %v3597 = vor.u32 %v3596, %v3592
    %v3598 = vrot.slane %v3597, 4
    %v3600 = vshll.u32 %v3488, 16
    %v3602 = vrot.slane %v3600, 5
    %v3603 = vsel %vm92, %v3598, %v3602
    %v3605 = vshrl.u32 %v3489, 16
    %v3607 = vrot.slane %v3605, 4
    %v3608 = vshll.u32 %v3489, 16
    %v3610 = vrot.slane %v3608, 5
    %v3611 = vor.u32 %v3607, %v3610
    %v3612 = vrot.slane %v3611, 4
    %v3614 = vshll.u32 %v3490, 16
    %v3616 = vrot.slane %v3614, 5
    %v3617 = vsel %vm92, %v3612, %v3616
    %v3618 = vshrl.u32 %v3490, 16
    %v3620 = vrot.slane %v3618, 4
    %v3621 = vor.u32 %v3620, %v3616
    %v3622 = vrot.slane %v3621, 4
    %v3624 = vshll.u32 %v3491, 16
    %v3626 = vrot.slane %v3624, 5
    %v3627 = vsel %vm92, %v3622, %v3626
    %v3629 = vshrl.u32 %v3492, 16
    %v3631 = vrot.slane %v3629, 4
    %v3632 = vshll.u32 %v3492, 16
    %v3634 = vrot.slane %v3632, 5
    %v3635 = vor.u32 %v3631, %v3634
    %v3636 = vrot.slane %v3635, 4
    %v3638 = vshll.u32 %v3493, 16
    %v3640 = vrot.slane %v3638, 5
    %v3641 = vsel %vm92, %v3636, %v3640
    %v3642 = vshrl.u32 %v3493, 16
    %v3644 = vrot.slane %v3642, 4
    %v3645 = vor.u32 %v3644, %v3640
    %v3646 = vrot.slane %v3645, 4
    %v3648 = vshll.u32 %v3494, 16
    %v3650 = vrot.slane %v3648, 5
    %v3651 = vsel %vm92, %v3646, %v3650
    %v3653 = vshrl.u32 %v3495, 16
    %v3655 = vrot.slane %v3653, 4
    %v3656 = vshll.u32 %v3495, 16
    %v3658 = vrot.slane %v3656, 5
    %v3659 = vor.u32 %v3655, %v3658
    %v3660 = vrot.slane %v3659, 4
    %v3662 = vshll.u32 %v3496, 16
    %v3664 = vrot.slane %v3662, 5
    %v3665 = vsel %vm92, %v3660, %v3664
    %v3666 = vshrl.u32 %v3496, 16
    %v3668 = vrot.slane %v3666, 4
    %v3669 = vor.u32 %v3668, %v3664
    %v3670 = vrot.slane %v3669, 4
    %v3672 = vshll.u32 %v3497, 16
    %v3674 = vrot.slane %v3672, 5
    %v3675 = vsel %vm92, %v3670, %v3674
    %v3677 = vshrl.u32 %v3498, 16
    %v3679 = vrot.slane %v3677, 4
    %v3680 = vshll.u32 %v3498, 16
    %v3682 = vrot.slane %v3680, 5
    %v3683 = vor.u32 %v3679, %v3682
    %v3684 = vrot.slane %v3683, 4
    %v3686 = vshll.u32 %v3499, 16
    %v3688 = vrot.slane %v3686, 5
    %v3689 = vsel %vm92, %v3684, %v3688
    %v3690 = vshrl.u32 %v3499, 16
    %v3692 = vrot.slane %v3690, 4
    %v3693 = vor.u32 %v3692, %v3688
    %v3694 = vrot.slane %v3693, 4
    %v3696 = vshll.u32 %v3500, 16
    %v3698 = vrot.slane %v3696, 5
    %v3699 = vsel %vm92, %v3694, %v3698
    %v3701 = vshrl.u32 %v3501, 16
    %v3703 = vrot.slane %v3701, 4
    %v3704 = vshll.u32 %v3501, 16
    %v3706 = vrot.slane %v3704, 5
    %v3707 = vor.u32 %v3703, %v3706
    %v3708 = vrot.slane %v3707, 4
    %v3710 = vshll.u32 %v3502, 16
    %v3712 = vrot.slane %v3710, 5
    %v3713 = vsel %vm92, %v3708, %v3712
    %v3714 = vshrl.u32 %v3502, 16
    %v3716 = vrot.slane %v3714, 4
    %v3717 = vor.u32 %v3716, %v3712
    %v3718 = vrot.slane %v3717, 4
    %v3720 = vshll.u32 %v3503, 16
    %v3722 = vrot.slane %v3720, 5
    %v3723 = vsel %vm92, %v3718, %v3722
    %v3725 = vshrl.u32 %v3504, 16
    %v3727 = vrot.slane %v3725, 4
    %v3728 = vshll.u32 %v3504, 16
    %v3730 = vrot.slane %v3728, 5
    %v3731 = vor.u32 %v3727, %v3730
    %v3732 = vrot.slane %v3731, 4
    %v3734 = vshll.u32 %v3505, 16
    %v3736 = vrot.slane %v3734, 5
    %v3737 = vsel %vm92, %v3732, %v3736
    %v3738 = vshrl.u32 %v3505, 16
    %v3740 = vrot.slane %v3738, 4
    %v3741 = vor.u32 %v3740, %v3736
    %v3742 = vrot.slane %v3741, 4
    %v3744 = vshll.u32 %v3506, 16
    %v3746 = vrot.slane %v3744, 5
    %v3747 = vsel %vm92, %v3742, %v3746
    %v3749 = vshrl.u32 %v3507, 16
    %v3751 = vrot.slane %v3749, 4
    %v3752 = vshll.u32 %v3507, 16
    %v3754 = vrot.slane %v3752, 5
    %v3755 = vor.u32 %v3751, %v3754
    %v3756 = vrot.slane %v3755, 4
    %v3758 = vshll.u32 %v3508, 16
    %v3760 = vrot.slane %v3758, 5
    %v3761 = vsel %vm92, %v3756, %v3760
    %v3762 = vshrl.u32 %v3508, 16
    %v3764 = vrot.slane %v3762, 4
    %v3765 = vor.u32 %v3764, %v3760
    %v3766 = vrot.slane %v3765, 4
    %v3768 = vshll.u32 %v3509, 16
    %v3770 = vrot.slane %v3768, 5
    %v3771 = vsel %vm92, %v3766, %v3770
    %v3773 = vshrl.u32 %v3510, 16
    %v3775 = vrot.slane %v3773, 4
    %v3776 = vshll.u32 %v3510, 16
    %v3778 = vrot.slane %v3776, 5
    %v3779 = vor.u32 %v3775, %v3778
    %v3780 = vrot.slane %v3779, 4
    %v3782 = vshll.u32 %v3511, 16
    %v3784 = vrot.slane %v3782, 5
    %v3785 = vsel %vm92, %v3780, %v3784
    %v3786 = vshrl.u32 %v3511, 16
    %v3788 = vrot.slane %v3786, 4
    %v3789 = vor.u32 %v3788, %v3784
    %v3790 = vrot.slane %v3789, 4
    %v3792 = vshll.u32 %v3512, 16
    %v3794 = vrot.slane %v3792, 5
    %v3795 = vsel %vm92, %v3790, %v3794
    %v3797 = vshrl.u32 %v3513, 16
    %v3799 = vrot.slane %v3797, 4
    %v3800 = vshll.u32 %v3513, 16
    %v3802 = vrot.slane %v3800, 5
    %v3803 = vor.u32 %v3799, %v3802
    %v3804 = vrot.slane %v3803, 4
    %v3806 = vshll.u32 %v3514, 16
    %v3808 = vrot.slane %v3806, 5
    %v3809 = vsel %vm92, %v3804, %v3808
    %v3810 = vshrl.u32 %v3514, 16
    %v3812 = vrot.slane %v3810, 4
    %v3813 = vor.u32 %v3812, %v3808
    %v3814 = vrot.slane %v3813, 4
    %v3816 = vshll.u32 %v3515, 16
    %v3818 = vrot.slane %v3816, 5
    %v3819 = vsel %vm92, %v3814, %v3818
    %v3821 = vshrl.u32 %v3516, 16
    %v3823 = vrot.slane %v3821, 4
    %v3824 = vshll.u32 %v3516, 16
    %v3826 = vrot.slane %v3824, 5
    %v3827 = vor.u32 %v3823, %v3826
    %v3828 = vrot.slane %v3827, 4
    %v3830 = vshll.u32 %v3517, 16
    %v3832 = vrot.slane %v3830, 5
    %v3833 = vsel %vm92, %v3828, %v3832
    %v3834 = vshrl.u32 %v3517, 16
    %v3836 = vrot.slane %v3834, 4
    %v3837 = vor.u32 %v3836, %v3832
    %v3838 = vrot.slane %v3837, 4
    %v3840 = vshll.u32 %v3518, 16
    %v3842 = vrot.slane %v3840, 5
    %v3843 = vsel %vm92, %v3838, %v3842
    %v3845 = vshrl.u32 %v3519, 16
    %v3847 = vrot.slane %v3845, 4
    %v3848 = vshll.u32 %v3519, 16
    %v3850 = vrot.slane %v3848, 5
    %v3851 = vor.u32 %v3847, %v3850
    %v3852 = vrot.slane %v3851, 4
    %v3854 = vshll.u32 %v3520, 16
    %v3856 = vrot.slane %v3854, 5
    %v3857 = vsel %vm92, %v3852, %v3856
    %v3858 = vshrl.u32 %v3520, 16
    %v3860 = vrot.slane %v3858, 4
    %v3861 = vor.u32 %v3860, %v3856
    %v3862 = vrot.slane %v3861, 4
    %v3864 = vshll.u32 %v3521, 16
    %v3866 = vrot.slane %v3864, 5
    %v3867 = vsel %vm92, %v3862, %v3866
    %v3869 = vshrl.u32 %v3522, 16
    %v3871 = vrot.slane %v3869, 4
    %v3872 = vshll.u32 %v3522, 16
    %v3874 = vrot.slane %v3872, 5
    %v3875 = vor.u32 %v3871, %v3874
    %v3876 = vrot.slane %v3875, 4
    %v3878 = vshll.u32 %v3523, 16
    %v3880 = vrot.slane %v3878, 5
    %v3881 = vsel %vm92, %v3876, %v3880
    %v3882 = vshrl.u32 %v3523, 16
    %v3884 = vrot.slane %v3882, 4
    %v3885 = vor.u32 %v3884, %v3880
    %v3886 = vrot.slane %v3885, 4
    %v3888 = vshll.u32 %v3524, 16
    %v3890 = vrot.slane %v3888, 5
    %v3891 = vsel %vm92, %v3886, %v3890
    %v3893 = vshrl.u32 %v3525, 16
    %v3895 = vrot.slane %v3893, 4
    %v3896 = vshll.u32 %v3525, 16
    %v3898 = vrot.slane %v3896, 5
    %v3899 = vor.u32 %v3895, %v3898
    %v3900 = vrot.slane %v3899, 4
    %v3902 = vshll.u32 %v3526, 16
    %v3904 = vrot.slane %v3902, 5
    %v3905 = vsel %vm92, %v3900, %v3904
    %v3906 = vshrl.u32 %v3526, 16
    %v3908 = vrot.slane %v3906, 4
    %v3909 = vor.u32 %v3908, %v3904
    %v3910 = vrot.slane %v3909, 4
    %v3912 = vshll.u32 %v3527, 16
    %v3914 = vrot.slane %v3912, 5
    %v3915 = vsel %vm92, %v3910, %v3914
    %v3916 = vunpack.c.l.b16 %v3545
    %v3917 = vunpack.c.l.b16 %v3555
    %v3918 = vunpack.c.l.b16 %v3569
    %v3919 = vunpack.c.l.b16 %v3579
    %v3920 = vunpack.c.l.b16 %v3593
    %v3921 = vunpack.c.l.b16 %v3603
    %v3922 = vunpack.c.l.b16 %v3617
    %v3923 = vunpack.c.l.b16 %v3627
    %v3924 = vunpack.c.l.b16 %v3641
    %v3925 = vunpack.c.l.b16 %v3651
    %v3926 = vunpack.c.l.b16 %v3665
    %v3927 = vunpack.c.l.b16 %v3675
    %v3928 = vunpack.c.l.b16 %v3689
    %v3929 = vunpack.c.l.b16 %v3699
    %v3930 = vunpack.c.l.b16 %v3713
    %v3931 = vunpack.c.l.b16 %v3723
    %v3932 = vunpack.c.l.b16 %v3737
    %v3933 = vunpack.c.l.b16 %v3747
    %v3934 = vunpack.c.l.b16 %v3761
    %v3935 = vunpack.c.l.b16 %v3771
    %v3936 = vunpack.c.l.b16 %v3785
    %v3937 = vunpack.c.l.b16 %v3795
    %v3938 = vunpack.c.l.b16 %v3809
    %v3939 = vunpack.c.l.b16 %v3819
    %v3940 = vunpack.c.l.b16 %v3833
    %v3941 = vunpack.c.l.b16 %v3843
    %v3942 = vunpack.c.l.b16 %v3857
    %v3943 = vunpack.c.l.b16 %v3867
    %v3944 = vunpack.c.l.b16 %v3881
    %v3945 = vunpack.c.l.b16 %v3891
    %v3946 = vunpack.c.l.b16 %v3905
    %v3947 = vunpack.c.l.b16 %v3915
    %v3948 = vpack.c.b16 %v3917, %v3916
    %v3949 = vpack.c.b16 %v3919, %v3918
    %v3950 = vpack.c.b16 %v3921, %v3920
    %v3951 = vpack.c.b16 %v3923, %v3922
    %v3952 = vpack.c.b16 %v3925, %v3924
    %v3953 = vpack.c.b16 %v3927, %v3926
    %v3954 = vpack.c.b16 %v3929, %v3928
    %v3955 = vpack.c.b16 %v3931, %v3930
    %v3956 = vpack.c.b16 %v3933, %v3932
    %v3957 = vpack.c.b16 %v3935, %v3934
    %v3958 = vpack.c.b16 %v3937, %v3936
    %v3959 = vpack.c.b16 %v3939, %v3938
    %v3960 = vpack.c.b16 %v3941, %v3940
    %v3961 = vpack.c.b16 %v3943, %v3942
    %v3962 = vpack.c.b16 %v3945, %v3944
    %v3963 = vpack.c.b16 %v3947, %v3946
    %v3968 = vunpack.c.l.b16 %v3528
    %v3969 = vunpack.c.l.b16 %v3529
    %v3970 = vunpack.c.l.b16 %v3530
    %v3971 = vunpack.c.l.b16 %v3531
    %v3972 = vpack.c.b16 %v3969, %v3968
    %v3973 = vpack.c.b16 %v3971, %v3970
    %v3977 = vsel %vm537, %v3948, 0
    %v3980 = vsel %vm537, %v3949, 0
    %v3983 = vsel %vm537, %v3950, 0
    %v3986 = vsel %vm537, %v3951, 0
    %v3989 = vsel %vm537, %v3952, 0
    %v3992 = vsel %vm537, %v3953, 0
    %v3995 = vsel %vm537, %v3954, 0
    %v3998 = vsel %vm537, %v3955, 0
    %v4001 = vsel %vm537, %v3956, 0
    %v4004 = vsel %vm537, %v3957, 0
    %v4007 = vsel %vm537, %v3958, 0
    %v4010 = vsel %vm537, %v3959, 0
    %v4013 = vsel %vm537, %v3960, 0
    %v4016 = vsel %vm537, %v3961, 0
    %v4019 = vsel %vm537, %v3962, 0
    %v4022 = vsel %vm537, %v3963, 0
    %4024 = vmatprep.subr.bf16.mxu0 0
    %4025 = vmatpush1.bf16.msra.mxu0 %v3972
    %4026 = vmatprep.subr.bf16.mxu0 0
    %4027 = vmatpush1.bf16.msra.mxu0 %v3973
    %4028 = vmatprep.subr.bf16.mxu0 0
    %4029 = vmatpush1.bf16.msra.mxu0 0
    %4030 = vmatprep.subr.bf16.mxu0 0
    %4031 = vmatpush1.bf16.msra.mxu0 0
    %4032 = vmatprep.subr.bf16.mxu0 0
    %4033 = vmatpush1.bf16.msra.mxu0 0
    %4034 = vmatprep.subr.bf16.mxu0 0
    %4035 = vmatpush1.bf16.msra.mxu0 0
    %4036 = vmatprep.subr.bf16.mxu0 0
    %4037 = vmatpush1.bf16.msra.mxu0 0
    %4038 = vmatprep.subr.bf16.mxu0 0
    %4039 = vmatpush1.bf16.msra.mxu0 0
    %4040 = vmatprep.subr.bf16.mxu0 0
    %4041 = vmatpush1.bf16.msra.mxu0 0
    %4042 = vmatprep.subr.bf16.mxu0 0
    %4043 = vmatpush1.bf16.msra.mxu0 0
    %4044 = vmatprep.subr.bf16.mxu0 0
    %4045 = vmatpush1.bf16.msra.mxu0 0
    %4046 = vmatprep.subr.bf16.mxu0 0
    %4047 = vmatpush1.bf16.msra.mxu0 0
    %4048 = vmatprep.subr.bf16.mxu0 0
    %4049 = vmatpush1.bf16.msra.mxu0 0
    %4050 = vmatprep.subr.bf16.mxu0 0
    %4051 = vmatpush1.bf16.msra.mxu0 0
    %4052 = vmatprep.subr.bf16.mxu0 0
    %4053 = vmatpush1.bf16.msra.mxu0 0
    %4054 = vmatprep.subr.bf16.mxu0 0
    %4055 = vmatpush1.bf16.msra.mxu0 0
    %4056 = vmatprep.mubr.bf16.mxu0 0
    %4057 = vmatmul.mubr.bf16.gmra.mrb[0].mxu0 %v3977
    %v4058 = vpop.f32.mrb[0].mxu0
    %v4059 = vadd.f32 0.0, %v4058
    %v4060 = vpop.f32.mrb[0].mxu0
    %v4061 = vpop.f32.mrb[0].mxu0
    %v4062 = vadd.f32 0.0, %v4061
    %v4063 = vpop.f32.mrb[0].mxu0
    %4064 = vmatprep.mubr.bf16.mxu0 0
    %4065 = vmatmul.mubr.bf16.gmra.mrb[0].mxu0 %v3980
    %v4066 = vpop.f32.mrb[0].mxu0
    %v4067 = vadd.f32 0.0, %v4066
    %v4068 = vpop.f32.mrb[0].mxu0
    %v4069 = vpop.f32.mrb[0].mxu0
    %v4070 = vadd.f32 0.0, %v4069
    %v4071 = vpop.f32.mrb[0].mxu0
    %4072 = vmatprep.mubr.bf16.mxu0 0
    %4073 = vmatmul.mubr.bf16.gmra.mrb[0].mxu0 %v3983
    %v4074 = vpop.f32.mrb[0].mxu0
    %v4075 = vadd.f32 0.0, %v4074
    %v4076 = vpop.f32.mrb[0].mxu0
    %v4077 = vpop.f32.mrb[0].mxu0
    %v4078 = vadd.f32 0.0, %v4077
    %v4079 = vpop.f32.mrb[0].mxu0
    %4080 = vmatprep.mubr.bf16.mxu0 0
    %4081 = vmatmul.mubr.bf16.gmra.mrb[0].mxu0 %v3986
    %v4082 = vpop.f32.mrb[0].mxu0
    %v4083 = vadd.f32 0.0, %v4082
    %v4084 = vpop.f32.mrb[0].mxu0
    %v4085 = vpop.f32.mrb[0].mxu0
    %v4086 = vadd.f32 0.0, %v4085
    %v4087 = vpop.f32.mrb[0].mxu0
    %4088 = vmatprep.mubr.bf16.mxu0 0
    %4089 = vmatmul.mubr.bf16.gmra.mrb[0].mxu0 %v3989
    %v4090 = vpop.f32.mrb[0].mxu0
    %v4091 = vadd.f32 0.0, %v4090
    %v4092 = vpop.f32.mrb[0].mxu0
    %v4093 = vpop.f32.mrb[0].mxu0
    %v4094 = vadd.f32 0.0, %v4093
    %v4095 = vpop.f32.mrb[0].mxu0
    %4096 = vmatprep.mubr.bf16.mxu0 0
    %4097 = vmatmul.mubr.bf16.gmra.mrb[0].mxu0 %v3992
    %v4098 = vpop.f32.mrb[0].mxu0
    %v4099 = vadd.f32 0.0, %v4098
    %v4100 = vpop.f32.mrb[0].mxu0
    %v4101 = vpop.f32.mrb[0].mxu0
    %v4102 = vadd.f32 0.0, %v4101
    %v4103 = vpop.f32.mrb[0].mxu0
    %4104 = vmatprep.mubr.bf16.mxu0 0
    %4105 = vmatmul.mubr.bf16.gmra.mrb[0].mxu0 %v3995
    %v4106 = vpop.f32.mrb[0].mxu0
    %v4107 = vadd.f32 0.0, %v4106
    %v4108 = vpop.f32.mrb[0].mxu0
    %v4109 = vpop.f32.mrb[0].mxu0
    %v4110 = vadd.f32 0.0, %v4109
    %v4111 = vpop.f32.mrb[0].mxu0
    %4112 = vmatprep.mubr.bf16.mxu0 0
    %4113 = vmatmul.mubr.bf16.gmra.mrb[0].mxu0 %v3998
    %v4114 = vpop.f32.mrb[0].mxu0
    %v4115 = vadd.f32 0.0, %v4114
    %v4116 = vpop.f32.mrb[0].mxu0
    %v4117 = vpop.f32.mrb[0].mxu0
    %v4118 = vadd.f32 0.0, %v4117
    %v4119 = vpop.f32.mrb[0].mxu0
    %4120 = vmatprep.mubr.bf16.mxu0 0
    %4121 = vmatmul.mubr.bf16.gmra.mrb[0].mxu0 %v4001
    %v4122 = vpop.f32.mrb[0].mxu0
    %v4123 = vadd.f32 0.0, %v4122
    %v4124 = vpop.f32.mrb[0].mxu0
    %v4125 = vpop.f32.mrb[0].mxu0
    %v4126 = vadd.f32 0.0, %v4125
    %v4127 = vpop.f32.mrb[0].mxu0
    %4128 = vmatprep.mubr.bf16.mxu0 0
    %4129 = vmatmul.mubr.bf16.gmra.mrb[0].mxu0 %v4004
    %v4130 = vpop.f32.mrb[0].mxu0
    %v4131 = vadd.f32 0.0, %v4130
    %v4132 = vpop.f32.mrb[0].mxu0
    %v4133 = vpop.f32.mrb[0].mxu0
    %v4134 = vadd.f32 0.0, %v4133
    %v4135 = vpop.f32.mrb[0].mxu0
    %4136 = vmatprep.mubr.bf16.mxu0 0
    %4137 = vmatmul.mubr.bf16.gmra.mrb[0].mxu0 %v4007
    %v4138 = vpop.f32.mrb[0].mxu0
    %v4139 = vadd.f32 0.0, %v4138
    %v4140 = vpop.f32.mrb[0].mxu0
    %v4141 = vpop.f32.mrb[0].mxu0
    %v4142 = vadd.f32 0.0, %v4141
    %v4143 = vpop.f32.mrb[0].mxu0
    %4144 = vmatprep.mubr.bf16.mxu0 0
    %4145 = vmatmul.mubr.bf16.gmra.mrb[0].mxu0 %v4010
    %v4146 = vpop.f32.mrb[0].mxu0
    %v4147 = vadd.f32 0.0, %v4146
    %v4148 = vpop.f32.mrb[0].mxu0
    %v4149 = vpop.f32.mrb[0].mxu0
    %v4150 = vadd.f32 0.0, %v4149
    %v4151 = vpop.f32.mrb[0].mxu0
    %4152 = vmatprep.mubr.bf16.mxu0 0
    %4153 = vmatmul.mubr.bf16.gmra.mrb[0].mxu0 %v4013
    %v4154 = vpop.f32.mrb[0].mxu0
    %v4155 = vadd.f32 0.0, %v4154
    %v4156 = vpop.f32.mrb[0].mxu0
    %v4157 = vpop.f32.mrb[0].mxu0
    %v4158 = vadd.f32 0.0, %v4157
    %v4159 = vpop.f32.mrb[0].mxu0
    %4160 = vmatprep.mubr.bf16.mxu0 0
    %4161 = vmatmul.mubr.bf16.gmra.mrb[0].mxu0 %v4016
    %v4162 = vpop.f32.mrb[0].mxu0
    %v4163 = vadd.f32 0.0, %v4162
    %v4164 = vpop.f32.mrb[0].mxu0
    %v4165 = vpop.f32.mrb[0].mxu0
    %v4166 = vadd.f32 0.0, %v4165
    %v4167 = vpop.f32.mrb[0].mxu0
    %4168 = vmatprep.mubr.bf16.mxu0 0
    %4169 = vmatmul.mubr.bf16.gmra.mrb[0].mxu0 %v4019
    %v4170 = vpop.f32.mrb[0].mxu0
    %v4171 = vadd.f32 0.0, %v4170
    %v4172 = vpop.f32.mrb[0].mxu0
    %v4173 = vpop.f32.mrb[0].mxu0
    %v4174 = vadd.f32 0.0, %v4173
    %v4175 = vpop.f32.mrb[0].mxu0
    %4176 = vmatprep.mubr.bf16.mxu0 0
    %4177 = vmatmul.mubr.bf16.gmra.mrb[0].mxu0 %v4022
    %v4178 = vpop.f32.mrb[0].mxu0
    %v4179 = vadd.f32 0.0, %v4178
    %v4180 = vpop.f32.mrb[0].mxu0
    %v4181 = vpop.f32.mrb[0].mxu0
    %v4182 = vadd.f32 0.0, %v4181
    %v4183 = vpop.f32.mrb[0].mxu0
    %4184 = vdwg.mxu0
    %v4185 = vadd.f32 %v3448, %v4059
    %v4186 = vadd.f32 %v3449, %v4062
    %v4187 = vadd.f32 %v3450, %v4067
    %v4188 = vadd.f32 %v3451, %v4070
    %v4189 = vadd.f32 %v3452, %v4075
    %v4190 = vadd.f32 %v3453, %v4078
    %v4191 = vadd.f32 %v3454, %v4083
    %v4192 = vadd.f32 %v3455, %v4086
    %v4193 = vadd.f32 %v3456, %v4091
    %v4194 = vadd.f32 %v3457, %v4094
    %v4195 = vadd.f32 %v3458, %v4099
    %v4196 = vadd.f32 %v3459, %v4102
    %v4197 = vadd.f32 %v3460, %v4107
    %v4198 = vadd.f32 %v3461, %v4110
    %v4199 = vadd.f32 %v3462, %v4115
    %v4200 = vadd.f32 %v3463, %v4118
    %v4201 = vadd.f32 %v3464, %v4123
    %v4202 = vadd.f32 %v3465, %v4126
    %v4203 = vadd.f32 %v3466, %v4131
    %v4204 = vadd.f32 %v3467, %v4134
    %v4205 = vadd.f32 %v3468, %v4139
    %v4206 = vadd.f32 %v3469, %v4142
    %v4207 = vadd.f32 %v3470, %v4147
    %v4208 = vadd.f32 %v3471, %v4150
    %v4209 = vadd.f32 %v3472, %v4155
    %v4210 = vadd.f32 %v3473, %v4158
    %v4211 = vadd.f32 %v3474, %v4163
    %v4212 = vadd.f32 %v3475, %v4166
    %v4213 = vadd.f32 %v3476, %v4171
    %v4214 = vadd.f32 %v3477, %v4174
    %v4215 = vadd.f32 %v3478, %v4179
    %v4216 = vadd.f32 %v3479, %v4182
    %v4217 = vld [vmem:[%s3110] sm:$0xe]
    %v4218 = vld [vmem:[%s3110 + $0xc] sm:$0xe]
    %v4219 = vld [vmem:[%s3110 + $0x18] sm:$0xe]
    %v4220 = vld [vmem:[%s3110 + $0x24] sm:$0xe]
    %v4221 = vld [vmem:[%s3110 + $0x30] sm:$0xe]
    %v4222 = vld [vmem:[%s3110 + $0x3c] sm:$0xe]
    %v4223 = vld [vmem:[%s3110 + $0x48] sm:$0xe]
    %v4224 = vld [vmem:[%s3110 + $0x54] sm:$0xe]
    %v4225 = vld [vmem:[%s3110 + $0x60] sm:$0xe]
    %v4226 = vld [vmem:[%s3110 + $0x6c] sm:$0xe]
    %v4227 = vld [vmem:[%s3110 + $0x78] sm:$0xe]
    %v4228 = vld [vmem:[%s3110 + $0x84] sm:$0xe]
    %v4229 = vld [vmem:[%s3110 + $0x90] sm:$0xe]
    %v4230 = vld [vmem:[%s3110 + $0x9c] sm:$0xe]
    %v4231 = vld [vmem:[%s3110 + $0xa8] sm:$0xe]
    %v4232 = vld [vmem:[%s3110 + $0xb4] sm:$0xe]
    %v4233 = vld [vmem:[%s1 + $0x80] sm:$0xf]
    %v4234 = vld [vmem:[%s1 + $0x84] sm:$0xf]
    %v4235 = vld [vmem:[%s1 + $0x88] sm:$0xf]
    %v4236 = vld [vmem:[%s1 + $0x8c] sm:$0xf]
    %v4285 = vrot.slane %v4217, 5
    %v4286 = vrot.slane %v4285, 4
    %v4287 = vrot.slane %v3481, 5
    %v4288 = vsel %vm1102, %v4286, %v4287
    %v4289 = vrot.slane %v4287, 4
    %v4290 = vrot.slane %v3482, 5
    %v4291 = vsel %vm1102, %v4289, %v4290
    %v4292 = vrot.slane %v4218, 5
    %v4293 = vrot.slane %v4292, 4
    %v4294 = vrot.slane %v3484, 5
    %v4295 = vsel %vm1102, %v4293, %v4294
    %v4296 = vrot.slane %v4294, 4
    %v4297 = vrot.slane %v3485, 5
    %v4298 = vsel %vm1102, %v4296, %v4297
    %v4299 = vrot.slane %v4219, 5
    %v4300 = vrot.slane %v4299, 4
    %v4301 = vrot.slane %v3487, 5
    %v4302 = vsel %vm1102, %v4300, %v4301
    %v4303 = vrot.slane %v4301, 4
    %v4304 = vrot.slane %v3488, 5
    %v4305 = vsel %vm1102, %v4303, %v4304
    %v4306 = vrot.slane %v4220, 5
    %v4307 = vrot.slane %v4306, 4
    %v4308 = vrot.slane %v3490, 5
    %v4309 = vsel %vm1102, %v4307, %v4308
    %v4310 = vrot.slane %v4308, 4
    %v4311 = vrot.slane %v3491, 5
    %v4312 = vsel %vm1102, %v4310, %v4311
    %v4313 = vrot.slane %v4221, 5
    %v4314 = vrot.slane %v4313, 4
    %v4315 = vrot.slane %v3493, 5
    %v4316 = vsel %vm1102, %v4314, %v4315
    %v4317 = vrot.slane %v4315, 4
    %v4318 = vrot.slane %v3494, 5
    %v4319 = vsel %vm1102, %v4317, %v4318
    %v4320 = vrot.slane %v4222, 5
    %v4321 = vrot.slane %v4320, 4
    %v4322 = vrot.slane %v3496, 5
    %v4323 = vsel %vm1102, %v4321, %v4322
    %v4324 = vrot.slane %v4322, 4
    %v4325 = vrot.slane %v3497, 5
    %v4326 = vsel %vm1102, %v4324, %v4325
    %v4327 = vrot.slane %v4223, 5
    %v4328 = vrot.slane %v4327, 4
    %v4329 = vrot.slane %v3499, 5
    %v4330 = vsel %vm1102, %v4328, %v4329
    %v4331 = vrot.slane %v4329, 4
    %v4332 = vrot.slane %v3500, 5
    %v4333 = vsel %vm1102, %v4331, %v4332
    %v4334 = vrot.slane %v4224, 5
    %v4335 = vrot.slane %v4334, 4
    %v4336 = vrot.slane %v3502, 5
    %v4337 = vsel %vm1102, %v4335, %v4336
    %v4338 = vrot.slane %v4336, 4
    %v4339 = vrot.slane %v3503, 5
    %v4340 = vsel %vm1102, %v4338, %v4339
    %v4341 = vrot.slane %v4225, 5
    %v4342 = vrot.slane %v4341, 4
    %v4343 = vrot.slane %v3505, 5
    %v4344 = vsel %vm1102, %v4342, %v4343
    %v4345 = vrot.slane %v4343, 4
    %v4346 = vrot.slane %v3506, 5
    %v4347 = vsel %vm1102, %v4345, %v4346
    %v4348 = vrot.slane %v4226, 5
    %v4349 = vrot.slane %v4348, 4
    %v4350 = vrot.slane %v3508, 5
    %v4351 = vsel %vm1102, %v4349, %v4350
    %v4352 = vrot.slane %v4350, 4
    %v4353 = vrot.slane %v3509, 5
    %v4354 = vsel %vm1102, %v4352, %v4353
    %v4355 = vrot.slane %v4227, 5
    %v4356 = vrot.slane %v4355, 4
    %v4357 = vrot.slane %v3511, 5
    %v4358 = vsel %vm1102, %v4356, %v4357
    %v4359 = vrot.slane %v4357, 4
    %v4360 = vrot.slane %v3512, 5
    %v4361 = vsel %vm1102, %v4359, %v4360
    %v4362 = vrot.slane %v4228, 5
    %v4363 = vrot.slane %v4362, 4
    %v4364 = vrot.slane %v3514, 5
    %v4365 = vsel %vm1102, %v4363, %v4364
    %v4366 = vrot.slane %v4364, 4
    %v4367 = vrot.slane %v3515, 5
    %v4368 = vsel %vm1102, %v4366, %v4367
    %v4369 = vrot.slane %v4229, 5
    %v4370 = vrot.slane %v4369, 4
    %v4371 = vrot.slane %v3517, 5
    %v4372 = vsel %vm1102, %v4370, %v4371
    %v4373 = vrot.slane %v4371, 4
    %v4374 = vrot.slane %v3518, 5
    %v4375 = vsel %vm1102, %v4373, %v4374
    %v4376 = vrot.slane %v4230, 5
    %v4377 = vrot.slane %v4376, 4
    %v4378 = vrot.slane %v3520, 5
    %v4379 = vsel %vm1102, %v4377, %v4378
    %v4380 = vrot.slane %v4378, 4
    %v4381 = vrot.slane %v3521, 5
    %v4382 = vsel %vm1102, %v4380, %v4381
    %v4383 = vrot.slane %v4231, 5
    %v4384 = vrot.slane %v4383, 4
    %v4385 = vrot.slane %v3523, 5
    %v4386 = vsel %vm1102, %v4384, %v4385
    %v4387 = vrot.slane %v4385, 4
    %v4388 = vrot.slane %v3524, 5
    %v4389 = vsel %vm1102, %v4387, %v4388
    %v4390 = vrot.slane %v4232, 5
    %v4391 = vrot.slane %v4390, 4
    %v4392 = vrot.slane %v3526, 5
    %v4393 = vsel %vm1102, %v4391, %v4392
    %v4394 = vrot.slane %v4392, 4
    %v4395 = vrot.slane %v3527, 5
    %v4396 = vsel %vm1102, %v4394, %v4395
    %v4397 = vunpack.c.l.b16 %v4288
    %v4398 = vunpack.c.l.b16 %v4291
    %v4399 = vunpack.c.l.b16 %v4295
    %v4400 = vunpack.c.l.b16 %v4298
    %v4401 = vunpack.c.l.b16 %v4302
    %v4402 = vunpack.c.l.b16 %v4305
    %v4403 = vunpack.c.l.b16 %v4309
    %v4404 = vunpack.c.l.b16 %v4312
    %v4405 = vunpack.c.l.b16 %v4316
    %v4406 = vunpack.c.l.b16 %v4319
    %v4407 = vunpack.c.l.b16 %v4323
    %v4408 = vunpack.c.l.b16 %v4326
    %v4409 = vunpack.c.l.b16 %v4330
    %v4410 = vunpack.c.l.b16 %v4333
    %v4411 = vunpack.c.l.b16 %v4337
    %v4412 = vunpack.c.l.b16 %v4340
    %v4413 = vunpack.c.l.b16 %v4344
    %v4414 = vunpack.c.l.b16 %v4347
    %v4415 = vunpack.c.l.b16 %v4351
    %v4416 = vunpack.c.l.b16 %v4354
    %v4417 = vunpack.c.l.b16 %v4358
    %v4418 = vunpack.c.l.b16 %v4361
    %v4419 = vunpack.c.l.b16 %v4365
    %v4420 = vunpack.c.l.b16 %v4368
    %v4421 = vunpack.c.l.b16 %v4372
    %v4422 = vunpack.c.l.b16 %v4375
    %v4423 = vunpack.c.l.b16 %v4379
    %v4424 = vunpack.c.l.b16 %v4382
    %v4425 = vunpack.c.l.b16 %v4386
    %v4426 = vunpack.c.l.b16 %v4389
    %v4427 = vunpack.c.l.b16 %v4393
    %v4428 = vunpack.c.l.b16 %v4396
    %v4429 = vpack.c.b16 %v4398, %v4397
    %v4430 = vpack.c.b16 %v4400, %v4399
    %v4431 = vpack.c.b16 %v4402, %v4401
    %v4432 = vpack.c.b16 %v4404, %v4403
    %v4433 = vpack.c.b16 %v4406, %v4405
    %v4434 = vpack.c.b16 %v4408, %v4407
    %v4435 = vpack.c.b16 %v4410, %v4409
    %v4436 = vpack.c.b16 %v4412, %v4411
    %v4437 = vpack.c.b16 %v4414, %v4413
    %v4438 = vpack.c.b16 %v4416, %v4415
    %v4439 = vpack.c.b16 %v4418, %v4417
    %v4440 = vpack.c.b16 %v4420, %v4419
    %v4441 = vpack.c.b16 %v4422, %v4421
    %v4442 = vpack.c.b16 %v4424, %v4423
    %v4443 = vpack.c.b16 %v4426, %v4425
    %v4444 = vpack.c.b16 %v4428, %v4427
    %v4449 = vunpack.c.l.b16 %v4233
    %v4450 = vunpack.c.l.b16 %v4234
    %v4451 = vunpack.c.l.b16 %v4235
    %v4452 = vunpack.c.l.b16 %v4236
    %v4453 = vpack.c.b16 %v4450, %v4449
    %v4454 = vpack.c.b16 %v4452, %v4451
    %v4458 = vsel %vm537, %v4429, 0
    %v4461 = vsel %vm537, %v4430, 0
    %v4464 = vsel %vm537, %v4431, 0
    %v4467 = vsel %vm537, %v4432, 0
    %v4470 = vsel %vm537, %v4433, 0
    %v4473 = vsel %vm537, %v4434, 0
    %v4476 = vsel %vm537, %v4435, 0
    %v4479 = vsel %vm537, %v4436, 0
    %v4482 = vsel %vm537, %v4437, 0
    %v4485 = vsel %vm537, %v4438, 0
    %v4488 = vsel %vm537, %v4439, 0
    %v4491 = vsel %vm537, %v4440, 0
    %v4494 = vsel %vm537, %v4441, 0
    %v4497 = vsel %vm537, %v4442, 0
    %v4500 = vsel %vm537, %v4443, 0
    %v4503 = vsel %vm537, %v4444, 0
    %4505 = vmatprep.subr.bf16.mxu0 0
    %4506 = vmatpush1.bf16.msra.mxu0 %v4453
    %4507 = vmatprep.subr.bf16.mxu0 0
    %4508 = vmatpush1.bf16.msra.mxu0 %v4454
    %4509 = vmatprep.subr.bf16.mxu0 0
    %4510 = vmatpush1.bf16.msra.mxu0 0
    %4511 = vmatprep.subr.bf16.mxu0 0
    %4512 = vmatpush1.bf16.msra.mxu0 0
    %4513 = vmatprep.subr.bf16.mxu0 0
    %4514 = vmatpush1.bf16.msra.mxu0 0
    %4515 = vmatprep.subr.bf16.mxu0 0
    %4516 = vmatpush1.bf16.msra.mxu0 0
    %4517 = vmatprep.subr.bf16.mxu0 0
    %4518 = vmatpush1.bf16.msra.mxu0 0
    %4519 = vmatprep.subr.bf16.mxu0 0
    %4520 = vmatpush1.bf16.msra.mxu0 0
    %4521 = vmatprep.subr.bf16.mxu0 0
    %4522 = vmatpush1.bf16.msra.mxu0 0
    %4523 = vmatprep.subr.bf16.mxu0 0
    %4524 = vmatpush1.bf16.msra.mxu0 0
    %4525 = vmatprep.subr.bf16.mxu0 0
    %4526 = vmatpush1.bf16.msra.mxu0 0
    %4527 = vmatprep.subr.bf16.mxu0 0
    %4528 = vmatpush1.bf16.msra.mxu0 0
    %4529 = vmatprep.subr.bf16.mxu0 0
    %4530 = vmatpush1.bf16.msra.mxu0 0
    %4531 = vmatprep.subr.bf16.mxu0 0
    %4532 = vmatpush1.bf16.msra.mxu0 0
    %4533 = vmatprep.subr.bf16.mxu0 0
    %4534 = vmatpush1.bf16.msra.mxu0 0
    %4535 = vmatprep.subr.bf16.mxu0 0
    %4536 = vmatpush1.bf16.msra.mxu0 0
    %4537 = vmatprep.mubr.bf16.mxu0 0
    %4538 = vmatmul.mubr.bf16.gmra.mrb[0].mxu0 %v4458
    %v4539 = vpop.f32.mrb[0].mxu0
    %v4540 = vadd.f32 0.0, %v4539
    %v4541 = vpop.f32.mrb[0].mxu0
    %v4542 = vpop.f32.mrb[0].mxu0
    %v4543 = vadd.f32 0.0, %v4542
    %v4544 = vpop.f32.mrb[0].mxu0
    %4545 = vmatprep.mubr.bf16.mxu0 0
    %4546 = vmatmul.mubr.bf16.gmra.mrb[0].mxu0 %v4461
    %v4547 = vpop.f32.mrb[0].mxu0
    %v4548 = vadd.f32 0.0, %v4547
    %v4549 = vpop.f32.mrb[0].mxu0
    %v4550 = vpop.f32.mrb[0].mxu0
    %v4551 = vadd.f32 0.0, %v4550
    %v4552 = vpop.f32.mrb[0].mxu0
    %4553 = vmatprep.mubr.bf16.mxu0 0
    %4554 = vmatmul.mubr.bf16.gmra.mrb[0].mxu0 %v4464
    %v4555 = vpop.f32.mrb[0].mxu0
    %v4556 = vadd.f32 0.0, %v4555
    %v4557 = vpop.f32.mrb[0].mxu0
    %v4558 = vpop.f32.mrb[0].mxu0
    %v4559 = vadd.f32 0.0, %v4558
    %v4560 = vpop.f32.mrb[0].mxu0
    %4561 = vmatprep.mubr.bf16.mxu0 0
    %4562 = vmatmul.mubr.bf16.gmra.mrb[0].mxu0 %v4467
    %v4563 = vpop.f32.mrb[0].mxu0
    %v4564 = vadd.f32 0.0, %v4563
    %v4565 = vpop.f32.mrb[0].mxu0
    %v4566 = vpop.f32.mrb[0].mxu0
    %v4567 = vadd.f32 0.0, %v4566
    %v4568 = vpop.f32.mrb[0].mxu0
    %4569 = vmatprep.mubr.bf16.mxu0 0
    %4570 = vmatmul.mubr.bf16.gmra.mrb[0].mxu0 %v4470
    %v4571 = vpop.f32.mrb[0].mxu0
    %v4572 = vadd.f32 0.0, %v4571
    %v4573 = vpop.f32.mrb[0].mxu0
    %v4574 = vpop.f32.mrb[0].mxu0
    %v4575 = vadd.f32 0.0, %v4574
    %v4576 = vpop.f32.mrb[0].mxu0
    %4577 = vmatprep.mubr.bf16.mxu0 0
    %4578 = vmatmul.mubr.bf16.gmra.mrb[0].mxu0 %v4473
    %v4579 = vpop.f32.mrb[0].mxu0
    %v4580 = vadd.f32 0.0, %v4579
    %v4581 = vpop.f32.mrb[0].mxu0
    %v4582 = vpop.f32.mrb[0].mxu0
    %v4583 = vadd.f32 0.0, %v4582
    %v4584 = vpop.f32.mrb[0].mxu0
    %4585 = vmatprep.mubr.bf16.mxu0 0
    %4586 = vmatmul.mubr.bf16.gmra.mrb[0].mxu0 %v4476
    %v4587 = vpop.f32.mrb[0].mxu0
    %v4588 = vadd.f32 0.0, %v4587
    %v4589 = vpop.f32.mrb[0].mxu0
    %v4590 = vpop.f32.mrb[0].mxu0
    %v4591 = vadd.f32 0.0, %v4590
    %v4592 = vpop.f32.mrb[0].mxu0
    %4593 = vmatprep.mubr.bf16.mxu0 0
    %4594 = vmatmul.mubr.bf16.gmra.mrb[0].mxu0 %v4479
    %v4595 = vpop.f32.mrb[0].mxu0
    %v4596 = vadd.f32 0.0, %v4595
    %v4597 = vpop.f32.mrb[0].mxu0
    %v4598 = vpop.f32.mrb[0].mxu0
    %v4599 = vadd.f32 0.0, %v4598
    %v4600 = vpop.f32.mrb[0].mxu0
    %4601 = vmatprep.mubr.bf16.mxu0 0
    %4602 = vmatmul.mubr.bf16.gmra.mrb[0].mxu0 %v4482
    %v4603 = vpop.f32.mrb[0].mxu0
    %v4604 = vadd.f32 0.0, %v4603
    %v4605 = vpop.f32.mrb[0].mxu0
    %v4606 = vpop.f32.mrb[0].mxu0
    %v4607 = vadd.f32 0.0, %v4606
    %v4608 = vpop.f32.mrb[0].mxu0
    %4609 = vmatprep.mubr.bf16.mxu0 0
    %4610 = vmatmul.mubr.bf16.gmra.mrb[0].mxu0 %v4485
    %v4611 = vpop.f32.mrb[0].mxu0
    %v4612 = vadd.f32 0.0, %v4611
    %v4613 = vpop.f32.mrb[0].mxu0
    %v4614 = vpop.f32.mrb[0].mxu0
    %v4615 = vadd.f32 0.0, %v4614
    %v4616 = vpop.f32.mrb[0].mxu0
    %4617 = vmatprep.mubr.bf16.mxu0 0
    %4618 = vmatmul.mubr.bf16.gmra.mrb[0].mxu0 %v4488
    %v4619 = vpop.f32.mrb[0].mxu0
    %v4620 = vadd.f32 0.0, %v4619
    %v4621 = vpop.f32.mrb[0].mxu0
    %v4622 = vpop.f32.mrb[0].mxu0
    %v4623 = vadd.f32 0.0, %v4622
    %v4624 = vpop.f32.mrb[0].mxu0
    %4625 = vmatprep.mubr.bf16.mxu0 0
    %4626 = vmatmul.mubr.bf16.gmra.mrb[0].mxu0 %v4491
    %v4627 = vpop.f32.mrb[0].mxu0
    %v4628 = vadd.f32 0.0, %v4627
    %v4629 = vpop.f32.mrb[0].mxu0
    %v4630 = vpop.f32.mrb[0].mxu0
    %v4631 = vadd.f32 0.0, %v4630
    %v4632 = vpop.f32.mrb[0].mxu0
    %4633 = vmatprep.mubr.bf16.mxu0 0
    %4634 = vmatmul.mubr.bf16.gmra.mrb[0].mxu0 %v4494
    %v4635 = vpop.f32.mrb[0].mxu0
    %v4636 = vadd.f32 0.0, %v4635
    %v4637 = vpop.f32.mrb[0].mxu0
    %v4638 = vpop.f32.mrb[0].mxu0
    %v4639 = vadd.f32 0.0, %v4638
    %v4640 = vpop.f32.mrb[0].mxu0
    %4641 = vmatprep.mubr.bf16.mxu0 0
    %4642 = vmatmul.mubr.bf16.gmra.mrb[0].mxu0 %v4497
    %v4643 = vpop.f32.mrb[0].mxu0
    %v4644 = vadd.f32 0.0, %v4643
    %v4645 = vpop.f32.mrb[0].mxu0
    %v4646 = vpop.f32.mrb[0].mxu0
    %v4647 = vadd.f32 0.0, %v4646
    %v4648 = vpop.f32.mrb[0].mxu0
    %4649 = vmatprep.mubr.bf16.mxu0 0
    %4650 = vmatmul.mubr.bf16.gmra.mrb[0].mxu0 %v4500
    %v4651 = vpop.f32.mrb[0].mxu0
    %v4652 = vadd.f32 0.0, %v4651
    %v4653 = vpop.f32.mrb[0].mxu0
    %v4654 = vpop.f32.mrb[0].mxu0
    %v4655 = vadd.f32 0.0, %v4654
    %v4656 = vpop.f32.mrb[0].mxu0
    %4657 = vmatprep.mubr.bf16.mxu0 0
    %4658 = vmatmul.mubr.bf16.gmra.mrb[0].mxu0 %v4503
    %v4659 = vpop.f32.mrb[0].mxu0
    %v4660 = vadd.f32 0.0, %v4659
    %v4661 = vpop.f32.mrb[0].mxu0
    %v4662 = vpop.f32.mrb[0].mxu0
    %v4663 = vadd.f32 0.0, %v4662
    %v4664 = vpop.f32.mrb[0].mxu0
    %4665 = vdwg.mxu0
    %v4666 = vadd.f32 %v4185, %v4540
    %v4667 = vadd.f32 %v4186, %v4543
    %v4668 = vadd.f32 %v4187, %v4548
    %v4669 = vadd.f32 %v4188, %v4551
    %v4670 = vadd.f32 %v4189, %v4556
    %v4671 = vadd.f32 %v4190, %v4559
    %v4672 = vadd.f32 %v4191, %v4564
    %v4673 = vadd.f32 %v4192, %v4567
    %v4674 = vadd.f32 %v4193, %v4572
    %v4675 = vadd.f32 %v4194, %v4575
    %v4676 = vadd.f32 %v4195, %v4580
    %v4677 = vadd.f32 %v4196, %v4583
    %v4678 = vadd.f32 %v4197, %v4588
    %v4679 = vadd.f32 %v4198, %v4591
    %v4680 = vadd.f32 %v4199, %v4596
    %v4681 = vadd.f32 %v4200, %v4599
    %v4682 = vadd.f32 %v4201, %v4604
    %v4683 = vadd.f32 %v4202, %v4607
    %v4684 = vadd.f32 %v4203, %v4612
    %v4685 = vadd.f32 %v4204, %v4615
    %v4686 = vadd.f32 %v4205, %v4620
    %v4687 = vadd.f32 %v4206, %v4623
    %v4688 = vadd.f32 %v4207, %v4628
    %v4689 = vadd.f32 %v4208, %v4631
    %v4690 = vadd.f32 %v4209, %v4636
    %v4691 = vadd.f32 %v4210, %v4639
    %v4692 = vadd.f32 %v4211, %v4644
    %v4693 = vadd.f32 %v4212, %v4647
    %v4694 = vadd.f32 %v4213, %v4652
    %v4695 = vadd.f32 %v4214, %v4655
    %v4696 = vadd.f32 %v4215, %v4660
    %v4697 = vadd.f32 %v4216, %v4663
    %v4698 = vld [vmem:[%s2] sm:$0x1]
    %v4700 = vlaneseq
    %v4701 = vshrl.u32 %v4700, 7
    %v4702 = vsub.s32 0, %v4701
    %v4703 = vrot.slane %v4698, %v4702
    %v4705 = vadd.f32 %v4666, %v4703
    %v4706 = vadd.f32 %v4667, %v4703
    %v4707 = vadd.f32 %v4668, %v4703
    %v4708 = vadd.f32 %v4669, %v4703
    %v4709 = vadd.f32 %v4670, %v4703
    %v4710 = vadd.f32 %v4671, %v4703
    %v4711 = vadd.f32 %v4672, %v4703
    %v4712 = vadd.f32 %v4673, %v4703
    %v4713 = vadd.f32 %v4674, %v4703
    %v4714 = vadd.f32 %v4675, %v4703
    %v4715 = vadd.f32 %v4676, %v4703
    %v4716 = vadd.f32 %v4677, %v4703
    %v4717 = vadd.f32 %v4678, %v4703
    %v4718 = vadd.f32 %v4679, %v4703
    %v4719 = vadd.f32 %v4680, %v4703
    %v4720 = vadd.f32 %v4681, %v4703
    %v4721 = vadd.f32 %v4682, %v4703
    %v4722 = vadd.f32 %v4683, %v4703
    %v4723 = vadd.f32 %v4684, %v4703
    %v4724 = vadd.f32 %v4685, %v4703
    %v4725 = vadd.f32 %v4686, %v4703
    %v4726 = vadd.f32 %v4687, %v4703
    %v4727 = vadd.f32 %v4688, %v4703
    %v4728 = vadd.f32 %v4689, %v4703
    %v4729 = vadd.f32 %v4690, %v4703
    %v4730 = vadd.f32 %v4691, %v4703
    %v4731 = vadd.f32 %v4692, %v4703
    %v4732 = vadd.f32 %v4693, %v4703
    %v4733 = vadd.f32 %v4694, %v4703
    %v4734 = vadd.f32 %v4695, %v4703
    %v4735 = vadd.f32 %v4696, %v4703
    %v4736 = vadd.f32 %v4697, %v4703
    %vm4737 = vcmp.gt.f32.partialorder %v4705, 0.0
    %vm4738 = vcmp.gt.f32.partialorder %v4706, 0.0
    %vm4739 = vcmp.gt.f32.partialorder %v4707, 0.0
    %vm4740 = vcmp.gt.f32.partialorder %v4708, 0.0
    %vm4741 = vcmp.gt.f32.partialorder %v4709, 0.0
    %vm4742 = vcmp.gt.f32.partialorder %v4710, 0.0
    %vm4743 = vcmp.gt.f32.partialorder %v4711, 0.0
    %vm4744 = vcmp.gt.f32.partialorder %v4712, 0.0
    %vm4745 = vcmp.gt.f32.partialorder %v4713, 0.0
    %vm4746 = vcmp.gt.f32.partialorder %v4714, 0.0
    %vm4747 = vcmp.gt.f32.partialorder %v4715, 0.0
    %vm4748 = vcmp.gt.f32.partialorder %v4716, 0.0
    %vm4749 = vcmp.gt.f32.partialorder %v4717, 0.0
    %vm4750 = vcmp.gt.f32.partialorder %v4718, 0.0
    %vm4751 = vcmp.gt.f32.partialorder %v4719, 0.0
    %vm4752 = vcmp.gt.f32.partialorder %v4720, 0.0
    %vm4753 = vcmp.gt.f32.partialorder %v4721, 0.0
    %vm4754 = vcmp.gt.f32.partialorder %v4722, 0.0
    %vm4755 = vcmp.gt.f32.partialorder %v4723, 0.0
    %vm4756 = vcmp.gt.f32.partialorder %v4724, 0.0
    %vm4757 = vcmp.gt.f32.partialorder %v4725, 0.0
    %vm4758 = vcmp.gt.f32.partialorder %v4726, 0.0
    %vm4759 = vcmp.gt.f32.partialorder %v4727, 0.0
    %vm4760 = vcmp.gt.f32.partialorder %v4728, 0.0
    %vm4761 = vcmp.gt.f32.partialorder %v4729, 0.0
    %vm4762 = vcmp.gt.f32.partialorder %v4730, 0.0
    %vm4763 = vcmp.gt.f32.partialorder %v4731, 0.0
    %vm4764 = vcmp.gt.f32.partialorder %v4732, 0.0
    %vm4765 = vcmp.gt.f32.partialorder %v4733, 0.0
    %vm4766 = vcmp.gt.f32.partialorder %v4734, 0.0
    %vm4767 = vcmp.gt.f32.partialorder %v4735, 0.0
    %vm4768 = vcmp.gt.f32.partialorder %v4736, 0.0
    %v4769 = vmul.f32 %v4705, 0.01
    %v4770 = vmul.f32 %v4706, 0.01
    %v4771 = vmul.f32 %v4707, 0.01
    %v4772 = vmul.f32 %v4708, 0.01
    %v4773 = vmul.f32 %v4709, 0.01
    %v4774 = vmul.f32 %v4710, 0.01
    %v4775 = vmul.f32 %v4711, 0.01
    %v4776 = vmul.f32 %v4712, 0.01
    %v4777 = vmul.f32 %v4713, 0.01
    %v4778 = vmul.f32 %v4714, 0.01
    %v4779 = vmul.f32 %v4715, 0.01
    %v4780 = vmul.f32 %v4716, 0.01
    %v4781 = vmul.f32 %v4717, 0.01
    %v4782 = vmul.f32 %v4718, 0.01
    %v4783 = vmul.f32 %v4719, 0.01
    %v4784 = vmul.f32 %v4720, 0.01
    %v4785 = vmul.f32 %v4721, 0.01
    %v4786 = vmul.f32 %v4722, 0.01
    %v4787 = vmul.f32 %v4723, 0.01
    %v4788 = vmul.f32 %v4724, 0.01
    %v4789 = vmul.f32 %v4725, 0.01
    %v4790 = vmul.f32 %v4726, 0.01
    %v4791 = vmul.f32 %v4727, 0.01
    %v4792 = vmul.f32 %v4728, 0.01
    %v4793 = vmul.f32 %v4729, 0.01
    %v4794 = vmul.f32 %v4730, 0.01
    %v4795 = vmul.f32 %v4731, 0.01
    %v4796 = vmul.f32 %v4732, 0.01
    %v4797 = vmul.f32 %v4733, 0.01
    %v4798 = vmul.f32 %v4734, 0.01
    %v4799 = vmul.f32 %v4735, 0.01
    %v4800 = vmul.f32 %v4736, 0.01
    %v4801 = vsel %vm4737, %v4705, %v4769
    %v4802 = vsel %vm4738, %v4706, %v4770
    %v4803 = vsel %vm4739, %v4707, %v4771
    %v4804 = vsel %vm4740, %v4708, %v4772
    %v4805 = vsel %vm4741, %v4709, %v4773
    %v4806 = vsel %vm4742, %v4710, %v4774
    %v4807 = vsel %vm4743, %v4711, %v4775
    %v4808 = vsel %vm4744, %v4712, %v4776
    %v4809 = vsel %vm4745, %v4713, %v4777
    %v4810 = vsel %vm4746, %v4714, %v4778
    %v4811 = vsel %vm4747, %v4715, %v4779
    %v4812 = vsel %vm4748, %v4716, %v4780
    %v4813 = vsel %vm4749, %v4717, %v4781
    %v4814 = vsel %vm4750, %v4718, %v4782
    %v4815 = vsel %vm4751, %v4719, %v4783
    %v4816 = vsel %vm4752, %v4720, %v4784
    %v4817 = vsel %vm4753, %v4721, %v4785
    %v4818 = vsel %vm4754, %v4722, %v4786
    %v4819 = vsel %vm4755, %v4723, %v4787
    %v4820 = vsel %vm4756, %v4724, %v4788
    %v4821 = vsel %vm4757, %v4725, %v4789
    %v4822 = vsel %vm4758, %v4726, %v4790
    %v4823 = vsel %vm4759, %v4727, %v4791
    %v4824 = vsel %vm4760, %v4728, %v4792
    %v4825 = vsel %vm4761, %v4729, %v4793
    %v4826 = vsel %vm4762, %v4730, %v4794
    %v4827 = vsel %vm4763, %v4731, %v4795
    %v4828 = vsel %vm4764, %v4732, %v4796
    %v4829 = vsel %vm4765, %v4733, %v4797
    %v4830 = vsel %vm4766, %v4734, %v4798
    %v4831 = vsel %vm4767, %v4735, %v4799
    %v4832 = vsel %vm4768, %v4736, %v4800
    %v4833 = vpack.c.bf16 %v4802, %v4801
    %v4834 = vpack.c.bf16 %v4804, %v4803
    %v4835 = vpack.c.bf16 %v4806, %v4805
    %v4836 = vpack.c.bf16 %v4808, %v4807
    %v4837 = vpack.c.bf16 %v4810, %v4809
    %v4838 = vpack.c.bf16 %v4812, %v4811
    %v4839 = vpack.c.bf16 %v4814, %v4813
    %v4840 = vpack.c.bf16 %v4816, %v4815
    %v4841 = vpack.c.bf16 %v4818, %v4817
    %v4842 = vpack.c.bf16 %v4820, %v4819
    %v4843 = vpack.c.bf16 %v4822, %v4821
    %v4844 = vpack.c.bf16 %v4824, %v4823
    %v4845 = vpack.c.bf16 %v4826, %v4825
    %v4846 = vpack.c.bf16 %v4828, %v4827
    %v4847 = vpack.c.bf16 %v4830, %v4829
    %v4848 = vpack.c.bf16 %v4832, %v4831
    %v4865 = vunpack.c.l.b16 %v4833
    %v4866 = vunpack.c.h.b16 %v4833
    %v4867 = vunpack.c.l.b16 %v4834
    %v4868 = vunpack.c.h.b16 %v4834
    %v4869 = vunpack.c.l.b16 %v4835
    %v4870 = vunpack.c.h.b16 %v4835
    %v4871 = vunpack.c.l.b16 %v4836
    %v4872 = vunpack.c.h.b16 %v4836
    %v4873 = vunpack.c.l.b16 %v4837
    %v4874 = vunpack.c.h.b16 %v4837
    %v4875 = vunpack.c.l.b16 %v4838
    %v4876 = vunpack.c.h.b16 %v4838
    %v4877 = vunpack.c.l.b16 %v4839
    %v4878 = vunpack.c.h.b16 %v4839
    %v4879 = vunpack.c.l.b16 %v4840
    %v4880 = vunpack.c.h.b16 %v4840
    %v4881 = vunpack.c.l.b16 %v4841
    %v4882 = vunpack.c.h.b16 %v4841
    %v4883 = vunpack.c.l.b16 %v4842
    %v4884 = vunpack.c.h.b16 %v4842
    %v4885 = vunpack.c.l.b16 %v4843
    %v4886 = vunpack.c.h.b16 %v4843
    %v4887 = vunpack.c.l.b16 %v4844
    %v4888 = vunpack.c.h.b16 %v4844
    %v4889 = vunpack.c.l.b16 %v4845
    %v4890 = vunpack.c.h.b16 %v4845
    %v4891 = vunpack.c.l.b16 %v4846
    %v4892 = vunpack.c.h.b16 %v4846
    %v4893 = vunpack.c.l.b16 %v4847
    %v4894 = vunpack.c.h.b16 %v4847
    %v4895 = vunpack.c.l.b16 %v4848
    %v4896 = vunpack.c.h.b16 %v4848
    %v4897 = vpack.c.b16 %v4865, %v4865
    %v4898 = vpack.c.b16 %v4866, %v4866
    %v4899 = vpack.c.b16 %v4867, %v4867
    %v4900 = vpack.c.b16 %v4868, %v4868
    %v4901 = vpack.c.b16 %v4869, %v4869
    %v4902 = vpack.c.b16 %v4870, %v4870
    %v4903 = vpack.c.b16 %v4871, %v4871
    %v4904 = vpack.c.b16 %v4872, %v4872
    %v4905 = vpack.c.b16 %v4873, %v4873
    %v4906 = vpack.c.b16 %v4874, %v4874
    %v4907 = vpack.c.b16 %v4875, %v4875
    %v4908 = vpack.c.b16 %v4876, %v4876
    %v4909 = vpack.c.b16 %v4877, %v4877
    %v4910 = vpack.c.b16 %v4878, %v4878
    %v4911 = vpack.c.b16 %v4879, %v4879
    %v4912 = vpack.c.b16 %v4880, %v4880
    %v4913 = vpack.c.b16 %v4881, %v4881
    %v4914 = vpack.c.b16 %v4882, %v4882
    %v4915 = vpack.c.b16 %v4883, %v4883
    %v4916 = vpack.c.b16 %v4884, %v4884
    %v4917 = vpack.c.b16 %v4885, %v4885
    %v4918 = vpack.c.b16 %v4886, %v4886
    %v4919 = vpack.c.b16 %v4887, %v4887
    %v4920 = vpack.c.b16 %v4888, %v4888
    %v4921 = vpack.c.b16 %v4889, %v4889
    %v4922 = vpack.c.b16 %v4890, %v4890
    %v4923 = vpack.c.b16 %v4891, %v4891
    %v4924 = vpack.c.b16 %v4892, %v4892
    %v4925 = vpack.c.b16 %v4893, %v4893
    %v4926 = vpack.c.b16 %v4894, %v4894
    %v4927 = vpack.c.b16 %v4895, %v4895
    %v4928 = vpack.c.b16 %v4896, %v4896
    %vm4961 = vcmask 125952
    %4962 = vst.msk [vmem:[#allocation5] sm:$0xf] %vm4961, %v4897
    %4963 = vst.msk [vmem:[#allocation5 + $0x4] sm:$0xf] %vm4961, %v4898
    %4964 = vst.msk [vmem:[#allocation5 + $0x8] sm:$0xf] %vm4961, %v4899
    %4965 = vst.msk [vmem:[#allocation5 + $0xc] sm:$0xf] %vm4961, %v4900
    %4966 = vst.msk [vmem:[#allocation5 + $0x10] sm:$0xf] %vm4961, %v4901
    %4967 = vst.msk [vmem:[#allocation5 + $0x14] sm:$0xf] %vm4961, %v4902
    %4968 = vst.msk [vmem:[#allocation5 + $0x18] sm:$0xf] %vm4961, %v4903
    %4969 = vst.msk [vmem:[#allocation5 + $0x1c] sm:$0xf] %vm4961, %v4904
    %4970 = vst.msk [vmem:[#allocation5 + $0x20] sm:$0xf] %vm4961, %v4905
    %4971 = vst.msk [vmem:[#allocation5 + $0x24] sm:$0xf] %vm4961, %v4906
    %4972 = vst.msk [vmem:[#allocation5 + $0x28] sm:$0xf] %vm4961, %v4907
    %4973 = vst.msk [vmem:[#allocation5 + $0x2c] sm:$0xf] %vm4961, %v4908
    %4974 = vst.msk [vmem:[#allocation5 + $0x30] sm:$0xf] %vm4961, %v4909
    %4975 = vst.msk [vmem:[#allocation5 + $0x34] sm:$0xf] %vm4961, %v4910
    %4976 = vst.msk [vmem:[#allocation5 + $0x38] sm:$0xf] %vm4961, %v4911
    %4977 = vst.msk [vmem:[#allocation5 + $0x3c] sm:$0xf] %vm4961, %v4912
    %4978 = vst.msk [vmem:[#allocation5 + $0x40] sm:$0xf] %vm4961, %v4913
    %4979 = vst.msk [vmem:[#allocation5 + $0x44] sm:$0xf] %vm4961, %v4914
    %4980 = vst.msk [vmem:[#allocation5 + $0x48] sm:$0xf] %vm4961, %v4915
    %4981 = vst.msk [vmem:[#allocation5 + $0x4c] sm:$0xf] %vm4961, %v4916
    %4982 = vst.msk [vmem:[#allocation5 + $0x50] sm:$0xf] %vm4961, %v4917
    %4983 = vst.msk [vmem:[#allocation5 + $0x54] sm:$0xf] %vm4961, %v4918
    %4984 = vst.msk [vmem:[#allocation5 + $0x58] sm:$0xf] %vm4961, %v4919
    %4985 = vst.msk [vmem:[#allocation5 + $0x5c] sm:$0xf] %vm4961, %v4920
    %4986 = vst.msk [vmem:[#allocation5 + $0x60] sm:$0xf] %vm4961, %v4921
    %4987 = vst.msk [vmem:[#allocation5 + $0x64] sm:$0xf] %vm4961, %v4922
    %4988 = vst.msk [vmem:[#allocation5 + $0x68] sm:$0xf] %vm4961, %v4923
    %4989 = vst.msk [vmem:[#allocation5 + $0x6c] sm:$0xf] %vm4961, %v4924
    %4990 = vst.msk [vmem:[#allocation5 + $0x70] sm:$0xf] %vm4961, %v4925
    %4991 = vst.msk [vmem:[#allocation5 + $0x74] sm:$0xf] %vm4961, %v4926
    %4992 = vst.msk [vmem:[#allocation5 + $0x78] sm:$0xf] %vm4961, %v4927
    %4993 = vst.msk [vmem:[#allocation5 + $0x7c] sm:$0xf] %vm4961, %v4928
    // Predicated region
    $region18: #{tpu_custom_call.1} parent=1 // pred_check
      _
    $region19: #{tpu_custom_call.1} parent=1 // pred_check_branch
      %4995 = sbr.rel (0) target = $region21
    $region20: #{tpu_custom_call.1} parent=1 // pred_region
      %s4997 = ssub.s32 2048, 2048
      %4998 = vsyncadd [#allocation4], %s4997
      %s4999 = sshll.u32 [#allocation5], 4
      %s5000 = int_to_ptr.vmem [resolvable:$true] %s4999
      %5005 = dma.vmem_to_hbm [thread:$0]  %s5000, 2048, %s3, [#allocation4], 64, 64, 4
    $region21: #{tpu_custom_call.1} parent=1 // pred_fallthru
      _
    // Predicated region
    $region22: #{tpu_custom_call.1} parent=1 // pred_check
      _
    $region23: #{tpu_custom_call.1} parent=1 // pred_check_branch
      %5007 = sbr.rel (0) target = $region25
    $region24: #{tpu_custom_call.1} parent=1 // pred_region
      %5008 = dma.done [#allocation4], 2048
    $region25: #{tpu_custom_call.1} parent=1 // pred_fallthru
      _
    %5009 = vsyncpa [#allocation3], 1
    %5010 = vsyncpa [#allocation4], 1

</llo_original>
